<compile_context>
chip_gen: v6e
topology: v6e:2x2x1
jax: 0.10.0
libtpu: 0.0.40
codegen_flags: <defaults>
</compile_context>

<pallas_src>
import math
from functools import partial

import jax
import jax.numpy as jnp
from jax.experimental import pallas as pl
from jax.experimental.pallas import tpu as pltpu


# ------------------------------ fused kernel --------------------------------

def fused_forward_kernel(x_ref, pos_ref, wq_ref, wk_ref, wv_ref, wo_ref,
                         wc_ref, bc_ref, o_ref, *, n_heads):
    """Whole FlexibleTransformer forward for one block of batch rows.

    x_ref   : (Bt, L, D)          token embeddings (gather done in plain JAX)
    pos_ref : (L, D)              sinusoidal positional embedding (f32)
    w*_ref  : (n_layers, D, D)    q/k/v/o weights, host-pre-transposed (in, out),
                                  bf16, 1/sqrt(d_head) folded into wq
    wc_ref  : (D, Np)             classifier weight, transposed + lane-padded, bf16
    bc_ref  : (1, Np)             classifier bias, lane-padded, f32
    o_ref   : (Bt, Np)            logits at the last sequence position
    """
    Bt, L, D = x_ref.shape
    dh = D // n_heads
    M = Bt * L
    n_layers = wq_ref.shape[0]

    # Residual stream, f32, flattened so projections fill the MXU M dimension.
    x = (x_ref[...] + pos_ref[...][None, :, :]).reshape(M, D)

    # Causal mask built in-kernel (no O(L^2) HBM input / extra DMA stream).
    row = jax.lax.broadcasted_iota(jnp.int32, (1, L, L), 1)
    col = jax.lax.broadcasted_iota(jnp.int32, (1, L, L), 2)
    causal = row >= col
    neg_big = jnp.float32(-1e30)          # finite: avoids inf-inf -> NaN hazard

    def layer_body(layer, x):
        wq = wq_ref[layer]                # (D, D) bf16, q-scale folded in
        wk = wk_ref[layer]
        wv = wv_ref[layer]
        wo = wo_ref[layer]

        xb = x.astype(jnp.bfloat16)
        q = jnp.dot(xb, wq, preferred_element_type=jnp.float32)   # (M, D)
        k = jnp.dot(xb, wk, preferred_element_type=jnp.float32)
        v = jnp.dot(xb, wv, preferred_element_type=jnp.float32)

        q3 = q.reshape(Bt, L, D).astype(jnp.bfloat16)
        k3 = k.reshape(Bt, L, D).astype(jnp.bfloat16)
        v3 = v.reshape(Bt, L, D).astype(jnp.bfloat16)

        out = x
        # TODO(synk): fully head-batched 'hbld,hbmd->hblm' einsum needs a
        # lane-splitting (M, D)->(Bt, L, H, dh) reshape/relayout; kept as an
        # unrolled loop of batch-blocked 3-D einsums for compile safety.
        for h in range(n_heads):
            sl = slice(h * dh, (h + 1) * dh)
            qh = q3[:, :, sl]
            kh = k3[:, :, sl]
            vh = v3[:, :, sl]
            s = jnp.einsum('bld,bmd->blm', qh, kh,
                           preferred_element_type=jnp.float32)    # (Bt, L, L)
            s = jnp.where(causal, s, neg_big)
            s = s - jnp.max(s, axis=-1, keepdims=True)
            p = jnp.exp(s)
            p = p * pl.reciprocal(jnp.sum(p, axis=-1, keepdims=True),
                                  approx=True)
            ctx = jnp.einsum('blm,bmd->bld', p.astype(jnp.bfloat16), vh,
                             preferred_element_type=jnp.float32)  # (Bt, L, dh)
            # Per-head output projection accumulated straight into the
            # residual stream (no attn scratch, no masked partial stores).
            out = out + jnp.dot(ctx.reshape(M, dh).astype(jnp.bfloat16),
                                wo[sl, :],
                                preferred_element_type=jnp.float32)
        return out

    # TODO(synk): for configs whose weight stack exceeds v7x's 64 MiB VMEM,
    # stream weights per layer (pl.ANY + pltpu.emit_pipeline over the layer
    # axis) instead of keeping the full stack resident.
    x = jax.lax.fori_loop(0, n_layers, layer_body, x)

    # Batched classifier on the last sequence position of every row in block;
    # output block is lane-padded to a multiple of 128 for a dense store.
    last = x.reshape(Bt, L, D)[:, L - 1:L, :].reshape(Bt, D)
    o_ref[...] = (jnp.dot(last.astype(jnp.bfloat16), wc_ref[...],
                          preferred_element_type=jnp.float32)
                  + bc_ref[...])


# -------------------------------- wrapper -----------------------------------

def flexible_transformer_forward(tokens, params, n_heads, block_b=8):
    B, L = tokens.shape
    D = params["embed"].shape[1]
    n_layers = params["wq_t"].shape[0]
    n_tokens = params["wc"].shape[0]
    Np = params["wc_p"].shape[1]                     # lane-padded vocab

    x_emb = params["embed"][tokens]                  # (B, L, D) gather (glue)

    # Pad the batch to a whole number of blocks of block_b rows.
    b_pad = ((B + block_b - 1) // block_b) * block_b
    if b_pad != B:
        x_emb = jnp.pad(x_emb, ((0, b_pad - B), (0, 0), (0, 0)))
    num_blocks = b_pad // block_b

    pos = params["pos"][:L]                          # (L, D)

    kernel = partial(fused_forward_kernel, n_heads=n_heads)
    wspec = pl.BlockSpec((n_layers, D, D), lambda b: (0, 0, 0))

    out = pl.pallas_call(
        kernel,
        out_shape=jax.ShapeDtypeStruct((b_pad, Np), jnp.float32),
        grid=(num_blocks,),
        in_specs=[
            pl.BlockSpec((block_b, L, D), lambda b: (b, 0, 0)),  # embeddings
            pl.BlockSpec((L, D), lambda b: (0, 0)),              # positional
            wspec, wspec, wspec, wspec,                          # wq/wk/wv/wo
            pl.BlockSpec((D, Np), lambda b: (0, 0)),             # classifier W
            pl.BlockSpec((1, Np), lambda b: (0, 0)),             # classifier b
        ],
        out_specs=pl.BlockSpec((block_b, Np), lambda b: (b, 0)),
        compiler_params=pltpu.CompilerParams(
            dimension_semantics=("parallel",),       # megacore: blocks over TCs
            vmem_limit_bytes=32 * 1024 * 1024),
    )(x_emb, pos, params["wq_t"], params["wk_t"], params["wv_t"],
      params["wo_t"], params["wc_p"], params["bc_p"])
    return out[:B, :n_tokens]                        # strip batch/lane padding


# ---------------------------- parameter helpers ------------------------------

def make_positional(max_positions, d_model):
    denom = 10000.0 ** (jnp.arange(0, d_model, 2, dtype=jnp.float32) / d_model)
    pos = jnp.arange(max_positions, dtype=jnp.float32)[:, None] / denom[None, :]
    emb = jnp.zeros((max_positions, d_model), jnp.float32)
    emb = emb.at[:, 0::2].set(jnp.sin(pos))
    emb = emb.at[:, 1::2].set(jnp.cos(pos))
    return emb


def make_causal_mask(max_positions):
    i = jnp.arange(max_positions)
    return jnp.where(i[:, None] >= i[None, :], 0.0, -jnp.inf).astype(jnp.float32)


def init_params(key, d_model, n_tokens, max_positions, n_layers, n_heads):
    keys = jax.random.split(key, 2 + 4 * n_layers + 2)
    it = iter(keys)
    params = {
        "embed": 0.05 * jax.random.normal(next(it), (n_tokens, d_model), jnp.float32),
        "pos": make_positional(max_positions, d_model),
        "mask": make_causal_mask(max_positions),      # reference path only
        "layers": [],
    }
    for _ in range(n_layers):
        params["layers"].append({
            "wq": 0.05 * jax.random.normal(next(it), (d_model, d_model), jnp.float32),
            "wk": 0.05 * jax.random.normal(next(it), (d_model, d_model), jnp.float32),
            "wv": 0.05 * jax.random.normal(next(it), (d_model, d_model), jnp.float32),
            "wo": 0.05 * jax.random.normal(next(it), (d_model, d_model), jnp.float32),
        })
    params["wc"] = 0.05 * jax.random.normal(next(it), (n_tokens, d_model), jnp.float32)
    params["bc"] = 0.05 * jax.random.normal(next(it), (n_tokens,), jnp.float32)

    # Kernel-layout weights: stacked per layer, transposed to (in, out) on the
    # host, 1/sqrt(d_head) folded into wq, and stored in bf16 for the MXU.
    dh = d_model // n_heads
    params["wq_t"] = jnp.stack([l["wq"].T / math.sqrt(dh)
                                for l in params["layers"]]).astype(jnp.bfloat16)
    params["wk_t"] = jnp.stack([l["wk"].T for l in params["layers"]]).astype(jnp.bfloat16)
    params["wv_t"] = jnp.stack([l["wv"].T for l in params["layers"]]).astype(jnp.bfloat16)
    params["wo_t"] = jnp.stack([l["wo"].T for l in params["layers"]]).astype(jnp.bfloat16)

    # Classifier weight/bias, transposed and lane-padded to a multiple of 128.
    n_pad = max(128, ((n_tokens + 127) // 128) * 128)
    wc_p = jnp.zeros((d_model, n_pad), jnp.float32).at[:, :n_tokens].set(params["wc"].T)
    bc_p = jnp.zeros((1, n_pad), jnp.float32).at[0, :n_tokens].set(params["bc"])
    params["wc_p"] = wc_p.astype(jnp.bfloat16)
    params["bc_p"] = bc_p
    return params


# --------------------------- pure-JAX reference ------------------------------

def reference_forward(tokens, params, n_heads):
    L = tokens.shape[1]
    x = params["embed"][tokens] + params["pos"][:L][None, :, :]
    mask = params["mask"][:L, :L]
    for layer in params["layers"]:
        B, _, D = x.shape
        dh = D // n_heads
        q = (x @ layer["wq"].T) / math.sqrt(dh)
        k = x @ layer["wk"].T
        v = x @ layer["wv"].T
        qh = q.reshape(B, L, n_heads, dh).transpose(0, 2, 1, 3)
        kh = k.reshape(B, L, n_heads, dh).transpose(0, 2, 1, 3)
        vh = v.reshape(B, L, n_heads, dh).transpose(0, 2, 1, 3)
        s = jnp.einsum("bhld,bhmd->bhlm", qh, kh) + mask
        p = jax.nn.softmax(s, axis=-1)
        o = jnp.einsum("bhlm,bhmd->bhld", p, vh)
        o = o.transpose(0, 2, 1, 3).reshape(B, L, D)
        x = x + o @ layer["wo"].T
    logits = x @ params["wc"].T + params["bc"]
    return logits[:, -1, :]


# ----------------------------------- main ------------------------------------

if __name__ == "__main__":
    B, L = 2, 8
    d_model, n_tokens, max_positions = 32, 16, 8
    n_heads, n_layers = 4, 2

    key = jax.random.PRNGKey(0)
    k_params, k_tok = jax.random.split(key)
    params = init_params(k_params, d_model, n_tokens, max_positions,
                         n_layers, n_heads)
    tokens = jax.random.randint(k_tok, (B, L), 0, n_tokens, dtype=jnp.int32)

    out = flexible_transformer_forward(tokens, params, n_heads)
    out = jax.block_until_ready(out)

    ref = reference_forward(tokens, params, n_heads)
    assert out.shape == (B, n_tokens)
    # Tolerance relaxed vs f32: bf16 weights / matmul inputs (f32 accumulate)
    # plus the EUP approximate reciprocal in the softmax denominator.
    assert jnp.allclose(out, ref, atol=1e-2, rtol=1e-2), "kernel/reference mismatch"

    print("KERNEL_OK")
</pallas_src>

<mosaic_0001>
module attributes {stable_mosaic.version = 11 : i64} {
  func.func @fused_forward_kernel(%arg0: i32, %arg1: memref<8x8x32xf32, #tpu.memory_space<vmem>>, %arg2: memref<8x32xf32, #tpu.memory_space<vmem>>, %arg3: memref<2x32x32xbf16, #tpu.memory_space<vmem>>, %arg4: memref<2x32x32xbf16, #tpu.memory_space<vmem>>, %arg5: memref<2x32x32xbf16, #tpu.memory_space<vmem>>, %arg6: memref<2x32x32xbf16, #tpu.memory_space<vmem>>, %arg7: memref<32x128xbf16, #tpu.memory_space<vmem>>, %arg8: memref<1x128xf32, #tpu.memory_space<vmem>>, %arg9: memref<8x128xf32, #tpu.memory_space<vmem>>) attributes {dimension_semantics = [#tpu.dimension_semantics<parallel>], iteration_bounds = array<i64: 1>, scalar_prefetch = 0 : i64, scratch_operands = 0 : i64, tpu.core_type = #tpu.core_type<tc>, window_params = [{transform_indices = @transform_0, window_bounds = array<i64: 8, 8, 32>}, {pipeline_mode = #tpu.pipeline_mode<synchronous>, transform_indices = @transform_1, window_bounds = array<i64: 8, 32>}, {pipeline_mode = #tpu.pipeline_mode<synchronous>, transform_indices = @transform_2, window_bounds = array<i64: 2, 32, 32>}, {pipeline_mode = #tpu.pipeline_mode<synchronous>, transform_indices = @transform_3, window_bounds = array<i64: 2, 32, 32>}, {pipeline_mode = #tpu.pipeline_mode<synchronous>, transform_indices = @transform_4, window_bounds = array<i64: 2, 32, 32>}, {pipeline_mode = #tpu.pipeline_mode<synchronous>, transform_indices = @transform_5, window_bounds = array<i64: 2, 32, 32>}, {pipeline_mode = #tpu.pipeline_mode<synchronous>, transform_indices = @transform_6, window_bounds = array<i64: 32, 128>}, {pipeline_mode = #tpu.pipeline_mode<synchronous>, transform_indices = @transform_7, window_bounds = array<i64: 1, 128>}, {transform_indices = @transform_8, window_bounds = array<i64: 8, 128>}]} {
    %c0 = arith.constant 0 : index
    %c0_0 = arith.constant 0 : index
    %c0_1 = arith.constant 0 : index
    %0 = vector.load %arg1[%c0, %c0_0, %c0_1] : memref<8x8x32xf32, #tpu.memory_space<vmem>>, vector<8x8x32xf32>
    %c0_2 = arith.constant 0 : index
    %c0_3 = arith.constant 0 : index
    %1 = vector.load %arg2[%c0_2, %c0_3] : memref<8x32xf32, #tpu.memory_space<vmem>>, vector<8x32xf32>
    %2 = vector.shape_cast %1 : vector<8x32xf32> to vector<1x8x32xf32>
    %3 = vector.broadcast %2 : vector<1x8x32xf32> to vector<8x8x32xf32>
    %4 = arith.addf %0, %3 : vector<8x8x32xf32>
    %5 = vector.shape_cast %4 : vector<8x8x32xf32> to vector<64x32xf32>
    %6 = tpu.iota {dimensions = array<i32: 1>} : vector<1x8x8xi32>
    %7 = tpu.iota {dimensions = array<i32: 2>} : vector<1x8x8xi32>
    %8 = arith.cmpi sge, %6, %7 : vector<1x8x8xi32>
    %cst = arith.constant -1.000000e+30 : f32
    %c0_i32 = arith.constant 0 : i32
    %c2_i32 = arith.constant 2 : i32
    %9 = arith.addi %c0_i32, %c2_i32 : i32
    %c1_i32 = arith.constant 1 : i32
    %10 = scf.for %arg10 = %c0_i32 to %9 step %c1_i32 iter_args(%arg11 = %5) -> (vector<64x32xf32>)  : i32 {
      %21 = arith.index_cast %arg10 : i32 to index
      %c0_12 = arith.constant 0 : index
      %c0_13 = arith.constant 0 : index
      %22 = vector.load %arg3[%21, %c0_12, %c0_13] : memref<2x32x32xbf16, #tpu.memory_space<vmem>>, vector<1x32x32xbf16>
      %23 = vector.shape_cast %22 : vector<1x32x32xbf16> to vector<32x32xbf16>
      %24 = arith.index_cast %arg10 : i32 to index
      %c0_14 = arith.constant 0 : index
      %c0_15 = arith.constant 0 : index
      %25 = vector.load %arg4[%24, %c0_14, %c0_15] : memref<2x32x32xbf16, #tpu.memory_space<vmem>>, vector<1x32x32xbf16>
      %26 = vector.shape_cast %25 : vector<1x32x32xbf16> to vector<32x32xbf16>
      %27 = arith.index_cast %arg10 : i32 to index
      %c0_16 = arith.constant 0 : index
      %c0_17 = arith.constant 0 : index
      %28 = vector.load %arg5[%27, %c0_16, %c0_17] : memref<2x32x32xbf16, #tpu.memory_space<vmem>>, vector<1x32x32xbf16>
      %29 = vector.shape_cast %28 : vector<1x32x32xbf16> to vector<32x32xbf16>
      %30 = arith.index_cast %arg10 : i32 to index
      %c0_18 = arith.constant 0 : index
      %c0_19 = arith.constant 0 : index
      %31 = vector.load %arg6[%30, %c0_18, %c0_19] : memref<2x32x32xbf16, #tpu.memory_space<vmem>>, vector<1x32x32xbf16>
      %32 = vector.shape_cast %31 : vector<1x32x32xbf16> to vector<32x32xbf16>
      %33 = arith.truncf %arg11 : vector<64x32xf32> to vector<64x32xbf16>
      %cst_20 = arith.constant dense<0.000000e+00> : vector<64x32xf32>
      %34 = tpu.matmul %33, %23, %cst_20 {dimension_numbers = #tpu.dot_dimension_numbers<[1], [0], [0], [1], [0, 0, 1, 1], [], []>} : vector<64x32xbf16>, vector<32x32xbf16>, vector<64x32xf32> -> vector<64x32xf32>
      %cst_21 = arith.constant dense<0.000000e+00> : vector<64x32xf32>
      %35 = tpu.matmul %33, %26, %cst_21 {dimension_numbers = #tpu.dot_dimension_numbers<[1], [0], [0], [1], [0, 0, 1, 1], [], []>} : vector<64x32xbf16>, vector<32x32xbf16>, vector<64x32xf32> -> vector<64x32xf32>
      %cst_22 = arith.constant dense<0.000000e+00> : vector<64x32xf32>
      %36 = tpu.matmul %33, %29, %cst_22 {dimension_numbers = #tpu.dot_dimension_numbers<[1], [0], [0], [1], [0, 0, 1, 1], [], []>} : vector<64x32xbf16>, vector<32x32xbf16>, vector<64x32xf32> -> vector<64x32xf32>
      %37 = vector.shape_cast %34 : vector<64x32xf32> to vector<8x8x32xf32>
      %38 = arith.truncf %37 : vector<8x8x32xf32> to vector<8x8x32xbf16>
      %39 = vector.shape_cast %35 : vector<64x32xf32> to vector<8x8x32xf32>
      %40 = arith.truncf %39 : vector<8x8x32xf32> to vector<8x8x32xbf16>
      %41 = vector.shape_cast %36 : vector<64x32xf32> to vector<8x8x32xf32>
      %42 = arith.truncf %41 : vector<8x8x32xf32> to vector<8x8x32xbf16>
      %43 = vector.extract_strided_slice %38 {offsets = [0, 0, 0], sizes = [8, 8, 8], strides = [1, 1, 1]} : vector<8x8x32xbf16> to vector<8x8x8xbf16>
      %44 = vector.extract_strided_slice %40 {offsets = [0, 0, 0], sizes = [8, 8, 8], strides = [1, 1, 1]} : vector<8x8x32xbf16> to vector<8x8x8xbf16>
      %45 = vector.extract_strided_slice %42 {offsets = [0, 0, 0], sizes = [8, 8, 8], strides = [1, 1, 1]} : vector<8x8x32xbf16> to vector<8x8x8xbf16>
      "tpu.trace_start"() <{level = 10 : i32, message = "bld,bmd->blm"}> : () -> ()
      %cst_23 = arith.constant dense<0.000000e+00> : vector<8x8x8xf32>
      %46 = tpu.matmul %43, %44, %cst_23 {dimension_numbers = #tpu.dot_dimension_numbers<[2], [2], [1], [1], [0, 0, 0, 1, 1, 1], [0], [0]>} : vector<8x8x8xbf16>, vector<8x8x8xbf16>, vector<8x8x8xf32> -> vector<8x8x8xf32>
      "tpu.trace_stop"() : () -> ()
      %47 = vector.shape_cast %8 : vector<1x8x8xi1> to vector<1x8x8xi1>
      %48 = vector.broadcast %47 : vector<1x8x8xi1> to vector<8x8x8xi1>
      %49 = vector.broadcast %cst : f32 to vector<8x8x8xf32>
      %50 = arith.select %48, %46, %49 : vector<8x8x8xi1>, vector<8x8x8xf32>
      %cst_24 = arith.constant dense<0xFF800000> : vector<8x8xf32>
      %51 = vector.multi_reduction <maximumf>, %50, %cst_24 [2] : vector<8x8x8xf32> to vector<8x8xf32>
      %52 = vector.shape_cast %51 : vector<8x8xf32> to vector<8x8x1xf32>
      %53 = vector.broadcast %52 : vector<8x8x1xf32> to vector<8x8x8xf32>
      %54 = arith.subf %50, %53 : vector<8x8x8xf32>
      %55 = math.exp %54 : vector<8x8x8xf32>
      %cst_25 = arith.constant dense<0.000000e+00> : vector<8x8xf32>
      %56 = vector.multi_reduction <add>, %55, %cst_25 [2] : vector<8x8x8xf32> to vector<8x8xf32>
      %57 = vector.shape_cast %56 : vector<8x8xf32> to vector<8x8x1xf32>
      %58 = tpu.reciprocal %57 {approx = true} : vector<8x8x1xf32> -> vector<8x8x1xf32>
      %59 = vector.broadcast %58 : vector<8x8x1xf32> to vector<8x8x8xf32>
      %60 = arith.mulf %55, %59 : vector<8x8x8xf32>
      %61 = arith.truncf %60 : vector<8x8x8xf32> to vector<8x8x8xbf16>
      "tpu.trace_start"() <{level = 10 : i32, message = "blm,bmd->bld"}> : () -> ()
      %cst_26 = arith.constant dense<0.000000e+00> : vector<8x8x8xf32>
      %62 = tpu.matmul %61, %45, %cst_26 {dimension_numbers = #tpu.dot_dimension_numbers<[2], [1], [1], [2], [0, 0, 0, 1, 1, 2], [0], [0]>} : vector<8x8x8xbf16>, vector<8x8x8xbf16>, vector<8x8x8xf32> -> vector<8x8x8xf32>
      "tpu.trace_stop"() : () -> ()
      %63 = vector.shape_cast %62 : vector<8x8x8xf32> to vector<64x8xf32>
      %64 = arith.truncf %63 : vector<64x8xf32> to vector<64x8xbf16>
      %65 = vector.extract_strided_slice %32 {offsets = [0, 0], sizes = [8, 32], strides = [1, 1]} : vector<32x32xbf16> to vector<8x32xbf16>
      %cst_27 = arith.constant dense<0.000000e+00> : vector<64x32xf32>
      %66 = tpu.matmul %64, %65, %cst_27 {dimension_numbers = #tpu.dot_dimension_numbers<[1], [0], [0], [1], [0, 0, 1, 1], [], []>} : vector<64x8xbf16>, vector<8x32xbf16>, vector<64x32xf32> -> vector<64x32xf32>
      %67 = arith.addf %arg11, %66 : vector<64x32xf32>
      %68 = vector.extract_strided_slice %38 {offsets = [0, 0, 8], sizes = [8, 8, 8], strides = [1, 1, 1]} : vector<8x8x32xbf16> to vector<8x8x8xbf16>
      %69 = vector.extract_strided_slice %40 {offsets = [0, 0, 8], sizes = [8, 8, 8], strides = [1, 1, 1]} : vector<8x8x32xbf16> to vector<8x8x8xbf16>
      %70 = vector.extract_strided_slice %42 {offsets = [0, 0, 8], sizes = [8, 8, 8], strides = [1, 1, 1]} : vector<8x8x32xbf16> to vector<8x8x8xbf16>
      "tpu.trace_start"() <{level = 10 : i32, message = "bld,bmd->blm"}> : () -> ()
      %cst_28 = arith.constant dense<0.000000e+00> : vector<8x8x8xf32>
      %71 = tpu.matmul %68, %69, %cst_28 {dimension_numbers = #tpu.dot_dimension_numbers<[2], [2], [1], [1], [0, 0, 0, 1, 1, 1], [0], [0]>} : vector<8x8x8xbf16>, vector<8x8x8xbf16>, vector<8x8x8xf32> -> vector<8x8x8xf32>
      "tpu.trace_stop"() : () -> ()
      %72 = vector.shape_cast %8 : vector<1x8x8xi1> to vector<1x8x8xi1>
      %73 = vector.broadcast %72 : vector<1x8x8xi1> to vector<8x8x8xi1>
      %74 = vector.broadcast %cst : f32 to vector<8x8x8xf32>
      %75 = arith.select %73, %71, %74 : vector<8x8x8xi1>, vector<8x8x8xf32>
      %cst_29 = arith.constant dense<0xFF800000> : vector<8x8xf32>
      %76 = vector.multi_reduction <maximumf>, %75, %cst_29 [2] : vector<8x8x8xf32> to vector<8x8xf32>
      %77 = vector.shape_cast %76 : vector<8x8xf32> to vector<8x8x1xf32>
      %78 = vector.broadcast %77 : vector<8x8x1xf32> to vector<8x8x8xf32>
      %79 = arith.subf %75, %78 : vector<8x8x8xf32>
      %80 = math.exp %79 : vector<8x8x8xf32>
      %cst_30 = arith.constant dense<0.000000e+00> : vector<8x8xf32>
      %81 = vector.multi_reduction <add>, %80, %cst_30 [2] : vector<8x8x8xf32> to vector<8x8xf32>
      %82 = vector.shape_cast %81 : vector<8x8xf32> to vector<8x8x1xf32>
      %83 = tpu.reciprocal %82 {approx = true} : vector<8x8x1xf32> -> vector<8x8x1xf32>
      %84 = vector.broadcast %83 : vector<8x8x1xf32> to vector<8x8x8xf32>
      %85 = arith.mulf %80, %84 : vector<8x8x8xf32>
      %86 = arith.truncf %85 : vector<8x8x8xf32> to vector<8x8x8xbf16>
      "tpu.trace_start"() <{level = 10 : i32, message = "blm,bmd->bld"}> : () -> ()
      %cst_31 = arith.constant dense<0.000000e+00> : vector<8x8x8xf32>
      %87 = tpu.matmul %86, %70, %cst_31 {dimension_numbers = #tpu.dot_dimension_numbers<[2], [1], [1], [2], [0, 0, 0, 1, 1, 2], [0], [0]>} : vector<8x8x8xbf16>, vector<8x8x8xbf16>, vector<8x8x8xf32> -> vector<8x8x8xf32>
      "tpu.trace_stop"() : () -> ()
      %88 = vector.shape_cast %87 : vector<8x8x8xf32> to vector<64x8xf32>
      %89 = arith.truncf %88 : vector<64x8xf32> to vector<64x8xbf16>
      %90 = vector.extract_strided_slice %32 {offsets = [8, 0], sizes = [8, 32], strides = [1, 1]} : vector<32x32xbf16> to vector<8x32xbf16>
      %cst_32 = arith.constant dense<0.000000e+00> : vector<64x32xf32>
      %91 = tpu.matmul %89, %90, %cst_32 {dimension_numbers = #tpu.dot_dimension_numbers<[1], [0], [0], [1], [0, 0, 1, 1], [], []>} : vector<64x8xbf16>, vector<8x32xbf16>, vector<64x32xf32> -> vector<64x32xf32>
      %92 = arith.addf %67, %91 : vector<64x32xf32>
      %93 = vector.extract_strided_slice %38 {offsets = [0, 0, 16], sizes = [8, 8, 8], strides = [1, 1, 1]} : vector<8x8x32xbf16> to vector<8x8x8xbf16>
      %94 = vector.extract_strided_slice %40 {offsets = [0, 0, 16], sizes = [8, 8, 8], strides = [1, 1, 1]} : vector<8x8x32xbf16> to vector<8x8x8xbf16>
      %95 = vector.extract_strided_slice %42 {offsets = [0, 0, 16], sizes = [8, 8, 8], strides = [1, 1, 1]} : vector<8x8x32xbf16> to vector<8x8x8xbf16>
      "tpu.trace_start"() <{level = 10 : i32, message = "bld,bmd->blm"}> : () -> ()
      %cst_33 = arith.constant dense<0.000000e+00> : vector<8x8x8xf32>
      %96 = tpu.matmul %93, %94, %cst_33 {dimension_numbers = #tpu.dot_dimension_numbers<[2], [2], [1], [1], [0, 0, 0, 1, 1, 1], [0], [0]>} : vector<8x8x8xbf16>, vector<8x8x8xbf16>, vector<8x8x8xf32> -> vector<8x8x8xf32>
      "tpu.trace_stop"() : () -> ()
      %97 = vector.shape_cast %8 : vector<1x8x8xi1> to vector<1x8x8xi1>
      %98 = vector.broadcast %97 : vector<1x8x8xi1> to vector<8x8x8xi1>
      %99 = vector.broadcast %cst : f32 to vector<8x8x8xf32>
      %100 = arith.select %98, %96, %99 : vector<8x8x8xi1>, vector<8x8x8xf32>
      %cst_34 = arith.constant dense<0xFF800000> : vector<8x8xf32>
      %101 = vector.multi_reduction <maximumf>, %100, %cst_34 [2] : vector<8x8x8xf32> to vector<8x8xf32>
      %102 = vector.shape_cast %101 : vector<8x8xf32> to vector<8x8x1xf32>
      %103 = vector.broadcast %102 : vector<8x8x1xf32> to vector<8x8x8xf32>
      %104 = arith.subf %100, %103 : vector<8x8x8xf32>
      %105 = math.exp %104 : vector<8x8x8xf32>
      %cst_35 = arith.constant dense<0.000000e+00> : vector<8x8xf32>
      %106 = vector.multi_reduction <add>, %105, %cst_35 [2] : vector<8x8x8xf32> to vector<8x8xf32>
      %107 = vector.shape_cast %106 : vector<8x8xf32> to vector<8x8x1xf32>
      %108 = tpu.reciprocal %107 {approx = true} : vector<8x8x1xf32> -> vector<8x8x1xf32>
      %109 = vector.broadcast %108 : vector<8x8x1xf32> to vector<8x8x8xf32>
      %110 = arith.mulf %105, %109 : vector<8x8x8xf32>
      %111 = arith.truncf %110 : vector<8x8x8xf32> to vector<8x8x8xbf16>
      "tpu.trace_start"() <{level = 10 : i32, message = "blm,bmd->bld"}> : () -> ()
      %cst_36 = arith.constant dense<0.000000e+00> : vector<8x8x8xf32>
      %112 = tpu.matmul %111, %95, %cst_36 {dimension_numbers = #tpu.dot_dimension_numbers<[2], [1], [1], [2], [0, 0, 0, 1, 1, 2], [0], [0]>} : vector<8x8x8xbf16>, vector<8x8x8xbf16>, vector<8x8x8xf32> -> vector<8x8x8xf32>
      "tpu.trace_stop"() : () -> ()
      %113 = vector.shape_cast %112 : vector<8x8x8xf32> to vector<64x8xf32>
      %114 = arith.truncf %113 : vector<64x8xf32> to vector<64x8xbf16>
      %115 = vector.extract_strided_slice %32 {offsets = [16, 0], sizes = [8, 32], strides = [1, 1]} : vector<32x32xbf16> to vector<8x32xbf16>
      %cst_37 = arith.constant dense<0.000000e+00> : vector<64x32xf32>
      %116 = tpu.matmul %114, %115, %cst_37 {dimension_numbers = #tpu.dot_dimension_numbers<[1], [0], [0], [1], [0, 0, 1, 1], [], []>} : vector<64x8xbf16>, vector<8x32xbf16>, vector<64x32xf32> -> vector<64x32xf32>
      %117 = arith.addf %92, %116 : vector<64x32xf32>
      %118 = vector.extract_strided_slice %38 {offsets = [0, 0, 24], sizes = [8, 8, 8], strides = [1, 1, 1]} : vector<8x8x32xbf16> to vector<8x8x8xbf16>
      %119 = vector.extract_strided_slice %40 {offsets = [0, 0, 24], sizes = [8, 8, 8], strides = [1, 1, 1]} : vector<8x8x32xbf16> to vector<8x8x8xbf16>
      %120 = vector.extract_strided_slice %42 {offsets = [0, 0, 24], sizes = [8, 8, 8], strides = [1, 1, 1]} : vector<8x8x32xbf16> to vector<8x8x8xbf16>
      "tpu.trace_start"() <{level = 10 : i32, message = "bld,bmd->blm"}> : () -> ()
      %cst_38 = arith.constant dense<0.000000e+00> : vector<8x8x8xf32>
      %121 = tpu.matmul %118, %119, %cst_38 {dimension_numbers = #tpu.dot_dimension_numbers<[2], [2], [1], [1], [0, 0, 0, 1, 1, 1], [0], [0]>} : vector<8x8x8xbf16>, vector<8x8x8xbf16>, vector<8x8x8xf32> -> vector<8x8x8xf32>
      "tpu.trace_stop"() : () -> ()
      %122 = vector.shape_cast %8 : vector<1x8x8xi1> to vector<1x8x8xi1>
      %123 = vector.broadcast %122 : vector<1x8x8xi1> to vector<8x8x8xi1>
      %124 = vector.broadcast %cst : f32 to vector<8x8x8xf32>
      %125 = arith.select %123, %121, %124 : vector<8x8x8xi1>, vector<8x8x8xf32>
      %cst_39 = arith.constant dense<0xFF800000> : vector<8x8xf32>
      %126 = vector.multi_reduction <maximumf>, %125, %cst_39 [2] : vector<8x8x8xf32> to vector<8x8xf32>
      %127 = vector.shape_cast %126 : vector<8x8xf32> to vector<8x8x1xf32>
      %128 = vector.broadcast %127 : vector<8x8x1xf32> to vector<8x8x8xf32>
      %129 = arith.subf %125, %128 : vector<8x8x8xf32>
      %130 = math.exp %129 : vector<8x8x8xf32>
      %cst_40 = arith.constant dense<0.000000e+00> : vector<8x8xf32>
      %131 = vector.multi_reduction <add>, %130, %cst_40 [2] : vector<8x8x8xf32> to vector<8x8xf32>
      %132 = vector.shape_cast %131 : vector<8x8xf32> to vector<8x8x1xf32>
      %133 = tpu.reciprocal %132 {approx = true} : vector<8x8x1xf32> -> vector<8x8x1xf32>
      %134 = vector.broadcast %133 : vector<8x8x1xf32> to vector<8x8x8xf32>
      %135 = arith.mulf %130, %134 : vector<8x8x8xf32>
      %136 = arith.truncf %135 : vector<8x8x8xf32> to vector<8x8x8xbf16>
      "tpu.trace_start"() <{level = 10 : i32, message = "blm,bmd->bld"}> : () -> ()
      %cst_41 = arith.constant dense<0.000000e+00> : vector<8x8x8xf32>
      %137 = tpu.matmul %136, %120, %cst_41 {dimension_numbers = #tpu.dot_dimension_numbers<[2], [1], [1], [2], [0, 0, 0, 1, 1, 2], [0], [0]>} : vector<8x8x8xbf16>, vector<8x8x8xbf16>, vector<8x8x8xf32> -> vector<8x8x8xf32>
      "tpu.trace_stop"() : () -> ()
      %138 = vector.shape_cast %137 : vector<8x8x8xf32> to vector<64x8xf32>
      %139 = arith.truncf %138 : vector<64x8xf32> to vector<64x8xbf16>
      %140 = vector.extract_strided_slice %32 {offsets = [24, 0], sizes = [8, 32], strides = [1, 1]} : vector<32x32xbf16> to vector<8x32xbf16>
      %cst_42 = arith.constant dense<0.000000e+00> : vector<64x32xf32>
      %141 = tpu.matmul %139, %140, %cst_42 {dimension_numbers = #tpu.dot_dimension_numbers<[1], [0], [0], [1], [0, 0, 1, 1], [], []>} : vector<64x8xbf16>, vector<8x32xbf16>, vector<64x32xf32> -> vector<64x32xf32>
      %142 = arith.addf %117, %141 : vector<64x32xf32>
      scf.yield %142 : vector<64x32xf32>
    }
    %c2_i32_4 = arith.constant 2 : i32
    %11 = vector.shape_cast %10 : vector<64x32xf32> to vector<8x8x32xf32>
    %12 = vector.extract_strided_slice %11 {offsets = [0, 7, 0], sizes = [8, 1, 32], strides = [1, 1, 1]} : vector<8x8x32xf32> to vector<8x1x32xf32>
    %13 = vector.shape_cast %12 : vector<8x1x32xf32> to vector<8x32xf32>
    %14 = arith.truncf %13 : vector<8x32xf32> to vector<8x32xbf16>
    %c0_5 = arith.constant 0 : index
    %c0_6 = arith.constant 0 : index
    %15 = vector.load %arg7[%c0_5, %c0_6] : memref<32x128xbf16, #tpu.memory_space<vmem>>, vector<32x128xbf16>
    %cst_7 = arith.constant dense<0.000000e+00> : vector<8x128xf32>
    %16 = tpu.matmul %14, %15, %cst_7 {dimension_numbers = #tpu.dot_dimension_numbers<[1], [0], [0], [1], [0, 0, 1, 1], [], []>} : vector<8x32xbf16>, vector<32x128xbf16>, vector<8x128xf32> -> vector<8x128xf32>
    %c0_8 = arith.constant 0 : index
    %c0_9 = arith.constant 0 : index
    %17 = vector.load %arg8[%c0_8, %c0_9] : memref<1x128xf32, #tpu.memory_space<vmem>>, vector<1x128xf32>
    %18 = vector.broadcast %17 : vector<1x128xf32> to vector<8x128xf32>
    %19 = arith.addf %16, %18 : vector<8x128xf32>
    %c0_10 = arith.constant 0 : index
    %c0_11 = arith.constant 0 : index
    %20 = vector.load %arg9[%c0_10, %c0_11] : memref<8x128xf32, #tpu.memory_space<vmem>>, vector<8x128xf32>
    tpu.vector_store %arg9[%c0_10, %c0_11], %19 {strides = array<i32>} : memref<8x128xf32, #tpu.memory_space<vmem>>, vector<8x128xf32>,
    return
  }
  func.func @transform_0(%arg0: i32) -> (i32, i32, i32) {
    %c0_i32 = arith.constant 0 : i32
    %c0_i32_0 = arith.constant 0 : i32
    %c0_i32_1 = arith.constant 0 : i32
    return %arg0, %c0_i32, %c0_i32_0 : i32, i32, i32
  }
  func.func @transform_1(%arg0: i32) -> (i32, i32) {
    %c0_i32 = arith.constant 0 : i32
    %c0_i32_0 = arith.constant 0 : i32
    %c0_i32_1 = arith.constant 0 : i32
    return %c0_i32, %c0_i32_0 : i32, i32
  }
  func.func @transform_2(%arg0: i32) -> (i32, i32, i32) {
    %c0_i32 = arith.constant 0 : i32
    %c0_i32_0 = arith.constant 0 : i32
    %c0_i32_1 = arith.constant 0 : i32
    %c0_i32_2 = arith.constant 0 : i32
    return %c0_i32, %c0_i32_0, %c0_i32_1 : i32, i32, i32
  }
  func.func @transform_3(%arg0: i32) -> (i32, i32, i32) {
    %c0_i32 = arith.constant 0 : i32
    %c0_i32_0 = arith.constant 0 : i32
    %c0_i32_1 = arith.constant 0 : i32
    %c0_i32_2 = arith.constant 0 : i32
    return %c0_i32, %c0_i32_0, %c0_i32_1 : i32, i32, i32
  }
  func.func @transform_4(%arg0: i32) -> (i32, i32, i32) {
    %c0_i32 = arith.constant 0 : i32
    %c0_i32_0 = arith.constant 0 : i32
    %c0_i32_1 = arith.constant 0 : i32
    %c0_i32_2 = arith.constant 0 : i32
    return %c0_i32, %c0_i32_0, %c0_i32_1 : i32, i32, i32
  }
  func.func @transform_5(%arg0: i32) -> (i32, i32, i32) {
    %c0_i32 = arith.constant 0 : i32
    %c0_i32_0 = arith.constant 0 : i32
    %c0_i32_1 = arith.constant 0 : i32
    %c0_i32_2 = arith.constant 0 : i32
    return %c0_i32, %c0_i32_0, %c0_i32_1 : i32, i32, i32
  }
  func.func @transform_6(%arg0: i32) -> (i32, i32) {
    %c0_i32 = arith.constant 0 : i32
    %c0_i32_0 = arith.constant 0 : i32
    %c0_i32_1 = arith.constant 0 : i32
    return %c0_i32, %c0_i32_0 : i32, i32
  }
  func.func @transform_7(%arg0: i32) -> (i32, i32) {
    %c0_i32 = arith.constant 0 : i32
    %c0_i32_0 = arith.constant 0 : i32
    %c0_i32_1 = arith.constant 0 : i32
    return %c0_i32, %c0_i32_0 : i32, i32
  }
  func.func @transform_8(%arg0: i32) -> (i32, i32) {
    %c0_i32 = arith.constant 0 : i32
    %c0_i32_0 = arith.constant 0 : i32
    return %arg0, %c0_i32 : i32, i32
  }
}

</mosaic_0001>

<llo_original>
// kernel: tpu_custom_call.1
$region0: #{tpu_custom_call.1}
  #allocation0 [shape = 'u32[]', space=smem, size = 0x4, offset = 0x4, fixed_abs, tag = 'smem constant byte address 0x4 - core index']
  #allocation1 [shape = 'u32[144,128]{1,0:T(1,128)}', space=vmem, size = 0x12000, scoped, tag = 'internal scratch']
  %s0 = inlined_call_operand.hbm [shape: f32[8,8,32], index: 0, kind: input, shape index: {}]
  %s1 = inlined_call_operand.hbm [shape: f32[8,32], index: 1, kind: input, shape index: {}]
  %s2 = inlined_call_operand.hbm [shape: bf16[2,32,32], index: 2, kind: input, shape index: {}]
  %s3 = inlined_call_operand.hbm [shape: bf16[2,32,32], index: 3, kind: input, shape index: {}]
  %s4 = inlined_call_operand.hbm [shape: bf16[2,32,32], index: 4, kind: input, shape index: {}]
  %s5 = inlined_call_operand.hbm [shape: bf16[2,32,32], index: 5, kind: input, shape index: {}]
  %s6 = inlined_call_operand.hbm [shape: bf16[32,128], index: 6, kind: input, shape index: {}]
  %s7 = inlined_call_operand.vmem [shape: f32[1,128], index: 7, kind: input, shape index: {}]
  %s8 = inlined_call_operand.hbm [shape: f32[8,128], index: 8, kind: output, shape index: {}]
  %s9 = sld [smem:[#allocation0]]
  $region77: #{tpu_custom_call.1} parent=0
    _
  %s11 = ssub.s32 1, %s9
  %s12 = scalar_select 0, %s11, %s9
  $region1: #{tpu_custom_call.1} parent=0
    #allocation2 [shape = 'u8[32768]{0}', space=vmem, size = 0x8000, scoped, tag = 'input window, operand 0, single buffered']
    #allocation3 [shape = 's32[1]{0}', space=sflag, size = 0x4, scoped, tag = 'scoped memory for tpu_custom_call.1']
    #allocation4 [shape = 's32[1]{0}', space=sflag, size = 0x4, scoped, tag = 'scoped memory for tpu_custom_call.1']
    #allocation5 [shape = 'u8[4096]{0}', space=vmem, size = 0x1000, scoped, tag = 'input window, operand 1, single buffered']
    #allocation6 [shape = 's32[1]{0}', space=sflag, size = 0x4, scoped, tag = 'scoped memory for tpu_custom_call.1']
    #allocation7 [shape = 'u8[16384]{0}', space=vmem, size = 0x4000, scoped, tag = 'input window, operand 2, single buffered']
    #allocation8 [shape = 'u8[16384]{0}', space=vmem, size = 0x4000, scoped, tag = 'input window, operand 3, single buffered']
    #allocation9 [shape = 's32[1]{0}', space=sflag, size = 0x4, scoped, tag = 'scoped memory for tpu_custom_call.1']
    #allocation10 [shape = 'u8[16384]{0}', space=vmem, size = 0x4000, scoped, tag = 'input window, operand 4, single buffered']
    #allocation11 [shape = 'u8[16384]{0}', space=vmem, size = 0x4000, scoped, tag = 'input window, operand 5, single buffered']
    #allocation12 [shape = 's32[1]{0}', space=sflag, size = 0x4, scoped, tag = 'scoped memory for tpu_custom_call.1']
    #allocation13 [shape = 'u8[8192]{0}', space=vmem, size = 0x2000, scoped, tag = 'input window, operand 6, single buffered']
    #allocation14 [shape = 'u8[4096]{0}', space=vmem, size = 0x1000, scoped, tag = 'output window, operand 0, single buffered']
    %13 = vsyncpa [#allocation3], 0
    %14 = vsyncpa [#allocation6], 0
    %15 = vsyncpa [#allocation9], 0
    %16 = vsyncpa [#allocation12], 0
    %17 = vsyncpa [#allocation4], 0
    // Predicated region
    $region2: #{tpu_custom_call.1} parent=1 // pred_check
      _
    $region3: #{tpu_custom_call.1} parent=1 // pred_check_branch
      %19 = sbr.rel (0) target = $region5
    $region4: #{tpu_custom_call.1} parent=1 // pred_region
      %s21 = ssub.s32 1024, 1024
      %22 = vsyncadd [#allocation3], %s21
      %s23 = sshll.u32 [#allocation2], 4
      %s24 = int_to_ptr.vmem [resolvable:$true] %s23
      %29 = dma.hbm_to_vmem [thread:$0]  %s0, 1024, %s24, [#allocation3], 128, 128, 8
    $region5: #{tpu_custom_call.1} parent=1 // pred_fallthru
      _
    // Predicated region
    $region6: #{tpu_custom_call.1} parent=1 // pred_check
      _
    $region7: #{tpu_custom_call.1} parent=1 // pred_check_branch
      %31 = sbr.rel (0) target = $region9
    $region8: #{tpu_custom_call.1} parent=1 // pred_region
      %s33 = ssub.s32 128, 128
      %34 = vsyncadd [#allocation6], %s33
      %s36 = sshll.u32 [#allocation5], 4
      %s37 = int_to_ptr.vmem [resolvable:$true] %s36
      %39 = dma.hbm_to_vmem [thread:$0]  %s1, 128, %s37, [#allocation6]
    $region9: #{tpu_custom_call.1} parent=1 // pred_fallthru
      _
    // Predicated region
    $region10: #{tpu_custom_call.1} parent=1 // pred_check
      _
    $region11: #{tpu_custom_call.1} parent=1 // pred_check_branch
      %41 = sbr.rel (0) target = $region13
    $region12: #{tpu_custom_call.1} parent=1 // pred_region
      %s43 = ssub.s32 512, 512
      %44 = vsyncadd [#allocation6], %s43
      %s45 = sshll.u32 [#allocation7], 4
      %s46 = int_to_ptr.vmem [resolvable:$true] %s45
      %51 = dma.hbm_to_vmem [thread:$0]  %s2, 512, %s46, [#allocation6], 64, 64, 4
    $region13: #{tpu_custom_call.1} parent=1 // pred_fallthru
      _
    // Predicated region
    $region14: #{tpu_custom_call.1} parent=1 // pred_check
      _
    $region15: #{tpu_custom_call.1} parent=1 // pred_check_branch
      %53 = sbr.rel (0) target = $region17
    $region16: #{tpu_custom_call.1} parent=1 // pred_region
      %s55 = ssub.s32 512, 512
      %56 = vsyncadd [#allocation9], %s55
      %s57 = sshll.u32 [#allocation8], 4
      %s58 = int_to_ptr.vmem [resolvable:$true] %s57
      %63 = dma.hbm_to_vmem [thread:$0]  %s3, 512, %s58, [#allocation9], 64, 64, 4
    $region17: #{tpu_custom_call.1} parent=1 // pred_fallthru
      _
    // Predicated region
    $region18: #{tpu_custom_call.1} parent=1 // pred_check
      _
    $region19: #{tpu_custom_call.1} parent=1 // pred_check_branch
      %65 = sbr.rel (0) target = $region21
    $region20: #{tpu_custom_call.1} parent=1 // pred_region
      %s67 = ssub.s32 512, 512
      %68 = vsyncadd [#allocation9], %s67
      %s69 = sshll.u32 [#allocation10], 4
      %s70 = int_to_ptr.vmem [resolvable:$true] %s69
      %75 = dma.hbm_to_vmem [thread:$0]  %s4, 512, %s70, [#allocation9], 64, 64, 4
    $region21: #{tpu_custom_call.1} parent=1 // pred_fallthru
      _
    // Predicated region
    $region22: #{tpu_custom_call.1} parent=1 // pred_check
      _
    $region23: #{tpu_custom_call.1} parent=1 // pred_check_branch
      %77 = sbr.rel (0) target = $region25
    $region24: #{tpu_custom_call.1} parent=1 // pred_region
      %s79 = ssub.s32 512, 512
      %80 = vsyncadd [#allocation12], %s79
      %s81 = sshll.u32 [#allocation11], 4
      %s82 = int_to_ptr.vmem [resolvable:$true] %s81
      %87 = dma.hbm_to_vmem [thread:$0]  %s5, 512, %s82, [#allocation12], 64, 64, 4
    $region25: #{tpu_custom_call.1} parent=1 // pred_fallthru
      _
    // Predicated region
    $region26: #{tpu_custom_call.1} parent=1 // pred_check
      _
    $region27: #{tpu_custom_call.1} parent=1 // pred_check_branch
      %89 = sbr.rel (0) target = $region29
    $region28: #{tpu_custom_call.1} parent=1 // pred_region
      %s91 = ssub.s32 256, 256
      %92 = vsyncadd [#allocation12], %s91
      %s93 = sshll.u32 [#allocation13], 4
      %s94 = int_to_ptr.vmem [resolvable:$true] %s93
      %99 = dma.hbm_to_vmem [thread:$0]  %s6, 256, %s94, [#allocation12], 64, 64, 4
    $region29: #{tpu_custom_call.1} parent=1 // pred_fallthru
      _
    // Predicated region
    $region30: #{tpu_custom_call.1} parent=1 // pred_check
      _
    $region31: #{tpu_custom_call.1} parent=1 // pred_check_branch
      %101 = sbr.rel (0) target = $region33
    $region32: #{tpu_custom_call.1} parent=1 // pred_region
      _
    $region33: #{tpu_custom_call.1} parent=1 // pred_fallthru
      _
    // Predicated region
    $region34: #{tpu_custom_call.1} parent=1 // pred_check
      _
    $region35: #{tpu_custom_call.1} parent=1 // pred_check_branch
      %103 = sbr.rel (0) target = $region37
    $region36: #{tpu_custom_call.1} parent=1 // pred_region
      %104 = dma.done [#allocation3], 1024
    $region37: #{tpu_custom_call.1} parent=1 // pred_fallthru
      _
    // Predicated region
    $region38: #{tpu_custom_call.1} parent=1 // pred_check
      _
    $region39: #{tpu_custom_call.1} parent=1 // pred_check_branch
      %106 = sbr.rel (0) target = $region41
    $region40: #{tpu_custom_call.1} parent=1 // pred_region
      %107 = dma.done [#allocation6], 128
    $region41: #{tpu_custom_call.1} parent=1 // pred_fallthru
      _
    // Predicated region
    $region42: #{tpu_custom_call.1} parent=1 // pred_check
      _
    $region43: #{tpu_custom_call.1} parent=1 // pred_check_branch
      %109 = sbr.rel (0) target = $region45
    $region44: #{tpu_custom_call.1} parent=1 // pred_region
      %110 = dma.done [#allocation6], 512
    $region45: #{tpu_custom_call.1} parent=1 // pred_fallthru
      _
    // Predicated region
    $region46: #{tpu_custom_call.1} parent=1 // pred_check
      _
    $region47: #{tpu_custom_call.1} parent=1 // pred_check_branch
      %112 = sbr.rel (0) target = $region49
    $region48: #{tpu_custom_call.1} parent=1 // pred_region
      %113 = dma.done [#allocation9], 512
    $region49: #{tpu_custom_call.1} parent=1 // pred_fallthru
      _
    // Predicated region
    $region50: #{tpu_custom_call.1} parent=1 // pred_check
      _
    $region51: #{tpu_custom_call.1} parent=1 // pred_check_branch
      %115 = sbr.rel (0) target = $region53
    $region52: #{tpu_custom_call.1} parent=1 // pred_region
      %116 = dma.done [#allocation9], 512
    $region53: #{tpu_custom_call.1} parent=1 // pred_fallthru
      _
    // Predicated region
    $region54: #{tpu_custom_call.1} parent=1 // pred_check
      _
    $region55: #{tpu_custom_call.1} parent=1 // pred_check_branch
      %118 = sbr.rel (0) target = $region57
    $region56: #{tpu_custom_call.1} parent=1 // pred_region
      %119 = dma.done [#allocation12], 512
    $region57: #{tpu_custom_call.1} parent=1 // pred_fallthru
      _
    // Predicated region
    $region58: #{tpu_custom_call.1} parent=1 // pred_check
      _
    $region59: #{tpu_custom_call.1} parent=1 // pred_check_branch
      %121 = sbr.rel (0) target = $region61
    $region60: #{tpu_custom_call.1} parent=1 // pred_region
      %122 = dma.done [#allocation12], 256
    $region61: #{tpu_custom_call.1} parent=1 // pred_fallthru
      _
    %v124 = vld [vmem:[#allocation2] sm:$0xff]
    %v125 = vld [vmem:[#allocation2 + $0x8] sm:$0xff]
    %v126 = vld [vmem:[#allocation2 + $0x10] sm:$0xff]
    %v127 = vld [vmem:[#allocation2 + $0x18] sm:$0xff]
    %v128 = vld [vmem:[#allocation2 + $0x20] sm:$0xff]
    %v129 = vld [vmem:[#allocation2 + $0x28] sm:$0xff]
    %v130 = vld [vmem:[#allocation2 + $0x30] sm:$0xff]
    %v131 = vld [vmem:[#allocation2 + $0x38] sm:$0xff]
    %v132 = vld [vmem:[#allocation5] sm:$0xff]
    %v133 = vadd.f32 %v124, %v132
    %v134 = vadd.f32 %v125, %v132
    %v135 = vadd.f32 %v126, %v132
    %v136 = vadd.f32 %v127, %v132
    %v137 = vadd.f32 %v128, %v132
    %v138 = vadd.f32 %v129, %v132
    %v139 = vadd.f32 %v130, %v132
    %v140 = vadd.f32 %v131, %v132
    %v141 = vlaneseq
    %v142 = vshrl.u32 %v141, 7
    %v143 = vlaneseq
    %v144 = vand.u32 %v143, 127
    %vm145 = vcmp.ge.s32.totalorder %v142, %v144
    loop: start=0, step=1, limit=2
    $region62: #{tpu_custom_call.1} parent=1 // loop_pre_header
      _
    $region63: #{tpu_custom_call.1} parent=1 // loop_header
      %s147 = sphi 0, %s151
      %p148 = scmp.ge.s32.totalorder %s147, 2
      %v152 = vphi %v133, %v4349
      %v153 = vphi %v134, %v4350
      %v154 = vphi %v135, %v4351
      %v155 = vphi %v136, %v4352
      %v156 = vphi %v137, %v4353
      %v157 = vphi %v138, %v4354
      %v158 = vphi %v139, %v4355
      %v159 = vphi %v140, %v4356
    $region64: #{tpu_custom_call.1} parent=1 // loop_header_branch
      %150 = sbr.rel (%p148) target = $region68
    $region65: #{tpu_custom_call.1} parent=1 // loop_body
      %s160 = smul.u32 %s147, 4
      %s161 = smul.addr %s160, 4
      %s162 = scalar_lea.vmem [#allocation7], %s161
      %v163 = vld [vmem:[%s162] sm:$0xf]
      %v164 = vld [vmem:[%s162 + $0x4] sm:$0xf]
      %v165 = vld [vmem:[%s162 + $0x8] sm:$0xf]
      %v166 = vld [vmem:[%s162 + $0xc] sm:$0xf]
      %s167 = smul.addr %s160, 4
      %s168 = scalar_lea.vmem [#allocation8], %s167
      %v169 = vld [vmem:[%s168] sm:$0xf]
      %v170 = vld [vmem:[%s168 + $0x4] sm:$0xf]
      %v171 = vld [vmem:[%s168 + $0x8] sm:$0xf]
      %v172 = vld [vmem:[%s168 + $0xc] sm:$0xf]
      %s173 = smul.addr %s160, 4
      %s174 = scalar_lea.vmem [#allocation10], %s173
      %v175 = vld [vmem:[%s174] sm:$0xf]
      %v176 = vld [vmem:[%s174 + $0x4] sm:$0xf]
      %v177 = vld [vmem:[%s174 + $0x8] sm:$0xf]
      %v178 = vld [vmem:[%s174 + $0xc] sm:$0xf]
      %s179 = smul.addr %s160, 4
      %s180 = scalar_lea.vmem [#allocation11], %s179
      %v181 = vld [vmem:[%s180] sm:$0xf]
      %v182 = vld [vmem:[%s180 + $0x4] sm:$0xf]
      %v183 = vld [vmem:[%s180 + $0x8] sm:$0xf]
      %v184 = vld [vmem:[%s180 + $0xc] sm:$0xf]
      %v185 = vpack.c.bf16 %v153, %v152
      %v186 = vpack.c.bf16 %v155, %v154
      %v187 = vpack.c.bf16 %v157, %v156
      %v188 = vpack.c.bf16 %v159, %v158
      %v193 = vunpack.c.l.b16 %v163
      %v194 = vunpack.c.l.b16 %v164
      %v195 = vunpack.c.l.b16 %v165
      %v196 = vunpack.c.l.b16 %v166
      %v197 = vpack.c.b16 %v194, %v193
      %v198 = vpack.c.b16 %v196, %v195
      %vm201 = vcmask 261120
      %v203 = vsel %vm201, %v185, 0
      %v206 = vsel %vm201, %v186, 0
      %v209 = vsel %vm201, %v187, 0
      %v212 = vsel %vm201, %v188, 0
      %214 = vmatprep.subr.bf16.mxu0 0
      %215 = vmatpush1.bf16.msra.mxu0 0
      %216 = vmatprep.subr.bf16.mxu0 0
      %217 = vmatpush1.bf16.msra.mxu0 0
      %218 = vmatprep.subr.bf16.mxu0 0
      %219 = vmatpush1.bf16.msra.mxu0 0
      %220 = vmatprep.subr.bf16.mxu0 0
      %221 = vmatpush1.bf16.msra.mxu0 0
      %222 = vmatprep.subr.bf16.mxu0 0
      %223 = vmatpush1.bf16.msra.mxu0 0
      %224 = vmatprep.subr.bf16.mxu0 0
      %225 = vmatpush1.bf16.msra.mxu0 0
      %226 = vmatprep.subr.bf16.mxu0 0
      %227 = vmatpush1.bf16.msra.mxu0 %v198
      %228 = vmatprep.subr.bf16.mxu0 0
      %229 = vmatpush1.bf16.msra.mxu0 %v197
      %230 = vmatprep.subr.bf16.mxu0 0
      %231 = vmatpush2.bf16.msra.mxu0 0
      %232 = vmatprep.subr.bf16.mxu0 0
      %233 = vmatpush2.bf16.msra.mxu0 0
      %234 = vmatprep.subr.bf16.mxu0 0
      %235 = vmatpush2.bf16.msra.mxu0 0
      %236 = vmatprep.subr.bf16.mxu0 0
      %237 = vmatpush2.bf16.msra.mxu0 0
      %238 = vmatprep.subr.bf16.mxu0 0
      %239 = vmatpush2.bf16.msra.mxu0 0
      %240 = vmatprep.subr.bf16.mxu0 0
      %241 = vmatpush2.bf16.msra.mxu0 0
      %242 = vmatprep.subr.bf16.mxu0 0
      %243 = vmatpush2.bf16.msra.mxu0 0
      %244 = vmatprep.subr.bf16.mxu0 0
      %245 = vmatpush2.bf16.msra.mxu0 0
      %246 = vmatprep.mubr.bf16.mxu0 0
      %247 = vmatmul.mubr.bf16.gmra.mxu0 %v203
      %v248 = vpop.f32.mrf.mxu0
      %v249 = vadd.f32 0.0, %v248
      %v250 = vpop.f32.mrf.mxu0
      %v251 = vpop.f32.mrf.mxu0
      %v252 = vadd.f32 0.0, %v251
      %v253 = vpop.f32.mrf.mxu0
      %254 = vmatprep.mubr.bf16.mxu0 0
      %255 = vmatmul.mubr.bf16.gmra.mxu0 %v206
      %v256 = vpop.f32.mrf.mxu0
      %v257 = vadd.f32 0.0, %v256
      %v258 = vpop.f32.mrf.mxu0
      %v259 = vpop.f32.mrf.mxu0
      %v260 = vadd.f32 0.0, %v259
      %v261 = vpop.f32.mrf.mxu0
      %262 = vmatprep.mubr.bf16.mxu0 0
      %263 = vmatmul.mubr.bf16.gmra.mxu0 %v209
      %v264 = vpop.f32.mrf.mxu0
      %v265 = vadd.f32 0.0, %v264
      %v266 = vpop.f32.mrf.mxu0
      %v267 = vpop.f32.mrf.mxu0
      %v268 = vadd.f32 0.0, %v267
      %v269 = vpop.f32.mrf.mxu0
      %270 = vmatprep.mubr.bf16.mxu0 0
      %271 = vmatmul.mubr.bf16.gmra.mxu0 %v212
      %v272 = vpop.f32.mrf.mxu0
      %v273 = vadd.f32 0.0, %v272
      %v274 = vpop.f32.mrf.mxu0
      %v275 = vpop.f32.mrf.mxu0
      %v276 = vadd.f32 0.0, %v275
      %v277 = vpop.f32.mrf.mxu0
      %278 = vdwg.mxu0
      %v283 = vunpack.c.l.b16 %v169
      %v284 = vunpack.c.l.b16 %v170
      %v285 = vunpack.c.l.b16 %v171
      %v286 = vunpack.c.l.b16 %v172
      %v287 = vpack.c.b16 %v284, %v283
      %v288 = vpack.c.b16 %v286, %v285
      %291 = vmatprep.subr.bf16.mxu0 0
      %292 = vmatpush1.bf16.msra.mxu0 0
      %293 = vmatprep.subr.bf16.mxu0 0
      %294 = vmatpush1.bf16.msra.mxu0 0
      %295 = vmatprep.subr.bf16.mxu0 0
      %296 = vmatpush1.bf16.msra.mxu0 0
      %297 = vmatprep.subr.bf16.mxu0 0
      %298 = vmatpush1.bf16.msra.mxu0 0
      %299 = vmatprep.subr.bf16.mxu0 0
      %300 = vmatpush1.bf16.msra.mxu0 0
      %301 = vmatprep.subr.bf16.mxu0 0
      %302 = vmatpush1.bf16.msra.mxu0 0
      %303 = vmatprep.subr.bf16.mxu0 0
      %304 = vmatpush1.bf16.msra.mxu0 %v288
      %305 = vmatprep.subr.bf16.mxu0 0
      %306 = vmatpush1.bf16.msra.mxu0 %v287
      %307 = vmatprep.subr.bf16.mxu0 0
      %308 = vmatpush2.bf16.msra.mxu0 0
      %309 = vmatprep.subr.bf16.mxu0 0
      %310 = vmatpush2.bf16.msra.mxu0 0
      %311 = vmatprep.subr.bf16.mxu0 0
      %312 = vmatpush2.bf16.msra.mxu0 0
      %313 = vmatprep.subr.bf16.mxu0 0
      %314 = vmatpush2.bf16.msra.mxu0 0
      %315 = vmatprep.subr.bf16.mxu0 0
      %316 = vmatpush2.bf16.msra.mxu0 0
      %317 = vmatprep.subr.bf16.mxu0 0
      %318 = vmatpush2.bf16.msra.mxu0 0
      %319 = vmatprep.subr.bf16.mxu0 0
      %320 = vmatpush2.bf16.msra.mxu0 0
      %321 = vmatprep.subr.bf16.mxu0 0
      %322 = vmatpush2.bf16.msra.mxu0 0
      %323 = vmatprep.mubr.bf16.mxu0 0
      %324 = vmatmul.mubr.bf16.gmra.mxu0 %v203
      %v325 = vpop.f32.mrf.mxu0
      %v326 = vadd.f32 0.0, %v325
      %v327 = vpop.f32.mrf.mxu0
      %v328 = vpop.f32.mrf.mxu0
      %v329 = vadd.f32 0.0, %v328
      %v330 = vpop.f32.mrf.mxu0
      %331 = vmatprep.mubr.bf16.mxu0 0
      %332 = vmatmul.mubr.bf16.gmra.mxu0 %v206
      %v333 = vpop.f32.mrf.mxu0
      %v334 = vadd.f32 0.0, %v333
      %v335 = vpop.f32.mrf.mxu0
      %v336 = vpop.f32.mrf.mxu0
      %v337 = vadd.f32 0.0, %v336
      %v338 = vpop.f32.mrf.mxu0
      %339 = vmatprep.mubr.bf16.mxu0 0
      %340 = vmatmul.mubr.bf16.gmra.mxu0 %v209
      %v341 = vpop.f32.mrf.mxu0
      %v342 = vadd.f32 0.0, %v341
      %v343 = vpop.f32.mrf.mxu0
      %v344 = vpop.f32.mrf.mxu0
      %v345 = vadd.f32 0.0, %v344
      %v346 = vpop.f32.mrf.mxu0
      %347 = vmatprep.mubr.bf16.mxu0 0
      %348 = vmatmul.mubr.bf16.gmra.mxu0 %v212
      %v349 = vpop.f32.mrf.mxu0
      %v350 = vadd.f32 0.0, %v349
      %v351 = vpop.f32.mrf.mxu0
      %v352 = vpop.f32.mrf.mxu0
      %v353 = vadd.f32 0.0, %v352
      %v354 = vpop.f32.mrf.mxu0
      %355 = vdwg.mxu0
      %v360 = vunpack.c.l.b16 %v175
      %v361 = vunpack.c.l.b16 %v176
      %v362 = vunpack.c.l.b16 %v177
      %v363 = vunpack.c.l.b16 %v178
      %v364 = vpack.c.b16 %v361, %v360
      %v365 = vpack.c.b16 %v363, %v362
      %368 = vmatprep.subr.bf16.mxu0 0
      %369 = vmatpush1.bf16.msra.mxu0 0
      %370 = vmatprep.subr.bf16.mxu0 0
      %371 = vmatpush1.bf16.msra.mxu0 0
      %372 = vmatprep.subr.bf16.mxu0 0
      %373 = vmatpush1.bf16.msra.mxu0 0
      %374 = vmatprep.subr.bf16.mxu0 0
      %375 = vmatpush1.bf16.msra.mxu0 0
      %376 = vmatprep.subr.bf16.mxu0 0
      %377 = vmatpush1.bf16.msra.mxu0 0
      %378 = vmatprep.subr.bf16.mxu0 0
      %379 = vmatpush1.bf16.msra.mxu0 0
      %380 = vmatprep.subr.bf16.mxu0 0
      %381 = vmatpush1.bf16.msra.mxu0 %v365
      %382 = vmatprep.subr.bf16.mxu0 0
      %383 = vmatpush1.bf16.msra.mxu0 %v364
      %384 = vmatprep.subr.bf16.mxu0 0
      %385 = vmatpush2.bf16.msra.mxu0 0
      %386 = vmatprep.subr.bf16.mxu0 0
      %387 = vmatpush2.bf16.msra.mxu0 0
      %388 = vmatprep.subr.bf16.mxu0 0
      %389 = vmatpush2.bf16.msra.mxu0 0
      %390 = vmatprep.subr.bf16.mxu0 0
      %391 = vmatpush2.bf16.msra.mxu0 0
      %392 = vmatprep.subr.bf16.mxu0 0
      %393 = vmatpush2.bf16.msra.mxu0 0
      %394 = vmatprep.subr.bf16.mxu0 0
      %395 = vmatpush2.bf16.msra.mxu0 0
      %396 = vmatprep.subr.bf16.mxu0 0
      %397 = vmatpush2.bf16.msra.mxu0 0
      %398 = vmatprep.subr.bf16.mxu0 0
      %399 = vmatpush2.bf16.msra.mxu0 0
      %400 = vmatprep.mubr.bf16.mxu0 0
      %401 = vmatmul.mubr.bf16.gmra.mxu0 %v203
      %v402 = vpop.f32.mrf.mxu0
      %v403 = vadd.f32 0.0, %v402
      %v404 = vpop.f32.mrf.mxu0
      %v405 = vpop.f32.mrf.mxu0
      %v406 = vadd.f32 0.0, %v405
      %v407 = vpop.f32.mrf.mxu0
      %408 = vmatprep.mubr.bf16.mxu0 0
      %409 = vmatmul.mubr.bf16.gmra.mxu0 %v206
      %v410 = vpop.f32.mrf.mxu0
      %v411 = vadd.f32 0.0, %v410
      %v412 = vpop.f32.mrf.mxu0
      %v413 = vpop.f32.mrf.mxu0
      %v414 = vadd.f32 0.0, %v413
      %v415 = vpop.f32.mrf.mxu0
      %416 = vmatprep.mubr.bf16.mxu0 0
      %417 = vmatmul.mubr.bf16.gmra.mxu0 %v209
      %v418 = vpop.f32.mrf.mxu0
      %v419 = vadd.f32 0.0, %v418
      %v420 = vpop.f32.mrf.mxu0
      %v421 = vpop.f32.mrf.mxu0
      %v422 = vadd.f32 0.0, %v421
      %v423 = vpop.f32.mrf.mxu0
      %424 = vmatprep.mubr.bf16.mxu0 0
      %425 = vmatmul.mubr.bf16.gmra.mxu0 %v212
      %v426 = vpop.f32.mrf.mxu0
      %v427 = vadd.f32 0.0, %v426
      %v428 = vpop.f32.mrf.mxu0
      %v429 = vpop.f32.mrf.mxu0
      %v430 = vadd.f32 0.0, %v429
      %v431 = vpop.f32.mrf.mxu0
      %432 = vdwg.mxu0
      %v433 = vpack.c.bf16 %v249, %v249
      %v434 = vpack.c.bf16 %v252, %v252
      %v435 = vpack.c.bf16 %v257, %v257
      %v436 = vpack.c.bf16 %v260, %v260
      %v437 = vpack.c.bf16 %v265, %v265
      %v438 = vpack.c.bf16 %v268, %v268
      %v439 = vpack.c.bf16 %v273, %v273
      %v440 = vpack.c.bf16 %v276, %v276
      %v441 = vpack.c.bf16 %v326, %v326
      %v442 = vpack.c.bf16 %v329, %v329
      %v443 = vpack.c.bf16 %v334, %v334
      %v444 = vpack.c.bf16 %v337, %v337
      %v445 = vpack.c.bf16 %v342, %v342
      %v446 = vpack.c.bf16 %v345, %v345
      %v447 = vpack.c.bf16 %v350, %v350
      %v448 = vpack.c.bf16 %v353, %v353
      %v449 = vpack.c.bf16 %v403, %v403
      %v450 = vpack.c.bf16 %v406, %v406
      %v451 = vpack.c.bf16 %v411, %v411
      %v452 = vpack.c.bf16 %v414, %v414
      %v453 = vpack.c.bf16 %v419, %v419
      %v454 = vpack.c.bf16 %v422, %v422
      %v455 = vpack.c.bf16 %v427, %v427
      %v456 = vpack.c.bf16 %v430, %v430
      %vm457 = vcmask 64512
      %v459 = vsel %vm457, %v433, 0
      %v462 = vsel %vm457, %v441, 0
      %464 = vmatprep.subr.bf16.mxu0 0
      %465 = vmatpush1.bf16.xpose.msra.mxu0 0
      %466 = vmatprep.subr.bf16.mxu0 0
      %467 = vmatpush1.bf16.xpose.msra.mxu0 0
      %468 = vmatprep.subr.bf16.mxu0 0
      %469 = vmatpush1.bf16.xpose.msra.mxu0 0
      %470 = vmatprep.subr.bf16.mxu0 0
      %471 = vmatpush1.bf16.xpose.msra.mxu0 0
      %472 = vmatprep.subr.bf16.mxu0 0
      %473 = vmatpush1.bf16.xpose.msra.mxu0 0
      %474 = vmatprep.subr.bf16.mxu0 0
      %475 = vmatpush1.bf16.xpose.msra.mxu0 0
      %476 = vmatprep.subr.bf16.mxu0 0
      %477 = vmatpush1.bf16.xpose.msra.mxu0 0
      %478 = vmatprep.subr.bf16.mxu0 0
      %479 = vmatpush1.bf16.xpose.msra.mxu0 %v462
      %480 = vmatprep.subr.bf16.mxu0 0
      %481 = vmatpush2.bf16.xpose.msra.mxu0 0
      %482 = vmatprep.subr.bf16.mxu0 0
      %483 = vmatpush2.bf16.xpose.msra.mxu0 0
      %484 = vmatprep.subr.bf16.mxu0 0
      %485 = vmatpush2.bf16.xpose.msra.mxu0 0
      %486 = vmatprep.subr.bf16.mxu0 0
      %487 = vmatpush2.bf16.xpose.msra.mxu0 0
      %488 = vmatprep.subr.bf16.mxu0 0
      %489 = vmatpush2.bf16.xpose.msra.mxu0 0
      %490 = vmatprep.subr.bf16.mxu0 0
      %491 = vmatpush2.bf16.xpose.msra.mxu0 0
      %492 = vmatprep.subr.bf16.mxu0 0
      %493 = vmatpush2.bf16.xpose.msra.mxu0 0
      %494 = vmatprep.subr.bf16.mxu0 0
      %495 = vmatpush2.bf16.xpose.msra.mxu0 0
      %496 = vmatprep.mubr.bf16.mxu0 0
      %497 = vmatmul.mubr.bf16.gmra.mxu0 %v459
      %v498 = vpop.f32.mrf.mxu0
      %v499 = vadd.f32 0.0, %v498
      %v500 = vpop.f32.mrf.mxu0
      %v501 = vpop.f32.mrf.mxu0
      %v502 = vpop.f32.mrf.mxu0
      %503 = vdwg.mxu0
      %v505 = vsel %vm457, %v434, 0
      %v508 = vsel %vm457, %v442, 0
      %510 = vmatprep.subr.bf16.mxu0 0
      %511 = vmatpush1.bf16.xpose.msra.mxu0 0
      %512 = vmatprep.subr.bf16.mxu0 0
      %513 = vmatpush1.bf16.xpose.msra.mxu0 0
      %514 = vmatprep.subr.bf16.mxu0 0
      %515 = vmatpush1.bf16.xpose.msra.mxu0 0
      %516 = vmatprep.subr.bf16.mxu0 0
      %517 = vmatpush1.bf16.xpose.msra.mxu0 0
      %518 = vmatprep.subr.bf16.mxu0 0
      %519 = vmatpush1.bf16.xpose.msra.mxu0 0
      %520 = vmatprep.subr.bf16.mxu0 0
      %521 = vmatpush1.bf16.xpose.msra.mxu0 0
      %522 = vmatprep.subr.bf16.mxu0 0
      %523 = vmatpush1.bf16.xpose.msra.mxu0 0
      %524 = vmatprep.subr.bf16.mxu0 0
      %525 = vmatpush1.bf16.xpose.msra.mxu0 %v508
      %526 = vmatprep.subr.bf16.mxu0 0
      %527 = vmatpush2.bf16.xpose.msra.mxu0 0
      %528 = vmatprep.subr.bf16.mxu0 0
      %529 = vmatpush2.bf16.xpose.msra.mxu0 0
      %530 = vmatprep.subr.bf16.mxu0 0
      %531 = vmatpush2.bf16.xpose.msra.mxu0 0
      %532 = vmatprep.subr.bf16.mxu0 0
      %533 = vmatpush2.bf16.xpose.msra.mxu0 0
      %534 = vmatprep.subr.bf16.mxu0 0
      %535 = vmatpush2.bf16.xpose.msra.mxu0 0
      %536 = vmatprep.subr.bf16.mxu0 0
      %537 = vmatpush2.bf16.xpose.msra.mxu0 0
      %538 = vmatprep.subr.bf16.mxu0 0
      %539 = vmatpush2.bf16.xpose.msra.mxu0 0
      %540 = vmatprep.subr.bf16.mxu0 0
      %541 = vmatpush2.bf16.xpose.msra.mxu0 0
      %542 = vmatprep.mubr.bf16.mxu0 0
      %543 = vmatmul.mubr.bf16.gmra.mxu0 %v505
      %v544 = vpop.f32.mrf.mxu0
      %v545 = vadd.f32 0.0, %v544
      %v546 = vpop.f32.mrf.mxu0
      %v547 = vpop.f32.mrf.mxu0
      %v548 = vpop.f32.mrf.mxu0
      %549 = vdwg.mxu0
      %v551 = vsel %vm457, %v435, 0
      %v554 = vsel %vm457, %v443, 0
      %556 = vmatprep.subr.bf16.mxu0 0
      %557 = vmatpush1.bf16.xpose.msra.mxu0 0
      %558 = vmatprep.subr.bf16.mxu0 0
      %559 = vmatpush1.bf16.xpose.msra.mxu0 0
      %560 = vmatprep.subr.bf16.mxu0 0
      %561 = vmatpush1.bf16.xpose.msra.mxu0 0
      %562 = vmatprep.subr.bf16.mxu0 0
      %563 = vmatpush1.bf16.xpose.msra.mxu0 0
      %564 = vmatprep.subr.bf16.mxu0 0
      %565 = vmatpush1.bf16.xpose.msra.mxu0 0
      %566 = vmatprep.subr.bf16.mxu0 0
      %567 = vmatpush1.bf16.xpose.msra.mxu0 0
      %568 = vmatprep.subr.bf16.mxu0 0
      %569 = vmatpush1.bf16.xpose.msra.mxu0 0
      %570 = vmatprep.subr.bf16.mxu0 0
      %571 = vmatpush1.bf16.xpose.msra.mxu0 %v554
      %572 = vmatprep.subr.bf16.mxu0 0
      %573 = vmatpush2.bf16.xpose.msra.mxu0 0
      %574 = vmatprep.subr.bf16.mxu0 0
      %575 = vmatpush2.bf16.xpose.msra.mxu0 0
      %576 = vmatprep.subr.bf16.mxu0 0
      %577 = vmatpush2.bf16.xpose.msra.mxu0 0
      %578 = vmatprep.subr.bf16.mxu0 0
      %579 = vmatpush2.bf16.xpose.msra.mxu0 0
      %580 = vmatprep.subr.bf16.mxu0 0
      %581 = vmatpush2.bf16.xpose.msra.mxu0 0
      %582 = vmatprep.subr.bf16.mxu0 0
      %583 = vmatpush2.bf16.xpose.msra.mxu0 0
      %584 = vmatprep.subr.bf16.mxu0 0
      %585 = vmatpush2.bf16.xpose.msra.mxu0 0
      %586 = vmatprep.subr.bf16.mxu0 0
      %587 = vmatpush2.bf16.xpose.msra.mxu0 0
      %588 = vmatprep.mubr.bf16.mxu0 0
      %589 = vmatmul.mubr.bf16.gmra.mxu0 %v551
      %v590 = vpop.f32.mrf.mxu0
      %v591 = vadd.f32 0.0, %v590
      %v592 = vpop.f32.mrf.mxu0
      %v593 = vpop.f32.mrf.mxu0
      %v594 = vpop.f32.mrf.mxu0
      %595 = vdwg.mxu0
      %v597 = vsel %vm457, %v436, 0
      %v600 = vsel %vm457, %v444, 0
      %602 = vmatprep.subr.bf16.mxu0 0
      %603 = vmatpush1.bf16.xpose.msra.mxu0 0
      %604 = vmatprep.subr.bf16.mxu0 0
      %605 = vmatpush1.bf16.xpose.msra.mxu0 0
      %606 = vmatprep.subr.bf16.mxu0 0
      %607 = vmatpush1.bf16.xpose.msra.mxu0 0
      %608 = vmatprep.subr.bf16.mxu0 0
      %609 = vmatpush1.bf16.xpose.msra.mxu0 0
      %610 = vmatprep.subr.bf16.mxu0 0
      %611 = vmatpush1.bf16.xpose.msra.mxu0 0
      %612 = vmatprep.subr.bf16.mxu0 0
      %613 = vmatpush1.bf16.xpose.msra.mxu0 0
      %614 = vmatprep.subr.bf16.mxu0 0
      %615 = vmatpush1.bf16.xpose.msra.mxu0 0
      %616 = vmatprep.subr.bf16.mxu0 0
      %617 = vmatpush1.bf16.xpose.msra.mxu0 %v600
      %618 = vmatprep.subr.bf16.mxu0 0
      %619 = vmatpush2.bf16.xpose.msra.mxu0 0
      %620 = vmatprep.subr.bf16.mxu0 0
      %621 = vmatpush2.bf16.xpose.msra.mxu0 0
      %622 = vmatprep.subr.bf16.mxu0 0
      %623 = vmatpush2.bf16.xpose.msra.mxu0 0
      %624 = vmatprep.subr.bf16.mxu0 0
      %625 = vmatpush2.bf16.xpose.msra.mxu0 0
      %626 = vmatprep.subr.bf16.mxu0 0
      %627 = vmatpush2.bf16.xpose.msra.mxu0 0
      %628 = vmatprep.subr.bf16.mxu0 0
      %629 = vmatpush2.bf16.xpose.msra.mxu0 0
      %630 = vmatprep.subr.bf16.mxu0 0
      %631 = vmatpush2.bf16.xpose.msra.mxu0 0
      %632 = vmatprep.subr.bf16.mxu0 0
      %633 = vmatpush2.bf16.xpose.msra.mxu0 0
      %634 = vmatprep.mubr.bf16.mxu0 0
      %635 = vmatmul.mubr.bf16.gmra.mxu0 %v597
      %v636 = vpop.f32.mrf.mxu0
      %v637 = vadd.f32 0.0, %v636
      %v638 = vpop.f32.mrf.mxu0
      %v639 = vpop.f32.mrf.mxu0
      %v640 = vpop.f32.mrf.mxu0
      %641 = vdwg.mxu0
      %v643 = vsel %vm457, %v437, 0
      %v646 = vsel %vm457, %v445, 0
      %648 = vmatprep.subr.bf16.mxu0 0
      %649 = vmatpush1.bf16.xpose.msra.mxu0 0
      %650 = vmatprep.subr.bf16.mxu0 0
      %651 = vmatpush1.bf16.xpose.msra.mxu0 0
      %652 = vmatprep.subr.bf16.mxu0 0
      %653 = vmatpush1.bf16.xpose.msra.mxu0 0
      %654 = vmatprep.subr.bf16.mxu0 0
      %655 = vmatpush1.bf16.xpose.msra.mxu0 0
      %656 = vmatprep.subr.bf16.mxu0 0
      %657 = vmatpush1.bf16.xpose.msra.mxu0 0
      %658 = vmatprep.subr.bf16.mxu0 0
      %659 = vmatpush1.bf16.xpose.msra.mxu0 0
      %660 = vmatprep.subr.bf16.mxu0 0
      %661 = vmatpush1.bf16.xpose.msra.mxu0 0
      %662 = vmatprep.subr.bf16.mxu0 0
      %663 = vmatpush1.bf16.xpose.msra.mxu0 %v646
      %664 = vmatprep.subr.bf16.mxu0 0
      %665 = vmatpush2.bf16.xpose.msra.mxu0 0
      %666 = vmatprep.subr.bf16.mxu0 0
      %667 = vmatpush2.bf16.xpose.msra.mxu0 0
      %668 = vmatprep.subr.bf16.mxu0 0
      %669 = vmatpush2.bf16.xpose.msra.mxu0 0
      %670 = vmatprep.subr.bf16.mxu0 0
      %671 = vmatpush2.bf16.xpose.msra.mxu0 0
      %672 = vmatprep.subr.bf16.mxu0 0
      %673 = vmatpush2.bf16.xpose.msra.mxu0 0
      %674 = vmatprep.subr.bf16.mxu0 0
      %675 = vmatpush2.bf16.xpose.msra.mxu0 0
      %676 = vmatprep.subr.bf16.mxu0 0
      %677 = vmatpush2.bf16.xpose.msra.mxu0 0
      %678 = vmatprep.subr.bf16.mxu0 0
      %679 = vmatpush2.bf16.xpose.msra.mxu0 0
      %680 = vmatprep.mubr.bf16.mxu0 0
      %681 = vmatmul.mubr.bf16.gmra.mxu0 %v643
      %v682 = vpop.f32.mrf.mxu0
      %v683 = vadd.f32 0.0, %v682
      %v684 = vpop.f32.mrf.mxu0
      %v685 = vpop.f32.mrf.mxu0
      %v686 = vpop.f32.mrf.mxu0
      %687 = vdwg.mxu0
      %v689 = vsel %vm457, %v438, 0
      %v692 = vsel %vm457, %v446, 0
      %694 = vmatprep.subr.bf16.mxu0 0
      %695 = vmatpush1.bf16.xpose.msra.mxu0 0
      %696 = vmatprep.subr.bf16.mxu0 0
      %697 = vmatpush1.bf16.xpose.msra.mxu0 0
      %698 = vmatprep.subr.bf16.mxu0 0
      %699 = vmatpush1.bf16.xpose.msra.mxu0 0
      %700 = vmatprep.subr.bf16.mxu0 0
      %701 = vmatpush1.bf16.xpose.msra.mxu0 0
      %702 = vmatprep.subr.bf16.mxu0 0
      %703 = vmatpush1.bf16.xpose.msra.mxu0 0
      %704 = vmatprep.subr.bf16.mxu0 0
      %705 = vmatpush1.bf16.xpose.msra.mxu0 0
      %706 = vmatprep.subr.bf16.mxu0 0
      %707 = vmatpush1.bf16.xpose.msra.mxu0 0
      %708 = vmatprep.subr.bf16.mxu0 0
      %709 = vmatpush1.bf16.xpose.msra.mxu0 %v692
      %710 = vmatprep.subr.bf16.mxu0 0
      %711 = vmatpush2.bf16.xpose.msra.mxu0 0
      %712 = vmatprep.subr.bf16.mxu0 0
      %713 = vmatpush2.bf16.xpose.msra.mxu0 0
      %714 = vmatprep.subr.bf16.mxu0 0
      %715 = vmatpush2.bf16.xpose.msra.mxu0 0
      %716 = vmatprep.subr.bf16.mxu0 0
      %717 = vmatpush2.bf16.xpose.msra.mxu0 0
      %718 = vmatprep.subr.bf16.mxu0 0
      %719 = vmatpush2.bf16.xpose.msra.mxu0 0
      %720 = vmatprep.subr.bf16.mxu0 0
      %721 = vmatpush2.bf16.xpose.msra.mxu0 0
      %722 = vmatprep.subr.bf16.mxu0 0
      %723 = vmatpush2.bf16.xpose.msra.mxu0 0
      %724 = vmatprep.subr.bf16.mxu0 0
      %725 = vmatpush2.bf16.xpose.msra.mxu0 0
      %726 = vmatprep.mubr.bf16.mxu0 0
      %727 = vmatmul.mubr.bf16.gmra.mxu0 %v689
      %v728 = vpop.f32.mrf.mxu0
      %v729 = vadd.f32 0.0, %v728
      %v730 = vpop.f32.mrf.mxu0
      %v731 = vpop.f32.mrf.mxu0
      %v732 = vpop.f32.mrf.mxu0
      %733 = vdwg.mxu0
      %v735 = vsel %vm457, %v439, 0
      %v738 = vsel %vm457, %v447, 0
      %740 = vmatprep.subr.bf16.mxu0 0
      %741 = vmatpush1.bf16.xpose.msra.mxu0 0
      %742 = vmatprep.subr.bf16.mxu0 0
      %743 = vmatpush1.bf16.xpose.msra.mxu0 0
      %744 = vmatprep.subr.bf16.mxu0 0
      %745 = vmatpush1.bf16.xpose.msra.mxu0 0
      %746 = vmatprep.subr.bf16.mxu0 0
      %747 = vmatpush1.bf16.xpose.msra.mxu0 0
      %748 = vmatprep.subr.bf16.mxu0 0
      %749 = vmatpush1.bf16.xpose.msra.mxu0 0
      %750 = vmatprep.subr.bf16.mxu0 0
      %751 = vmatpush1.bf16.xpose.msra.mxu0 0
      %752 = vmatprep.subr.bf16.mxu0 0
      %753 = vmatpush1.bf16.xpose.msra.mxu0 0
      %754 = vmatprep.subr.bf16.mxu0 0
      %755 = vmatpush1.bf16.xpose.msra.mxu0 %v738
      %756 = vmatprep.subr.bf16.mxu0 0
      %757 = vmatpush2.bf16.xpose.msra.mxu0 0
      %758 = vmatprep.subr.bf16.mxu0 0
      %759 = vmatpush2.bf16.xpose.msra.mxu0 0
      %760 = vmatprep.subr.bf16.mxu0 0
      %761 = vmatpush2.bf16.xpose.msra.mxu0 0
      %762 = vmatprep.subr.bf16.mxu0 0
      %763 = vmatpush2.bf16.xpose.msra.mxu0 0
      %764 = vmatprep.subr.bf16.mxu0 0
      %765 = vmatpush2.bf16.xpose.msra.mxu0 0
      %766 = vmatprep.subr.bf16.mxu0 0
      %767 = vmatpush2.bf16.xpose.msra.mxu0 0
      %768 = vmatprep.subr.bf16.mxu0 0
      %769 = vmatpush2.bf16.xpose.msra.mxu0 0
      %770 = vmatprep.subr.bf16.mxu0 0
      %771 = vmatpush2.bf16.xpose.msra.mxu0 0
      %772 = vmatprep.mubr.bf16.mxu0 0
      %773 = vmatmul.mubr.bf16.gmra.mxu0 %v735
      %v774 = vpop.f32.mrf.mxu0
      %v775 = vadd.f32 0.0, %v774
      %v776 = vpop.f32.mrf.mxu0
      %v777 = vpop.f32.mrf.mxu0
      %v778 = vpop.f32.mrf.mxu0
      %779 = vdwg.mxu0
      %v781 = vsel %vm457, %v440, 0
      %v784 = vsel %vm457, %v448, 0
      %786 = vmatprep.subr.bf16.mxu0 0
      %787 = vmatpush1.bf16.xpose.msra.mxu0 0
      %788 = vmatprep.subr.bf16.mxu0 0
      %789 = vmatpush1.bf16.xpose.msra.mxu0 0
      %790 = vmatprep.subr.bf16.mxu0 0
      %791 = vmatpush1.bf16.xpose.msra.mxu0 0
      %792 = vmatprep.subr.bf16.mxu0 0
      %793 = vmatpush1.bf16.xpose.msra.mxu0 0
      %794 = vmatprep.subr.bf16.mxu0 0
      %795 = vmatpush1.bf16.xpose.msra.mxu0 0
      %796 = vmatprep.subr.bf16.mxu0 0
      %797 = vmatpush1.bf16.xpose.msra.mxu0 0
      %798 = vmatprep.subr.bf16.mxu0 0
      %799 = vmatpush1.bf16.xpose.msra.mxu0 0
      %800 = vmatprep.subr.bf16.mxu0 0
      %801 = vmatpush1.bf16.xpose.msra.mxu0 %v784
      %802 = vmatprep.subr.bf16.mxu0 0
      %803 = vmatpush2.bf16.xpose.msra.mxu0 0
      %804 = vmatprep.subr.bf16.mxu0 0
      %805 = vmatpush2.bf16.xpose.msra.mxu0 0
      %806 = vmatprep.subr.bf16.mxu0 0
      %807 = vmatpush2.bf16.xpose.msra.mxu0 0
      %808 = vmatprep.subr.bf16.mxu0 0
      %809 = vmatpush2.bf16.xpose.msra.mxu0 0
      %810 = vmatprep.subr.bf16.mxu0 0
      %811 = vmatpush2.bf16.xpose.msra.mxu0 0
      %812 = vmatprep.subr.bf16.mxu0 0
      %813 = vmatpush2.bf16.xpose.msra.mxu0 0
      %814 = vmatprep.subr.bf16.mxu0 0
      %815 = vmatpush2.bf16.xpose.msra.mxu0 0
      %816 = vmatprep.subr.bf16.mxu0 0
      %817 = vmatpush2.bf16.xpose.msra.mxu0 0
      %818 = vmatprep.mubr.bf16.mxu0 0
      %819 = vmatmul.mubr.bf16.gmra.mxu0 %v781
      %v820 = vpop.f32.mrf.mxu0
      %v821 = vadd.f32 0.0, %v820
      %v822 = vpop.f32.mrf.mxu0
      %v823 = vpop.f32.mrf.mxu0
      %v824 = vpop.f32.mrf.mxu0
      %825 = vdwg.mxu0
      %v826 = vsel %vm145, 1, 0
      %vm827 = vcmp.eq.s32.totalorder %v826, 1
      %v828 = vsel %vm827, %v499, -1e+30
      %v829 = vsel %vm827, %v545, -1e+30
      %v830 = vsel %vm827, %v591, -1e+30
      %v831 = vsel %vm827, %v637, -1e+30
      %v832 = vsel %vm827, %v683, -1e+30
      %v833 = vsel %vm827, %v729, -1e+30
      %v834 = vsel %vm827, %v775, -1e+30
      %v835 = vsel %vm827, %v821, -1e+30
      %v836 = vsel %vm457, %v828, -inf
      %837 = vmax.xlane.f32.xlu0 %v836
      %v838 = vpop.xlane.xlu0 %837
      %v839 = vsel %vm457, %v829, -inf
      %840 = vmax.xlane.f32.xlu0 %v839
      %v841 = vpop.xlane.xlu0 %840
      %v842 = vsel %vm457, %v830, -inf
      %843 = vmax.xlane.f32.xlu0 %v842
      %v844 = vpop.xlane.xlu0 %843
      %v845 = vsel %vm457, %v831, -inf
      %846 = vmax.xlane.f32.xlu0 %v845
      %v847 = vpop.xlane.xlu0 %846
      %v848 = vsel %vm457, %v832, -inf
      %849 = vmax.xlane.f32.xlu0 %v848
      %v850 = vpop.xlane.xlu0 %849
      %v851 = vsel %vm457, %v833, -inf
      %852 = vmax.xlane.f32.xlu0 %v851
      %v853 = vpop.xlane.xlu0 %852
      %v854 = vsel %vm457, %v834, -inf
      %855 = vmax.xlane.f32.xlu0 %v854
      %v856 = vpop.xlane.xlu0 %855
      %v857 = vsel %vm457, %v835, -inf
      %858 = vmax.xlane.f32.xlu0 %v857
      %v859 = vpop.xlane.xlu0 %858
      %v860 = vsub.f32 %v828, %v838
      %v861 = vsub.f32 %v829, %v841
      %v862 = vsub.f32 %v830, %v844
      %v863 = vsub.f32 %v831, %v847
      %v864 = vsub.f32 %v832, %v850
      %v865 = vsub.f32 %v833, %v853
      %v866 = vsub.f32 %v834, %v856
      %v867 = vsub.f32 %v835, %v859
      %v868 = vmul.f32 %v860, 1.442695
      %v869 = vpow.pop %v868
      %v870 = vmul.f32 %v861, 1.442695
      %v871 = vpow.pop %v870
      %v872 = vmul.f32 %v862, 1.442695
      %v873 = vpow.pop %v872
      %v874 = vmul.f32 %v863, 1.442695
      %v875 = vpow.pop %v874
      %v876 = vmul.f32 %v864, 1.442695
      %v877 = vpow.pop %v876
      %v878 = vmul.f32 %v865, 1.442695
      %v879 = vpow.pop %v878
      %v880 = vmul.f32 %v866, 1.442695
      %v881 = vpow.pop %v880
      %v882 = vmul.f32 %v867, 1.442695
      %v883 = vpow.pop %v882
      %v884 = vsel %vm457, %v869, 0.0
      %885 = vadd.xlane.f32.xlu0 %v884
      %v886 = vpop.xlane.xlu0 %885
      %v887 = vsel %vm457, %v871, 0.0
      %888 = vadd.xlane.f32.xlu0 %v887
      %v889 = vpop.xlane.xlu0 %888
      %v890 = vsel %vm457, %v873, 0.0
      %891 = vadd.xlane.f32.xlu0 %v890
      %v892 = vpop.xlane.xlu0 %891
      %v893 = vsel %vm457, %v875, 0.0
      %894 = vadd.xlane.f32.xlu0 %v893
      %v895 = vpop.xlane.xlu0 %894
      %v896 = vsel %vm457, %v877, 0.0
      %897 = vadd.xlane.f32.xlu0 %v896
      %v898 = vpop.xlane.xlu0 %897
      %v899 = vsel %vm457, %v879, 0.0
      %900 = vadd.xlane.f32.xlu0 %v899
      %v901 = vpop.xlane.xlu0 %900
      %v902 = vsel %vm457, %v881, 0.0
      %903 = vadd.xlane.f32.xlu0 %v902
      %v904 = vpop.xlane.xlu0 %903
      %v905 = vsel %vm457, %v883, 0.0
      %906 = vadd.xlane.f32.xlu0 %v905
      %v907 = vpop.xlane.xlu0 %906
      %v908 = vrcp.pop %v886
      %v909 = vrcp.pop %v889
      %v910 = vrcp.pop %v892
      %v911 = vrcp.pop %v895
      %v912 = vrcp.pop %v898
      %v913 = vrcp.pop %v901
      %v914 = vrcp.pop %v904
      %v915 = vrcp.pop %v907
      %v916 = vmul.f32 %v869, %v908
      %v917 = vmul.f32 %v871, %v909
      %v918 = vmul.f32 %v873, %v910
      %v919 = vmul.f32 %v875, %v911
      %v920 = vmul.f32 %v877, %v912
      %v921 = vmul.f32 %v879, %v913
      %v922 = vmul.f32 %v881, %v914
      %v923 = vmul.f32 %v883, %v915
      %v924 = vpack.c.bf16 %v916, %v916
      %v925 = vpack.c.bf16 %v917, %v917
      %v926 = vpack.c.bf16 %v918, %v918
      %v927 = vpack.c.bf16 %v919, %v919
      %v928 = vpack.c.bf16 %v920, %v920
      %v929 = vpack.c.bf16 %v921, %v921
      %v930 = vpack.c.bf16 %v922, %v922
      %v931 = vpack.c.bf16 %v923, %v923
      %v933 = vsel %vm457, %v924, 0
      %vm935 = vcmask 1043456
      %v937 = vsel %vm935, %v449, 0
      %939 = vmatprep.subr.bf16.mxu0 0
      %940 = vmatpush1.bf16.msra.mxu0 0
      %941 = vmatprep.subr.bf16.mxu0 0
      %942 = vmatpush1.bf16.msra.mxu0 0
      %943 = vmatprep.subr.bf16.mxu0 0
      %944 = vmatpush1.bf16.msra.mxu0 0
      %945 = vmatprep.subr.bf16.mxu0 0
      %946 = vmatpush1.bf16.msra.mxu0 0
      %947 = vmatprep.subr.bf16.mxu0 0
      %948 = vmatpush1.bf16.msra.mxu0 0
      %949 = vmatprep.subr.bf16.mxu0 0
      %950 = vmatpush1.bf16.msra.mxu0 0
      %951 = vmatprep.subr.bf16.mxu0 0
      %952 = vmatpush1.bf16.msra.mxu0 0
      %953 = vmatprep.subr.bf16.mxu0 0
      %954 = vmatpush1.bf16.msra.mxu0 %v937
      %955 = vmatprep.subr.bf16.mxu0 0
      %956 = vmatpush2.bf16.msra.mxu0 0
      %957 = vmatprep.subr.bf16.mxu0 0
      %958 = vmatpush2.bf16.msra.mxu0 0
      %959 = vmatprep.subr.bf16.mxu0 0
      %960 = vmatpush2.bf16.msra.mxu0 0
      %961 = vmatprep.subr.bf16.mxu0 0
      %962 = vmatpush2.bf16.msra.mxu0 0
      %963 = vmatprep.subr.bf16.mxu0 0
      %964 = vmatpush2.bf16.msra.mxu0 0
      %965 = vmatprep.subr.bf16.mxu0 0
      %966 = vmatpush2.bf16.msra.mxu0 0
      %967 = vmatprep.subr.bf16.mxu0 0
      %968 = vmatpush2.bf16.msra.mxu0 0
      %969 = vmatprep.subr.bf16.mxu0 0
      %970 = vmatpush2.bf16.msra.mxu0 0
      %971 = vmatprep.mubr.bf16.mxu0 0
      %972 = vmatmul.mubr.bf16.gmra.mxu0 %v933
      %v973 = vpop.f32.mrf.mxu0
      %v974 = vadd.f32 0.0, %v973
      %v975 = vpop.f32.mrf.mxu0
      %v976 = vpop.f32.mrf.mxu0
      %v977 = vpop.f32.mrf.mxu0
      %978 = vdwg.mxu0
      %v980 = vsel %vm457, %v925, 0
      %v983 = vsel %vm935, %v450, 0
      %985 = vmatprep.subr.bf16.mxu0 0
      %986 = vmatpush1.bf16.msra.mxu0 0
      %987 = vmatprep.subr.bf16.mxu0 0
      %988 = vmatpush1.bf16.msra.mxu0 0
      %989 = vmatprep.subr.bf16.mxu0 0
      %990 = vmatpush1.bf16.msra.mxu0 0
      %991 = vmatprep.subr.bf16.mxu0 0
      %992 = vmatpush1.bf16.msra.mxu0 0
      %993 = vmatprep.subr.bf16.mxu0 0
      %994 = vmatpush1.bf16.msra.mxu0 0
      %995 = vmatprep.subr.bf16.mxu0 0
      %996 = vmatpush1.bf16.msra.mxu0 0
      %997 = vmatprep.subr.bf16.mxu0 0
      %998 = vmatpush1.bf16.msra.mxu0 0
      %999 = vmatprep.subr.bf16.mxu0 0
      %1000 = vmatpush1.bf16.msra.mxu0 %v983
      %1001 = vmatprep.subr.bf16.mxu0 0
      %1002 = vmatpush2.bf16.msra.mxu0 0
      %1003 = vmatprep.subr.bf16.mxu0 0
      %1004 = vmatpush2.bf16.msra.mxu0 0
      %1005 = vmatprep.subr.bf16.mxu0 0
      %1006 = vmatpush2.bf16.msra.mxu0 0
      %1007 = vmatprep.subr.bf16.mxu0 0
      %1008 = vmatpush2.bf16.msra.mxu0 0
      %1009 = vmatprep.subr.bf16.mxu0 0
      %1010 = vmatpush2.bf16.msra.mxu0 0
      %1011 = vmatprep.subr.bf16.mxu0 0
      %1012 = vmatpush2.bf16.msra.mxu0 0
      %1013 = vmatprep.subr.bf16.mxu0 0
      %1014 = vmatpush2.bf16.msra.mxu0 0
      %1015 = vmatprep.subr.bf16.mxu0 0
      %1016 = vmatpush2.bf16.msra.mxu0 0
      %1017 = vmatprep.mubr.bf16.mxu0 0
      %1018 = vmatmul.mubr.bf16.gmra.mxu0 %v980
      %v1019 = vpop.f32.mrf.mxu0
      %v1020 = vadd.f32 0.0, %v1019
      %v1021 = vpop.f32.mrf.mxu0
      %v1022 = vpop.f32.mrf.mxu0
      %v1023 = vpop.f32.mrf.mxu0
      %1024 = vdwg.mxu0
      %v1026 = vsel %vm457, %v926, 0
      %v1029 = vsel %vm935, %v451, 0
      %1031 = vmatprep.subr.bf16.mxu0 0
      %1032 = vmatpush1.bf16.msra.mxu0 0
      %1033 = vmatprep.subr.bf16.mxu0 0
      %1034 = vmatpush1.bf16.msra.mxu0 0
      %1035 = vmatprep.subr.bf16.mxu0 0
      %1036 = vmatpush1.bf16.msra.mxu0 0
      %1037 = vmatprep.subr.bf16.mxu0 0
      %1038 = vmatpush1.bf16.msra.mxu0 0
      %1039 = vmatprep.subr.bf16.mxu0 0
      %1040 = vmatpush1.bf16.msra.mxu0 0
      %1041 = vmatprep.subr.bf16.mxu0 0
      %1042 = vmatpush1.bf16.msra.mxu0 0
      %1043 = vmatprep.subr.bf16.mxu0 0
      %1044 = vmatpush1.bf16.msra.mxu0 0
      %1045 = vmatprep.subr.bf16.mxu0 0
      %1046 = vmatpush1.bf16.msra.mxu0 %v1029
      %1047 = vmatprep.subr.bf16.mxu0 0
      %1048 = vmatpush2.bf16.msra.mxu0 0
      %1049 = vmatprep.subr.bf16.mxu0 0
      %1050 = vmatpush2.bf16.msra.mxu0 0
      %1051 = vmatprep.subr.bf16.mxu0 0
      %1052 = vmatpush2.bf16.msra.mxu0 0
      %1053 = vmatprep.subr.bf16.mxu0 0
      %1054 = vmatpush2.bf16.msra.mxu0 0
      %1055 = vmatprep.subr.bf16.mxu0 0
      %1056 = vmatpush2.bf16.msra.mxu0 0
      %1057 = vmatprep.subr.bf16.mxu0 0
      %1058 = vmatpush2.bf16.msra.mxu0 0
      %1059 = vmatprep.subr.bf16.mxu0 0
      %1060 = vmatpush2.bf16.msra.mxu0 0
      %1061 = vmatprep.subr.bf16.mxu0 0
      %1062 = vmatpush2.bf16.msra.mxu0 0
      %1063 = vmatprep.mubr.bf16.mxu0 0
      %1064 = vmatmul.mubr.bf16.gmra.mxu0 %v1026
      %v1065 = vpop.f32.mrf.mxu0
      %v1066 = vadd.f32 0.0, %v1065
      %v1067 = vpop.f32.mrf.mxu0
      %v1068 = vpop.f32.mrf.mxu0
      %v1069 = vpop.f32.mrf.mxu0
      %1070 = vdwg.mxu0
      %v1072 = vsel %vm457, %v927, 0
      %v1075 = vsel %vm935, %v452, 0
      %1077 = vmatprep.subr.bf16.mxu0 0
      %1078 = vmatpush1.bf16.msra.mxu0 0
      %1079 = vmatprep.subr.bf16.mxu0 0
      %1080 = vmatpush1.bf16.msra.mxu0 0
      %1081 = vmatprep.subr.bf16.mxu0 0
      %1082 = vmatpush1.bf16.msra.mxu0 0
      %1083 = vmatprep.subr.bf16.mxu0 0
      %1084 = vmatpush1.bf16.msra.mxu0 0
      %1085 = vmatprep.subr.bf16.mxu0 0
      %1086 = vmatpush1.bf16.msra.mxu0 0
      %1087 = vmatprep.subr.bf16.mxu0 0
      %1088 = vmatpush1.bf16.msra.mxu0 0
      %1089 = vmatprep.subr.bf16.mxu0 0
      %1090 = vmatpush1.bf16.msra.mxu0 0
      %1091 = vmatprep.subr.bf16.mxu0 0
      %1092 = vmatpush1.bf16.msra.mxu0 %v1075
      %1093 = vmatprep.subr.bf16.mxu0 0
      %1094 = vmatpush2.bf16.msra.mxu0 0
      %1095 = vmatprep.subr.bf16.mxu0 0
      %1096 = vmatpush2.bf16.msra.mxu0 0
      %1097 = vmatprep.subr.bf16.mxu0 0
      %1098 = vmatpush2.bf16.msra.mxu0 0
      %1099 = vmatprep.subr.bf16.mxu0 0
      %1100 = vmatpush2.bf16.msra.mxu0 0
      %1101 = vmatprep.subr.bf16.mxu0 0
      %1102 = vmatpush2.bf16.msra.mxu0 0
      %1103 = vmatprep.subr.bf16.mxu0 0
      %1104 = vmatpush2.bf16.msra.mxu0 0
      %1105 = vmatprep.subr.bf16.mxu0 0
      %1106 = vmatpush2.bf16.msra.mxu0 0
      %1107 = vmatprep.subr.bf16.mxu0 0
      %1108 = vmatpush2.bf16.msra.mxu0 0
      %1109 = vmatprep.mubr.bf16.mxu0 0
      %1110 = vmatmul.mubr.bf16.gmra.mxu0 %v1072
      %v1111 = vpop.f32.mrf.mxu0
      %v1112 = vadd.f32 0.0, %v1111
      %v1113 = vpop.f32.mrf.mxu0
      %v1114 = vpop.f32.mrf.mxu0
      %v1115 = vpop.f32.mrf.mxu0
      %1116 = vdwg.mxu0
      %v1118 = vsel %vm457, %v928, 0
      %v1121 = vsel %vm935, %v453, 0
      %1123 = vmatprep.subr.bf16.mxu0 0
      %1124 = vmatpush1.bf16.msra.mxu0 0
      %1125 = vmatprep.subr.bf16.mxu0 0
      %1126 = vmatpush1.bf16.msra.mxu0 0
      %1127 = vmatprep.subr.bf16.mxu0 0
      %1128 = vmatpush1.bf16.msra.mxu0 0
      %1129 = vmatprep.subr.bf16.mxu0 0
      %1130 = vmatpush1.bf16.msra.mxu0 0
      %1131 = vmatprep.subr.bf16.mxu0 0
      %1132 = vmatpush1.bf16.msra.mxu0 0
      %1133 = vmatprep.subr.bf16.mxu0 0
      %1134 = vmatpush1.bf16.msra.mxu0 0
      %1135 = vmatprep.subr.bf16.mxu0 0
      %1136 = vmatpush1.bf16.msra.mxu0 0
      %1137 = vmatprep.subr.bf16.mxu0 0
      %1138 = vmatpush1.bf16.msra.mxu0 %v1121
      %1139 = vmatprep.subr.bf16.mxu0 0
      %1140 = vmatpush2.bf16.msra.mxu0 0
      %1141 = vmatprep.subr.bf16.mxu0 0
      %1142 = vmatpush2.bf16.msra.mxu0 0
      %1143 = vmatprep.subr.bf16.mxu0 0
      %1144 = vmatpush2.bf16.msra.mxu0 0
      %1145 = vmatprep.subr.bf16.mxu0 0
      %1146 = vmatpush2.bf16.msra.mxu0 0
      %1147 = vmatprep.subr.bf16.mxu0 0
      %1148 = vmatpush2.bf16.msra.mxu0 0
      %1149 = vmatprep.subr.bf16.mxu0 0
      %1150 = vmatpush2.bf16.msra.mxu0 0
      %1151 = vmatprep.subr.bf16.mxu0 0
      %1152 = vmatpush2.bf16.msra.mxu0 0
      %1153 = vmatprep.subr.bf16.mxu0 0
      %1154 = vmatpush2.bf16.msra.mxu0 0
      %1155 = vmatprep.mubr.bf16.mxu0 0
      %1156 = vmatmul.mubr.bf16.gmra.mxu0 %v1118
      %v1157 = vpop.f32.mrf.mxu0
      %v1158 = vadd.f32 0.0, %v1157
      %v1159 = vpop.f32.mrf.mxu0
      %v1160 = vpop.f32.mrf.mxu0
      %v1161 = vpop.f32.mrf.mxu0
      %1162 = vdwg.mxu0
      %v1164 = vsel %vm457, %v929, 0
      %v1167 = vsel %vm935, %v454, 0
      %1169 = vmatprep.subr.bf16.mxu0 0
      %1170 = vmatpush1.bf16.msra.mxu0 0
      %1171 = vmatprep.subr.bf16.mxu0 0
      %1172 = vmatpush1.bf16.msra.mxu0 0
      %1173 = vmatprep.subr.bf16.mxu0 0
      %1174 = vmatpush1.bf16.msra.mxu0 0
      %1175 = vmatprep.subr.bf16.mxu0 0
      %1176 = vmatpush1.bf16.msra.mxu0 0
      %1177 = vmatprep.subr.bf16.mxu0 0
      %1178 = vmatpush1.bf16.msra.mxu0 0
      %1179 = vmatprep.subr.bf16.mxu0 0
      %1180 = vmatpush1.bf16.msra.mxu0 0
      %1181 = vmatprep.subr.bf16.mxu0 0
      %1182 = vmatpush1.bf16.msra.mxu0 0
      %1183 = vmatprep.subr.bf16.mxu0 0
      %1184 = vmatpush1.bf16.msra.mxu0 %v1167
      %1185 = vmatprep.subr.bf16.mxu0 0
      %1186 = vmatpush2.bf16.msra.mxu0 0
      %1187 = vmatprep.subr.bf16.mxu0 0
      %1188 = vmatpush2.bf16.msra.mxu0 0
      %1189 = vmatprep.subr.bf16.mxu0 0
      %1190 = vmatpush2.bf16.msra.mxu0 0
      %1191 = vmatprep.subr.bf16.mxu0 0
      %1192 = vmatpush2.bf16.msra.mxu0 0
      %1193 = vmatprep.subr.bf16.mxu0 0
      %1194 = vmatpush2.bf16.msra.mxu0 0
      %1195 = vmatprep.subr.bf16.mxu0 0
      %1196 = vmatpush2.bf16.msra.mxu0 0
      %1197 = vmatprep.subr.bf16.mxu0 0
      %1198 = vmatpush2.bf16.msra.mxu0 0
      %1199 = vmatprep.subr.bf16.mxu0 0
      %1200 = vmatpush2.bf16.msra.mxu0 0
      %1201 = vmatprep.mubr.bf16.mxu0 0
      %1202 = vmatmul.mubr.bf16.gmra.mxu0 %v1164
      %v1203 = vpop.f32.mrf.mxu0
      %v1204 = vadd.f32 0.0, %v1203
      %v1205 = vpop.f32.mrf.mxu0
      %v1206 = vpop.f32.mrf.mxu0
      %v1207 = vpop.f32.mrf.mxu0
      %1208 = vdwg.mxu0
      %v1210 = vsel %vm457, %v930, 0
      %v1213 = vsel %vm935, %v455, 0
      %1215 = vmatprep.subr.bf16.mxu0 0
      %1216 = vmatpush1.bf16.msra.mxu0 0
      %1217 = vmatprep.subr.bf16.mxu0 0
      %1218 = vmatpush1.bf16.msra.mxu0 0
      %1219 = vmatprep.subr.bf16.mxu0 0
      %1220 = vmatpush1.bf16.msra.mxu0 0
      %1221 = vmatprep.subr.bf16.mxu0 0
      %1222 = vmatpush1.bf16.msra.mxu0 0
      %1223 = vmatprep.subr.bf16.mxu0 0
      %1224 = vmatpush1.bf16.msra.mxu0 0
      %1225 = vmatprep.subr.bf16.mxu0 0
      %1226 = vmatpush1.bf16.msra.mxu0 0
      %1227 = vmatprep.subr.bf16.mxu0 0
      %1228 = vmatpush1.bf16.msra.mxu0 0
      %1229 = vmatprep.subr.bf16.mxu0 0
      %1230 = vmatpush1.bf16.msra.mxu0 %v1213
      %1231 = vmatprep.subr.bf16.mxu0 0
      %1232 = vmatpush2.bf16.msra.mxu0 0
      %1233 = vmatprep.subr.bf16.mxu0 0
      %1234 = vmatpush2.bf16.msra.mxu0 0
      %1235 = vmatprep.subr.bf16.mxu0 0
      %1236 = vmatpush2.bf16.msra.mxu0 0
      %1237 = vmatprep.subr.bf16.mxu0 0
      %1238 = vmatpush2.bf16.msra.mxu0 0
      %1239 = vmatprep.subr.bf16.mxu0 0
      %1240 = vmatpush2.bf16.msra.mxu0 0
      %1241 = vmatprep.subr.bf16.mxu0 0
      %1242 = vmatpush2.bf16.msra.mxu0 0
      %1243 = vmatprep.subr.bf16.mxu0 0
      %1244 = vmatpush2.bf16.msra.mxu0 0
      %1245 = vmatprep.subr.bf16.mxu0 0
      %1246 = vmatpush2.bf16.msra.mxu0 0
      %1247 = vmatprep.mubr.bf16.mxu0 0
      %1248 = vmatmul.mubr.bf16.gmra.mxu0 %v1210
      %v1249 = vpop.f32.mrf.mxu0
      %v1250 = vadd.f32 0.0, %v1249
      %v1251 = vpop.f32.mrf.mxu0
      %v1252 = vpop.f32.mrf.mxu0
      %v1253 = vpop.f32.mrf.mxu0
      %1254 = vdwg.mxu0
      %v1256 = vsel %vm457, %v931, 0
      %v1259 = vsel %vm935, %v456, 0
      %1261 = vmatprep.subr.bf16.mxu0 0
      %1262 = vmatpush1.bf16.msra.mxu0 0
      %1263 = vmatprep.subr.bf16.mxu0 0
      %1264 = vmatpush1.bf16.msra.mxu0 0
      %1265 = vmatprep.subr.bf16.mxu0 0
      %1266 = vmatpush1.bf16.msra.mxu0 0
      %1267 = vmatprep.subr.bf16.mxu0 0
      %1268 = vmatpush1.bf16.msra.mxu0 0
      %1269 = vmatprep.subr.bf16.mxu0 0
      %1270 = vmatpush1.bf16.msra.mxu0 0
      %1271 = vmatprep.subr.bf16.mxu0 0
      %1272 = vmatpush1.bf16.msra.mxu0 0
      %1273 = vmatprep.subr.bf16.mxu0 0
      %1274 = vmatpush1.bf16.msra.mxu0 0
      %1275 = vmatprep.subr.bf16.mxu0 0
      %1276 = vmatpush1.bf16.msra.mxu0 %v1259
      %1277 = vmatprep.subr.bf16.mxu0 0
      %1278 = vmatpush2.bf16.msra.mxu0 0
      %1279 = vmatprep.subr.bf16.mxu0 0
      %1280 = vmatpush2.bf16.msra.mxu0 0
      %1281 = vmatprep.subr.bf16.mxu0 0
      %1282 = vmatpush2.bf16.msra.mxu0 0
      %1283 = vmatprep.subr.bf16.mxu0 0
      %1284 = vmatpush2.bf16.msra.mxu0 0
      %1285 = vmatprep.subr.bf16.mxu0 0
      %1286 = vmatpush2.bf16.msra.mxu0 0
      %1287 = vmatprep.subr.bf16.mxu0 0
      %1288 = vmatpush2.bf16.msra.mxu0 0
      %1289 = vmatprep.subr.bf16.mxu0 0
      %1290 = vmatpush2.bf16.msra.mxu0 0
      %1291 = vmatprep.subr.bf16.mxu0 0
      %1292 = vmatpush2.bf16.msra.mxu0 0
      %1293 = vmatprep.mubr.bf16.mxu0 0
      %1294 = vmatmul.mubr.bf16.gmra.mxu0 %v1256
      %v1295 = vpop.f32.mrf.mxu0
      %v1296 = vadd.f32 0.0, %v1295
      %v1297 = vpop.f32.mrf.mxu0
      %v1298 = vpop.f32.mrf.mxu0
      %v1299 = vpop.f32.mrf.mxu0
      %1300 = vdwg.mxu0
      %v1301 = vpack.c.bf16 %v1020, %v974
      %v1302 = vpack.c.bf16 %v1112, %v1066
      %v1303 = vpack.c.bf16 %v1204, %v1158
      %v1304 = vpack.c.bf16 %v1296, %v1250
      %v1306 = vsel %vm457, %v1301, 0
      %v1309 = vsel %vm457, %v1302, 0
      %v1312 = vsel %vm457, %v1303, 0
      %v1315 = vsel %vm457, %v1304, 0
      %v1318 = vsel %vm935, %v181, 0
      %1320 = vmatprep.subr.bf16.mxu0 0
      %1321 = vmatpush1.bf16.msra.mxu0 0
      %1322 = vmatprep.subr.bf16.mxu0 0
      %1323 = vmatpush1.bf16.msra.mxu0 0
      %1324 = vmatprep.subr.bf16.mxu0 0
      %1325 = vmatpush1.bf16.msra.mxu0 0
      %1326 = vmatprep.subr.bf16.mxu0 0
      %1327 = vmatpush1.bf16.msra.mxu0 0
      %1328 = vmatprep.subr.bf16.mxu0 0
      %1329 = vmatpush1.bf16.msra.mxu0 0
      %1330 = vmatprep.subr.bf16.mxu0 0
      %1331 = vmatpush1.bf16.msra.mxu0 0
      %1332 = vmatprep.subr.bf16.mxu0 0
      %1333 = vmatpush1.bf16.msra.mxu0 0
      %1334 = vmatprep.subr.bf16.mxu0 0
      %1335 = vmatpush1.bf16.msra.mxu0 %v1318
      %1336 = vmatprep.subr.bf16.mxu0 0
      %1337 = vmatpush2.bf16.msra.mxu0 0
      %1338 = vmatprep.subr.bf16.mxu0 0
      %1339 = vmatpush2.bf16.msra.mxu0 0
      %1340 = vmatprep.subr.bf16.mxu0 0
      %1341 = vmatpush2.bf16.msra.mxu0 0
      %1342 = vmatprep.subr.bf16.mxu0 0
      %1343 = vmatpush2.bf16.msra.mxu0 0
      %1344 = vmatprep.subr.bf16.mxu0 0
      %1345 = vmatpush2.bf16.msra.mxu0 0
      %1346 = vmatprep.subr.bf16.mxu0 0
      %1347 = vmatpush2.bf16.msra.mxu0 0
      %1348 = vmatprep.subr.bf16.mxu0 0
      %1349 = vmatpush2.bf16.msra.mxu0 0
      %1350 = vmatprep.subr.bf16.mxu0 0
      %1351 = vmatpush2.bf16.msra.mxu0 0
      %1352 = vmatprep.mubr.bf16.mxu0 0
      %1353 = vmatmul.mubr.bf16.gmra.mxu0 %v1306
      %v1354 = vpop.f32.mrf.mxu0
      %v1355 = vadd.f32 0.0, %v1354
      %v1356 = vpop.f32.mrf.mxu0
      %v1357 = vpop.f32.mrf.mxu0
      %v1358 = vadd.f32 0.0, %v1357
      %v1359 = vpop.f32.mrf.mxu0
      %1360 = vmatprep.mubr.bf16.mxu0 0
      %1361 = vmatmul.mubr.bf16.gmra.mxu0 %v1309
      %v1362 = vpop.f32.mrf.mxu0
      %v1363 = vadd.f32 0.0, %v1362
      %v1364 = vpop.f32.mrf.mxu0
      %v1365 = vpop.f32.mrf.mxu0
      %v1366 = vadd.f32 0.0, %v1365
      %v1367 = vpop.f32.mrf.mxu0
      %1368 = vmatprep.mubr.bf16.mxu0 0
      %1369 = vmatmul.mubr.bf16.gmra.mxu0 %v1312
      %v1370 = vpop.f32.mrf.mxu0
      %v1371 = vadd.f32 0.0, %v1370
      %v1372 = vpop.f32.mrf.mxu0
      %v1373 = vpop.f32.mrf.mxu0
      %v1374 = vadd.f32 0.0, %v1373
      %v1375 = vpop.f32.mrf.mxu0
      %1376 = vmatprep.mubr.bf16.mxu0 0
      %1377 = vmatmul.mubr.bf16.gmra.mxu0 %v1315
      %v1378 = vpop.f32.mrf.mxu0
      %v1379 = vadd.f32 0.0, %v1378
      %v1380 = vpop.f32.mrf.mxu0
      %v1381 = vpop.f32.mrf.mxu0
      %v1382 = vadd.f32 0.0, %v1381
      %v1383 = vpop.f32.mrf.mxu0
      %1384 = vdwg.mxu0
      %v1385 = vadd.f32 %v152, %v1355
      %v1386 = vadd.f32 %v153, %v1358
      %v1387 = vadd.f32 %v154, %v1363
      %v1388 = vadd.f32 %v155, %v1366
      %v1389 = vadd.f32 %v156, %v1371
      %v1390 = vadd.f32 %v157, %v1374
      %v1391 = vadd.f32 %v158, %v1379
      %v1392 = vadd.f32 %v159, %v1382
      %1394 = vrot.lane.b32.xlu0 %v433, 120
      %v1395 = vpop.permute.xlu0 %1394
      %1397 = vrot.lane.b32.xlu0 %v441, 120
      %v1398 = vpop.permute.xlu0 %1397
      %v1400 = vsel %vm457, %v1395, 0
      %v1403 = vsel %vm457, %v1398, 0
      %1405 = vmatprep.subr.bf16.mxu0 0
      %1406 = vmatpush1.bf16.xpose.msra.mxu0 0
      %1407 = vmatprep.subr.bf16.mxu0 0
      %1408 = vmatpush1.bf16.xpose.msra.mxu0 0
      %1409 = vmatprep.subr.bf16.mxu0 0
      %1410 = vmatpush1.bf16.xpose.msra.mxu0 0
      %1411 = vmatprep.subr.bf16.mxu0 0
      %1412 = vmatpush1.bf16.xpose.msra.mxu0 0
      %1413 = vmatprep.subr.bf16.mxu0 0
      %1414 = vmatpush1.bf16.xpose.msra.mxu0 0
      %1415 = vmatprep.subr.bf16.mxu0 0
      %1416 = vmatpush1.bf16.xpose.msra.mxu0 0
      %1417 = vmatprep.subr.bf16.mxu0 0
      %1418 = vmatpush1.bf16.xpose.msra.mxu0 0
      %1419 = vmatprep.subr.bf16.mxu0 0
      %1420 = vmatpush1.bf16.xpose.msra.mxu0 %v1403
      %1421 = vmatprep.subr.bf16.mxu0 0
      %1422 = vmatpush2.bf16.xpose.msra.mxu0 0
      %1423 = vmatprep.subr.bf16.mxu0 0
      %1424 = vmatpush2.bf16.xpose.msra.mxu0 0
      %1425 = vmatprep.subr.bf16.mxu0 0
      %1426 = vmatpush2.bf16.xpose.msra.mxu0 0
      %1427 = vmatprep.subr.bf16.mxu0 0
      %1428 = vmatpush2.bf16.xpose.msra.mxu0 0
      %1429 = vmatprep.subr.bf16.mxu0 0
      %1430 = vmatpush2.bf16.xpose.msra.mxu0 0
      %1431 = vmatprep.subr.bf16.mxu0 0
      %1432 = vmatpush2.bf16.xpose.msra.mxu0 0
      %1433 = vmatprep.subr.bf16.mxu0 0
      %1434 = vmatpush2.bf16.xpose.msra.mxu0 0
      %1435 = vmatprep.subr.bf16.mxu0 0
      %1436 = vmatpush2.bf16.xpose.msra.mxu0 0
      %1437 = vmatprep.mubr.bf16.mxu0 0
      %1438 = vmatmul.mubr.bf16.gmra.mxu0 %v1400
      %v1439 = vpop.f32.mrf.mxu0
      %v1440 = vadd.f32 0.0, %v1439
      %v1441 = vpop.f32.mrf.mxu0
      %v1442 = vpop.f32.mrf.mxu0
      %v1443 = vpop.f32.mrf.mxu0
      %1444 = vdwg.mxu0
      %1446 = vrot.lane.b32.xlu0 %v434, 120
      %v1447 = vpop.permute.xlu0 %1446
      %1449 = vrot.lane.b32.xlu0 %v442, 120
      %v1450 = vpop.permute.xlu0 %1449
      %v1452 = vsel %vm457, %v1447, 0
      %v1455 = vsel %vm457, %v1450, 0
      %1457 = vmatprep.subr.bf16.mxu0 0
      %1458 = vmatpush1.bf16.xpose.msra.mxu0 0
      %1459 = vmatprep.subr.bf16.mxu0 0
      %1460 = vmatpush1.bf16.xpose.msra.mxu0 0
      %1461 = vmatprep.subr.bf16.mxu0 0
      %1462 = vmatpush1.bf16.xpose.msra.mxu0 0
      %1463 = vmatprep.subr.bf16.mxu0 0
      %1464 = vmatpush1.bf16.xpose.msra.mxu0 0
      %1465 = vmatprep.subr.bf16.mxu0 0
      %1466 = vmatpush1.bf16.xpose.msra.mxu0 0
      %1467 = vmatprep.subr.bf16.mxu0 0
      %1468 = vmatpush1.bf16.xpose.msra.mxu0 0
      %1469 = vmatprep.subr.bf16.mxu0 0
      %1470 = vmatpush1.bf16.xpose.msra.mxu0 0
      %1471 = vmatprep.subr.bf16.mxu0 0
      %1472 = vmatpush1.bf16.xpose.msra.mxu0 %v1455
      %1473 = vmatprep.subr.bf16.mxu0 0
      %1474 = vmatpush2.bf16.xpose.msra.mxu0 0
      %1475 = vmatprep.subr.bf16.mxu0 0
      %1476 = vmatpush2.bf16.xpose.msra.mxu0 0
      %1477 = vmatprep.subr.bf16.mxu0 0
      %1478 = vmatpush2.bf16.xpose.msra.mxu0 0
      %1479 = vmatprep.subr.bf16.mxu0 0
      %1480 = vmatpush2.bf16.xpose.msra.mxu0 0
      %1481 = vmatprep.subr.bf16.mxu0 0
      %1482 = vmatpush2.bf16.xpose.msra.mxu0 0
      %1483 = vmatprep.subr.bf16.mxu0 0
      %1484 = vmatpush2.bf16.xpose.msra.mxu0 0
      %1485 = vmatprep.subr.bf16.mxu0 0
      %1486 = vmatpush2.bf16.xpose.msra.mxu0 0
      %1487 = vmatprep.subr.bf16.mxu0 0
      %1488 = vmatpush2.bf16.xpose.msra.mxu0 0
      %1489 = vmatprep.mubr.bf16.mxu0 0
      %1490 = vmatmul.mubr.bf16.gmra.mxu0 %v1452
      %v1491 = vpop.f32.mrf.mxu0
      %v1492 = vadd.f32 0.0, %v1491
      %v1493 = vpop.f32.mrf.mxu0
      %v1494 = vpop.f32.mrf.mxu0
      %v1495 = vpop.f32.mrf.mxu0
      %1496 = vdwg.mxu0
      %1498 = vrot.lane.b32.xlu0 %v435, 120
      %v1499 = vpop.permute.xlu0 %1498
      %1501 = vrot.lane.b32.xlu0 %v443, 120
      %v1502 = vpop.permute.xlu0 %1501
      %v1504 = vsel %vm457, %v1499, 0
      %v1507 = vsel %vm457, %v1502, 0
      %1509 = vmatprep.subr.bf16.mxu0 0
      %1510 = vmatpush1.bf16.xpose.msra.mxu0 0
      %1511 = vmatprep.subr.bf16.mxu0 0
      %1512 = vmatpush1.bf16.xpose.msra.mxu0 0
      %1513 = vmatprep.subr.bf16.mxu0 0
      %1514 = vmatpush1.bf16.xpose.msra.mxu0 0
      %1515 = vmatprep.subr.bf16.mxu0 0
      %1516 = vmatpush1.bf16.xpose.msra.mxu0 0
      %1517 = vmatprep.subr.bf16.mxu0 0
      %1518 = vmatpush1.bf16.xpose.msra.mxu0 0
      %1519 = vmatprep.subr.bf16.mxu0 0
      %1520 = vmatpush1.bf16.xpose.msra.mxu0 0
      %1521 = vmatprep.subr.bf16.mxu0 0
      %1522 = vmatpush1.bf16.xpose.msra.mxu0 0
      %1523 = vmatprep.subr.bf16.mxu0 0
      %1524 = vmatpush1.bf16.xpose.msra.mxu0 %v1507
      %1525 = vmatprep.subr.bf16.mxu0 0
      %1526 = vmatpush2.bf16.xpose.msra.mxu0 0
      %1527 = vmatprep.subr.bf16.mxu0 0
      %1528 = vmatpush2.bf16.xpose.msra.mxu0 0
      %1529 = vmatprep.subr.bf16.mxu0 0
      %1530 = vmatpush2.bf16.xpose.msra.mxu0 0
      %1531 = vmatprep.subr.bf16.mxu0 0
      %1532 = vmatpush2.bf16.xpose.msra.mxu0 0
      %1533 = vmatprep.subr.bf16.mxu0 0
      %1534 = vmatpush2.bf16.xpose.msra.mxu0 0
      %1535 = vmatprep.subr.bf16.mxu0 0
      %1536 = vmatpush2.bf16.xpose.msra.mxu0 0
      %1537 = vmatprep.subr.bf16.mxu0 0
      %1538 = vmatpush2.bf16.xpose.msra.mxu0 0
      %1539 = vmatprep.subr.bf16.mxu0 0
      %1540 = vmatpush2.bf16.xpose.msra.mxu0 0
      %1541 = vmatprep.mubr.bf16.mxu0 0
      %1542 = vmatmul.mubr.bf16.gmra.mxu0 %v1504
      %v1543 = vpop.f32.mrf.mxu0
      %v1544 = vadd.f32 0.0, %v1543
      %v1545 = vpop.f32.mrf.mxu0
      %v1546 = vpop.f32.mrf.mxu0
      %v1547 = vpop.f32.mrf.mxu0
      %1548 = vdwg.mxu0
      %1550 = vrot.lane.b32.xlu0 %v436, 120
      %v1551 = vpop.permute.xlu0 %1550
      %1553 = vrot.lane.b32.xlu0 %v444, 120
      %v1554 = vpop.permute.xlu0 %1553
      %v1556 = vsel %vm457, %v1551, 0
      %v1559 = vsel %vm457, %v1554, 0
      %1561 = vmatprep.subr.bf16.mxu0 0
      %1562 = vmatpush1.bf16.xpose.msra.mxu0 0
      %1563 = vmatprep.subr.bf16.mxu0 0
      %1564 = vmatpush1.bf16.xpose.msra.mxu0 0
      %1565 = vmatprep.subr.bf16.mxu0 0
      %1566 = vmatpush1.bf16.xpose.msra.mxu0 0
      %1567 = vmatprep.subr.bf16.mxu0 0
      %1568 = vmatpush1.bf16.xpose.msra.mxu0 0
      %1569 = vmatprep.subr.bf16.mxu0 0
      %1570 = vmatpush1.bf16.xpose.msra.mxu0 0
      %1571 = vmatprep.subr.bf16.mxu0 0
      %1572 = vmatpush1.bf16.xpose.msra.mxu0 0
      %1573 = vmatprep.subr.bf16.mxu0 0
      %1574 = vmatpush1.bf16.xpose.msra.mxu0 0
      %1575 = vmatprep.subr.bf16.mxu0 0
      %1576 = vmatpush1.bf16.xpose.msra.mxu0 %v1559
      %1577 = vmatprep.subr.bf16.mxu0 0
      %1578 = vmatpush2.bf16.xpose.msra.mxu0 0
      %1579 = vmatprep.subr.bf16.mxu0 0
      %1580 = vmatpush2.bf16.xpose.msra.mxu0 0
      %1581 = vmatprep.subr.bf16.mxu0 0
      %1582 = vmatpush2.bf16.xpose.msra.mxu0 0
      %1583 = vmatprep.subr.bf16.mxu0 0
      %1584 = vmatpush2.bf16.xpose.msra.mxu0 0
      %1585 = vmatprep.subr.bf16.mxu0 0
      %1586 = vmatpush2.bf16.xpose.msra.mxu0 0
      %1587 = vmatprep.subr.bf16.mxu0 0
      %1588 = vmatpush2.bf16.xpose.msra.mxu0 0
      %1589 = vmatprep.subr.bf16.mxu0 0
      %1590 = vmatpush2.bf16.xpose.msra.mxu0 0
      %1591 = vmatprep.subr.bf16.mxu0 0
      %1592 = vmatpush2.bf16.xpose.msra.mxu0 0
      %1593 = vmatprep.mubr.bf16.mxu0 0
      %1594 = vmatmul.mubr.bf16.gmra.mxu0 %v1556
      %v1595 = vpop.f32.mrf.mxu0
      %v1596 = vadd.f32 0.0, %v1595
      %v1597 = vpop.f32.mrf.mxu0
      %v1598 = vpop.f32.mrf.mxu0
      %v1599 = vpop.f32.mrf.mxu0
      %1600 = vdwg.mxu0
      %1602 = vrot.lane.b32.xlu0 %v437, 120
      %v1603 = vpop.permute.xlu0 %1602
      %1605 = vrot.lane.b32.xlu0 %v445, 120
      %v1606 = vpop.permute.xlu0 %1605
      %v1608 = vsel %vm457, %v1603, 0
      %v1611 = vsel %vm457, %v1606, 0
      %1613 = vmatprep.subr.bf16.mxu0 0
      %1614 = vmatpush1.bf16.xpose.msra.mxu0 0
      %1615 = vmatprep.subr.bf16.mxu0 0
      %1616 = vmatpush1.bf16.xpose.msra.mxu0 0
      %1617 = vmatprep.subr.bf16.mxu0 0
      %1618 = vmatpush1.bf16.xpose.msra.mxu0 0
      %1619 = vmatprep.subr.bf16.mxu0 0
      %1620 = vmatpush1.bf16.xpose.msra.mxu0 0
      %1621 = vmatprep.subr.bf16.mxu0 0
      %1622 = vmatpush1.bf16.xpose.msra.mxu0 0
      %1623 = vmatprep.subr.bf16.mxu0 0
      %1624 = vmatpush1.bf16.xpose.msra.mxu0 0
      %1625 = vmatprep.subr.bf16.mxu0 0
      %1626 = vmatpush1.bf16.xpose.msra.mxu0 0
      %1627 = vmatprep.subr.bf16.mxu0 0
      %1628 = vmatpush1.bf16.xpose.msra.mxu0 %v1611
      %1629 = vmatprep.subr.bf16.mxu0 0
      %1630 = vmatpush2.bf16.xpose.msra.mxu0 0
      %1631 = vmatprep.subr.bf16.mxu0 0
      %1632 = vmatpush2.bf16.xpose.msra.mxu0 0
      %1633 = vmatprep.subr.bf16.mxu0 0
      %1634 = vmatpush2.bf16.xpose.msra.mxu0 0
      %1635 = vmatprep.subr.bf16.mxu0 0
      %1636 = vmatpush2.bf16.xpose.msra.mxu0 0
      %1637 = vmatprep.subr.bf16.mxu0 0
      %1638 = vmatpush2.bf16.xpose.msra.mxu0 0
      %1639 = vmatprep.subr.bf16.mxu0 0
      %1640 = vmatpush2.bf16.xpose.msra.mxu0 0
      %1641 = vmatprep.subr.bf16.mxu0 0
      %1642 = vmatpush2.bf16.xpose.msra.mxu0 0
      %1643 = vmatprep.subr.bf16.mxu0 0
      %1644 = vmatpush2.bf16.xpose.msra.mxu0 0
      %1645 = vmatprep.mubr.bf16.mxu0 0
      %1646 = vmatmul.mubr.bf16.gmra.mxu0 %v1608
      %v1647 = vpop.f32.mrf.mxu0
      %v1648 = vadd.f32 0.0, %v1647
      %v1649 = vpop.f32.mrf.mxu0
      %v1650 = vpop.f32.mrf.mxu0
      %v1651 = vpop.f32.mrf.mxu0
      %1652 = vdwg.mxu0
      %1654 = vrot.lane.b32.xlu0 %v438, 120
      %v1655 = vpop.permute.xlu0 %1654
      %1657 = vrot.lane.b32.xlu0 %v446, 120
      %v1658 = vpop.permute.xlu0 %1657
      %v1660 = vsel %vm457, %v1655, 0
      %v1663 = vsel %vm457, %v1658, 0
      %1665 = vmatprep.subr.bf16.mxu0 0
      %1666 = vmatpush1.bf16.xpose.msra.mxu0 0
      %1667 = vmatprep.subr.bf16.mxu0 0
      %1668 = vmatpush1.bf16.xpose.msra.mxu0 0
      %1669 = vmatprep.subr.bf16.mxu0 0
      %1670 = vmatpush1.bf16.xpose.msra.mxu0 0
      %1671 = vmatprep.subr.bf16.mxu0 0
      %1672 = vmatpush1.bf16.xpose.msra.mxu0 0
      %1673 = vmatprep.subr.bf16.mxu0 0
      %1674 = vmatpush1.bf16.xpose.msra.mxu0 0
      %1675 = vmatprep.subr.bf16.mxu0 0
      %1676 = vmatpush1.bf16.xpose.msra.mxu0 0
      %1677 = vmatprep.subr.bf16.mxu0 0
      %1678 = vmatpush1.bf16.xpose.msra.mxu0 0
      %1679 = vmatprep.subr.bf16.mxu0 0
      %1680 = vmatpush1.bf16.xpose.msra.mxu0 %v1663
      %1681 = vmatprep.subr.bf16.mxu0 0
      %1682 = vmatpush2.bf16.xpose.msra.mxu0 0
      %1683 = vmatprep.subr.bf16.mxu0 0
      %1684 = vmatpush2.bf16.xpose.msra.mxu0 0
      %1685 = vmatprep.subr.bf16.mxu0 0
      %1686 = vmatpush2.bf16.xpose.msra.mxu0 0
      %1687 = vmatprep.subr.bf16.mxu0 0
      %1688 = vmatpush2.bf16.xpose.msra.mxu0 0
      %1689 = vmatprep.subr.bf16.mxu0 0
      %1690 = vmatpush2.bf16.xpose.msra.mxu0 0
      %1691 = vmatprep.subr.bf16.mxu0 0
      %1692 = vmatpush2.bf16.xpose.msra.mxu0 0
      %1693 = vmatprep.subr.bf16.mxu0 0
      %1694 = vmatpush2.bf16.xpose.msra.mxu0 0
      %1695 = vmatprep.subr.bf16.mxu0 0
      %1696 = vmatpush2.bf16.xpose.msra.mxu0 0
      %1697 = vmatprep.mubr.bf16.mxu0 0
      %1698 = vmatmul.mubr.bf16.gmra.mxu0 %v1660
      %v1699 = vpop.f32.mrf.mxu0
      %v1700 = vadd.f32 0.0, %v1699
      %v1701 = vpop.f32.mrf.mxu0
      %v1702 = vpop.f32.mrf.mxu0
      %v1703 = vpop.f32.mrf.mxu0
      %1704 = vdwg.mxu0
      %1706 = vrot.lane.b32.xlu0 %v439, 120
      %v1707 = vpop.permute.xlu0 %1706
      %1709 = vrot.lane.b32.xlu0 %v447, 120
      %v1710 = vpop.permute.xlu0 %1709
      %v1712 = vsel %vm457, %v1707, 0
      %v1715 = vsel %vm457, %v1710, 0
      %1717 = vmatprep.subr.bf16.mxu0 0
      %1718 = vmatpush1.bf16.xpose.msra.mxu0 0
      %1719 = vmatprep.subr.bf16.mxu0 0
      %1720 = vmatpush1.bf16.xpose.msra.mxu0 0
      %1721 = vmatprep.subr.bf16.mxu0 0
      %1722 = vmatpush1.bf16.xpose.msra.mxu0 0
      %1723 = vmatprep.subr.bf16.mxu0 0
      %1724 = vmatpush1.bf16.xpose.msra.mxu0 0
      %1725 = vmatprep.subr.bf16.mxu0 0
      %1726 = vmatpush1.bf16.xpose.msra.mxu0 0
      %1727 = vmatprep.subr.bf16.mxu0 0
      %1728 = vmatpush1.bf16.xpose.msra.mxu0 0
      %1729 = vmatprep.subr.bf16.mxu0 0
      %1730 = vmatpush1.bf16.xpose.msra.mxu0 0
      %1731 = vmatprep.subr.bf16.mxu0 0
      %1732 = vmatpush1.bf16.xpose.msra.mxu0 %v1715
      %1733 = vmatprep.subr.bf16.mxu0 0
      %1734 = vmatpush2.bf16.xpose.msra.mxu0 0
      %1735 = vmatprep.subr.bf16.mxu0 0
      %1736 = vmatpush2.bf16.xpose.msra.mxu0 0
      %1737 = vmatprep.subr.bf16.mxu0 0
      %1738 = vmatpush2.bf16.xpose.msra.mxu0 0
      %1739 = vmatprep.subr.bf16.mxu0 0
      %1740 = vmatpush2.bf16.xpose.msra.mxu0 0
      %1741 = vmatprep.subr.bf16.mxu0 0
      %1742 = vmatpush2.bf16.xpose.msra.mxu0 0
      %1743 = vmatprep.subr.bf16.mxu0 0
      %1744 = vmatpush2.bf16.xpose.msra.mxu0 0
      %1745 = vmatprep.subr.bf16.mxu0 0
      %1746 = vmatpush2.bf16.xpose.msra.mxu0 0
      %1747 = vmatprep.subr.bf16.mxu0 0
      %1748 = vmatpush2.bf16.xpose.msra.mxu0 0
      %1749 = vmatprep.mubr.bf16.mxu0 0
      %1750 = vmatmul.mubr.bf16.gmra.mxu0 %v1712
      %v1751 = vpop.f32.mrf.mxu0
      %v1752 = vadd.f32 0.0, %v1751
      %v1753 = vpop.f32.mrf.mxu0
      %v1754 = vpop.f32.mrf.mxu0
      %v1755 = vpop.f32.mrf.mxu0
      %1756 = vdwg.mxu0
      %1758 = vrot.lane.b32.xlu0 %v440, 120
      %v1759 = vpop.permute.xlu0 %1758
      %1761 = vrot.lane.b32.xlu0 %v448, 120
      %v1762 = vpop.permute.xlu0 %1761
      %v1764 = vsel %vm457, %v1759, 0
      %v1767 = vsel %vm457, %v1762, 0
      %1769 = vmatprep.subr.bf16.mxu0 0
      %1770 = vmatpush1.bf16.xpose.msra.mxu0 0
      %1771 = vmatprep.subr.bf16.mxu0 0
      %1772 = vmatpush1.bf16.xpose.msra.mxu0 0
      %1773 = vmatprep.subr.bf16.mxu0 0
      %1774 = vmatpush1.bf16.xpose.msra.mxu0 0
      %1775 = vmatprep.subr.bf16.mxu0 0
      %1776 = vmatpush1.bf16.xpose.msra.mxu0 0
      %1777 = vmatprep.subr.bf16.mxu0 0
      %1778 = vmatpush1.bf16.xpose.msra.mxu0 0
      %1779 = vmatprep.subr.bf16.mxu0 0
      %1780 = vmatpush1.bf16.xpose.msra.mxu0 0
      %1781 = vmatprep.subr.bf16.mxu0 0
      %1782 = vmatpush1.bf16.xpose.msra.mxu0 0
      %1783 = vmatprep.subr.bf16.mxu0 0
      %1784 = vmatpush1.bf16.xpose.msra.mxu0 %v1767
      %1785 = vmatprep.subr.bf16.mxu0 0
      %1786 = vmatpush2.bf16.xpose.msra.mxu0 0
      %1787 = vmatprep.subr.bf16.mxu0 0
      %1788 = vmatpush2.bf16.xpose.msra.mxu0 0
      %1789 = vmatprep.subr.bf16.mxu0 0
      %1790 = vmatpush2.bf16.xpose.msra.mxu0 0
      %1791 = vmatprep.subr.bf16.mxu0 0
      %1792 = vmatpush2.bf16.xpose.msra.mxu0 0
      %1793 = vmatprep.subr.bf16.mxu0 0
      %1794 = vmatpush2.bf16.xpose.msra.mxu0 0
      %1795 = vmatprep.subr.bf16.mxu0 0
      %1796 = vmatpush2.bf16.xpose.msra.mxu0 0
      %1797 = vmatprep.subr.bf16.mxu0 0
      %1798 = vmatpush2.bf16.xpose.msra.mxu0 0
      %1799 = vmatprep.subr.bf16.mxu0 0
      %1800 = vmatpush2.bf16.xpose.msra.mxu0 0
      %1801 = vmatprep.mubr.bf16.mxu0 0
      %1802 = vmatmul.mubr.bf16.gmra.mxu0 %v1764
      %v1803 = vpop.f32.mrf.mxu0
      %v1804 = vadd.f32 0.0, %v1803
      %v1805 = vpop.f32.mrf.mxu0
      %v1806 = vpop.f32.mrf.mxu0
      %v1807 = vpop.f32.mrf.mxu0
      %1808 = vdwg.mxu0
      %v1809 = vsel %vm827, %v1440, -1e+30
      %v1810 = vsel %vm827, %v1492, -1e+30
      %v1811 = vsel %vm827, %v1544, -1e+30
      %v1812 = vsel %vm827, %v1596, -1e+30
      %v1813 = vsel %vm827, %v1648, -1e+30
      %v1814 = vsel %vm827, %v1700, -1e+30
      %v1815 = vsel %vm827, %v1752, -1e+30
      %v1816 = vsel %vm827, %v1804, -1e+30
      %v1817 = vsel %vm457, %v1809, -inf
      %1818 = vmax.xlane.f32.xlu0 %v1817
      %v1819 = vpop.xlane.xlu0 %1818
      %v1820 = vsel %vm457, %v1810, -inf
      %1821 = vmax.xlane.f32.xlu0 %v1820
      %v1822 = vpop.xlane.xlu0 %1821
      %v1823 = vsel %vm457, %v1811, -inf
      %1824 = vmax.xlane.f32.xlu0 %v1823
      %v1825 = vpop.xlane.xlu0 %1824
      %v1826 = vsel %vm457, %v1812, -inf
      %1827 = vmax.xlane.f32.xlu0 %v1826
      %v1828 = vpop.xlane.xlu0 %1827
      %v1829 = vsel %vm457, %v1813, -inf
      %1830 = vmax.xlane.f32.xlu0 %v1829
      %v1831 = vpop.xlane.xlu0 %1830
      %v1832 = vsel %vm457, %v1814, -inf
      %1833 = vmax.xlane.f32.xlu0 %v1832
      %v1834 = vpop.xlane.xlu0 %1833
      %v1835 = vsel %vm457, %v1815, -inf
      %1836 = vmax.xlane.f32.xlu0 %v1835
      %v1837 = vpop.xlane.xlu0 %1836
      %v1838 = vsel %vm457, %v1816, -inf
      %1839 = vmax.xlane.f32.xlu0 %v1838
      %v1840 = vpop.xlane.xlu0 %1839
      %v1841 = vsub.f32 %v1809, %v1819
      %v1842 = vsub.f32 %v1810, %v1822
      %v1843 = vsub.f32 %v1811, %v1825
      %v1844 = vsub.f32 %v1812, %v1828
      %v1845 = vsub.f32 %v1813, %v1831
      %v1846 = vsub.f32 %v1814, %v1834
      %v1847 = vsub.f32 %v1815, %v1837
      %v1848 = vsub.f32 %v1816, %v1840
      %v1849 = vmul.f32 %v1841, 1.442695
      %v1850 = vpow.pop %v1849
      %v1851 = vmul.f32 %v1842, 1.442695
      %v1852 = vpow.pop %v1851
      %v1853 = vmul.f32 %v1843, 1.442695
      %v1854 = vpow.pop %v1853
      %v1855 = vmul.f32 %v1844, 1.442695
      %v1856 = vpow.pop %v1855
      %v1857 = vmul.f32 %v1845, 1.442695
      %v1858 = vpow.pop %v1857
      %v1859 = vmul.f32 %v1846, 1.442695
      %v1860 = vpow.pop %v1859
      %v1861 = vmul.f32 %v1847, 1.442695
      %v1862 = vpow.pop %v1861
      %v1863 = vmul.f32 %v1848, 1.442695
      %v1864 = vpow.pop %v1863
      %v1865 = vsel %vm457, %v1850, 0.0
      %1866 = vadd.xlane.f32.xlu0 %v1865
      %v1867 = vpop.xlane.xlu0 %1866
      %v1868 = vsel %vm457, %v1852, 0.0
      %1869 = vadd.xlane.f32.xlu0 %v1868
      %v1870 = vpop.xlane.xlu0 %1869
      %v1871 = vsel %vm457, %v1854, 0.0
      %1872 = vadd.xlane.f32.xlu0 %v1871
      %v1873 = vpop.xlane.xlu0 %1872
      %v1874 = vsel %vm457, %v1856, 0.0
      %1875 = vadd.xlane.f32.xlu0 %v1874
      %v1876 = vpop.xlane.xlu0 %1875
      %v1877 = vsel %vm457, %v1858, 0.0
      %1878 = vadd.xlane.f32.xlu0 %v1877
      %v1879 = vpop.xlane.xlu0 %1878
      %v1880 = vsel %vm457, %v1860, 0.0
      %1881 = vadd.xlane.f32.xlu0 %v1880
      %v1882 = vpop.xlane.xlu0 %1881
      %v1883 = vsel %vm457, %v1862, 0.0
      %1884 = vadd.xlane.f32.xlu0 %v1883
      %v1885 = vpop.xlane.xlu0 %1884
      %v1886 = vsel %vm457, %v1864, 0.0
      %1887 = vadd.xlane.f32.xlu0 %v1886
      %v1888 = vpop.xlane.xlu0 %1887
      %v1889 = vrcp.pop %v1867
      %v1890 = vrcp.pop %v1870
      %v1891 = vrcp.pop %v1873
      %v1892 = vrcp.pop %v1876
      %v1893 = vrcp.pop %v1879
      %v1894 = vrcp.pop %v1882
      %v1895 = vrcp.pop %v1885
      %v1896 = vrcp.pop %v1888
      %v1897 = vmul.f32 %v1850, %v1889
      %v1898 = vmul.f32 %v1852, %v1890
      %v1899 = vmul.f32 %v1854, %v1891
      %v1900 = vmul.f32 %v1856, %v1892
      %v1901 = vmul.f32 %v1858, %v1893
      %v1902 = vmul.f32 %v1860, %v1894
      %v1903 = vmul.f32 %v1862, %v1895
      %v1904 = vmul.f32 %v1864, %v1896
      %v1905 = vpack.c.bf16 %v1897, %v1897
      %v1906 = vpack.c.bf16 %v1898, %v1898
      %v1907 = vpack.c.bf16 %v1899, %v1899
      %v1908 = vpack.c.bf16 %v1900, %v1900
      %v1909 = vpack.c.bf16 %v1901, %v1901
      %v1910 = vpack.c.bf16 %v1902, %v1902
      %v1911 = vpack.c.bf16 %v1903, %v1903
      %v1912 = vpack.c.bf16 %v1904, %v1904
      %1914 = vrot.lane.b32.xlu0 %v449, 120
      %v1915 = vpop.permute.xlu0 %1914
      %v1917 = vsel %vm457, %v1905, 0
      %v1920 = vsel %vm935, %v1915, 0
      %1922 = vmatprep.subr.bf16.mxu0 0
      %1923 = vmatpush1.bf16.msra.mxu0 0
      %1924 = vmatprep.subr.bf16.mxu0 0
      %1925 = vmatpush1.bf16.msra.mxu0 0
      %1926 = vmatprep.subr.bf16.mxu0 0
      %1927 = vmatpush1.bf16.msra.mxu0 0
      %1928 = vmatprep.subr.bf16.mxu0 0
      %1929 = vmatpush1.bf16.msra.mxu0 0
      %1930 = vmatprep.subr.bf16.mxu0 0
      %1931 = vmatpush1.bf16.msra.mxu0 0
      %1932 = vmatprep.subr.bf16.mxu0 0
      %1933 = vmatpush1.bf16.msra.mxu0 0
      %1934 = vmatprep.subr.bf16.mxu0 0
      %1935 = vmatpush1.bf16.msra.mxu0 0
      %1936 = vmatprep.subr.bf16.mxu0 0
      %1937 = vmatpush1.bf16.msra.mxu0 %v1920
      %1938 = vmatprep.subr.bf16.mxu0 0
      %1939 = vmatpush2.bf16.msra.mxu0 0
      %1940 = vmatprep.subr.bf16.mxu0 0
      %1941 = vmatpush2.bf16.msra.mxu0 0
      %1942 = vmatprep.subr.bf16.mxu0 0
      %1943 = vmatpush2.bf16.msra.mxu0 0
      %1944 = vmatprep.subr.bf16.mxu0 0
      %1945 = vmatpush2.bf16.msra.mxu0 0
      %1946 = vmatprep.subr.bf16.mxu0 0
      %1947 = vmatpush2.bf16.msra.mxu0 0
      %1948 = vmatprep.subr.bf16.mxu0 0
      %1949 = vmatpush2.bf16.msra.mxu0 0
      %1950 = vmatprep.subr.bf16.mxu0 0
      %1951 = vmatpush2.bf16.msra.mxu0 0
      %1952 = vmatprep.subr.bf16.mxu0 0
      %1953 = vmatpush2.bf16.msra.mxu0 0
      %1954 = vmatprep.mubr.bf16.mxu0 0
      %1955 = vmatmul.mubr.bf16.gmra.mxu0 %v1917
      %v1956 = vpop.f32.mrf.mxu0
      %v1957 = vadd.f32 0.0, %v1956
      %v1958 = vpop.f32.mrf.mxu0
      %v1959 = vpop.f32.mrf.mxu0
      %v1960 = vpop.f32.mrf.mxu0
      %1961 = vdwg.mxu0
      %1963 = vrot.lane.b32.xlu0 %v450, 120
      %v1964 = vpop.permute.xlu0 %1963
      %v1966 = vsel %vm457, %v1906, 0
      %v1969 = vsel %vm935, %v1964, 0
      %1971 = vmatprep.subr.bf16.mxu0 0
      %1972 = vmatpush1.bf16.msra.mxu0 0
      %1973 = vmatprep.subr.bf16.mxu0 0
      %1974 = vmatpush1.bf16.msra.mxu0 0
      %1975 = vmatprep.subr.bf16.mxu0 0
      %1976 = vmatpush1.bf16.msra.mxu0 0
      %1977 = vmatprep.subr.bf16.mxu0 0
      %1978 = vmatpush1.bf16.msra.mxu0 0
      %1979 = vmatprep.subr.bf16.mxu0 0
      %1980 = vmatpush1.bf16.msra.mxu0 0
      %1981 = vmatprep.subr.bf16.mxu0 0
      %1982 = vmatpush1.bf16.msra.mxu0 0
      %1983 = vmatprep.subr.bf16.mxu0 0
      %1984 = vmatpush1.bf16.msra.mxu0 0
      %1985 = vmatprep.subr.bf16.mxu0 0
      %1986 = vmatpush1.bf16.msra.mxu0 %v1969
      %1987 = vmatprep.subr.bf16.mxu0 0
      %1988 = vmatpush2.bf16.msra.mxu0 0
      %1989 = vmatprep.subr.bf16.mxu0 0
      %1990 = vmatpush2.bf16.msra.mxu0 0
      %1991 = vmatprep.subr.bf16.mxu0 0
      %1992 = vmatpush2.bf16.msra.mxu0 0
      %1993 = vmatprep.subr.bf16.mxu0 0
      %1994 = vmatpush2.bf16.msra.mxu0 0
      %1995 = vmatprep.subr.bf16.mxu0 0
      %1996 = vmatpush2.bf16.msra.mxu0 0
      %1997 = vmatprep.subr.bf16.mxu0 0
      %1998 = vmatpush2.bf16.msra.mxu0 0
      %1999 = vmatprep.subr.bf16.mxu0 0
      %2000 = vmatpush2.bf16.msra.mxu0 0
      %2001 = vmatprep.subr.bf16.mxu0 0
      %2002 = vmatpush2.bf16.msra.mxu0 0
      %2003 = vmatprep.mubr.bf16.mxu0 0
      %2004 = vmatmul.mubr.bf16.gmra.mxu0 %v1966
      %v2005 = vpop.f32.mrf.mxu0
      %v2006 = vadd.f32 0.0, %v2005
      %v2007 = vpop.f32.mrf.mxu0
      %v2008 = vpop.f32.mrf.mxu0
      %v2009 = vpop.f32.mrf.mxu0
      %2010 = vdwg.mxu0
      %2012 = vrot.lane.b32.xlu0 %v451, 120
      %v2013 = vpop.permute.xlu0 %2012
      %v2015 = vsel %vm457, %v1907, 0
      %v2018 = vsel %vm935, %v2013, 0
      %2020 = vmatprep.subr.bf16.mxu0 0
      %2021 = vmatpush1.bf16.msra.mxu0 0
      %2022 = vmatprep.subr.bf16.mxu0 0
      %2023 = vmatpush1.bf16.msra.mxu0 0
      %2024 = vmatprep.subr.bf16.mxu0 0
      %2025 = vmatpush1.bf16.msra.mxu0 0
      %2026 = vmatprep.subr.bf16.mxu0 0
      %2027 = vmatpush1.bf16.msra.mxu0 0
      %2028 = vmatprep.subr.bf16.mxu0 0
      %2029 = vmatpush1.bf16.msra.mxu0 0
      %2030 = vmatprep.subr.bf16.mxu0 0
      %2031 = vmatpush1.bf16.msra.mxu0 0
      %2032 = vmatprep.subr.bf16.mxu0 0
      %2033 = vmatpush1.bf16.msra.mxu0 0
      %2034 = vmatprep.subr.bf16.mxu0 0
      %2035 = vmatpush1.bf16.msra.mxu0 %v2018
      %2036 = vmatprep.subr.bf16.mxu0 0
      %2037 = vmatpush2.bf16.msra.mxu0 0
      %2038 = vmatprep.subr.bf16.mxu0 0
      %2039 = vmatpush2.bf16.msra.mxu0 0
      %2040 = vmatprep.subr.bf16.mxu0 0
      %2041 = vmatpush2.bf16.msra.mxu0 0
      %2042 = vmatprep.subr.bf16.mxu0 0
      %2043 = vmatpush2.bf16.msra.mxu0 0
      %2044 = vmatprep.subr.bf16.mxu0 0
      %2045 = vmatpush2.bf16.msra.mxu0 0
      %2046 = vmatprep.subr.bf16.mxu0 0
      %2047 = vmatpush2.bf16.msra.mxu0 0
      %2048 = vmatprep.subr.bf16.mxu0 0
      %2049 = vmatpush2.bf16.msra.mxu0 0
      %2050 = vmatprep.subr.bf16.mxu0 0
      %2051 = vmatpush2.bf16.msra.mxu0 0
      %2052 = vmatprep.mubr.bf16.mxu0 0
      %2053 = vmatmul.mubr.bf16.gmra.mxu0 %v2015
      %v2054 = vpop.f32.mrf.mxu0
      %v2055 = vadd.f32 0.0, %v2054
      %v2056 = vpop.f32.mrf.mxu0
      %v2057 = vpop.f32.mrf.mxu0
      %v2058 = vpop.f32.mrf.mxu0
      %2059 = vdwg.mxu0
      %2061 = vrot.lane.b32.xlu0 %v452, 120
      %v2062 = vpop.permute.xlu0 %2061
      %v2064 = vsel %vm457, %v1908, 0
      %v2067 = vsel %vm935, %v2062, 0
      %2069 = vmatprep.subr.bf16.mxu0 0
      %2070 = vmatpush1.bf16.msra.mxu0 0
      %2071 = vmatprep.subr.bf16.mxu0 0
      %2072 = vmatpush1.bf16.msra.mxu0 0
      %2073 = vmatprep.subr.bf16.mxu0 0
      %2074 = vmatpush1.bf16.msra.mxu0 0
      %2075 = vmatprep.subr.bf16.mxu0 0
      %2076 = vmatpush1.bf16.msra.mxu0 0
      %2077 = vmatprep.subr.bf16.mxu0 0
      %2078 = vmatpush1.bf16.msra.mxu0 0
      %2079 = vmatprep.subr.bf16.mxu0 0
      %2080 = vmatpush1.bf16.msra.mxu0 0
      %2081 = vmatprep.subr.bf16.mxu0 0
      %2082 = vmatpush1.bf16.msra.mxu0 0
      %2083 = vmatprep.subr.bf16.mxu0 0
      %2084 = vmatpush1.bf16.msra.mxu0 %v2067
      %2085 = vmatprep.subr.bf16.mxu0 0
      %2086 = vmatpush2.bf16.msra.mxu0 0
      %2087 = vmatprep.subr.bf16.mxu0 0
      %2088 = vmatpush2.bf16.msra.mxu0 0
      %2089 = vmatprep.subr.bf16.mxu0 0
      %2090 = vmatpush2.bf16.msra.mxu0 0
      %2091 = vmatprep.subr.bf16.mxu0 0
      %2092 = vmatpush2.bf16.msra.mxu0 0
      %2093 = vmatprep.subr.bf16.mxu0 0
      %2094 = vmatpush2.bf16.msra.mxu0 0
      %2095 = vmatprep.subr.bf16.mxu0 0
      %2096 = vmatpush2.bf16.msra.mxu0 0
      %2097 = vmatprep.subr.bf16.mxu0 0
      %2098 = vmatpush2.bf16.msra.mxu0 0
      %2099 = vmatprep.subr.bf16.mxu0 0
      %2100 = vmatpush2.bf16.msra.mxu0 0
      %2101 = vmatprep.mubr.bf16.mxu0 0
      %2102 = vmatmul.mubr.bf16.gmra.mxu0 %v2064
      %v2103 = vpop.f32.mrf.mxu0
      %v2104 = vadd.f32 0.0, %v2103
      %v2105 = vpop.f32.mrf.mxu0
      %v2106 = vpop.f32.mrf.mxu0
      %v2107 = vpop.f32.mrf.mxu0
      %2108 = vdwg.mxu0
      %2110 = vrot.lane.b32.xlu0 %v453, 120
      %v2111 = vpop.permute.xlu0 %2110
      %v2113 = vsel %vm457, %v1909, 0
      %v2116 = vsel %vm935, %v2111, 0
      %2118 = vmatprep.subr.bf16.mxu0 0
      %2119 = vmatpush1.bf16.msra.mxu0 0
      %2120 = vmatprep.subr.bf16.mxu0 0
      %2121 = vmatpush1.bf16.msra.mxu0 0
      %2122 = vmatprep.subr.bf16.mxu0 0
      %2123 = vmatpush1.bf16.msra.mxu0 0
      %2124 = vmatprep.subr.bf16.mxu0 0
      %2125 = vmatpush1.bf16.msra.mxu0 0
      %2126 = vmatprep.subr.bf16.mxu0 0
      %2127 = vmatpush1.bf16.msra.mxu0 0
      %2128 = vmatprep.subr.bf16.mxu0 0
      %2129 = vmatpush1.bf16.msra.mxu0 0
      %2130 = vmatprep.subr.bf16.mxu0 0
      %2131 = vmatpush1.bf16.msra.mxu0 0
      %2132 = vmatprep.subr.bf16.mxu0 0
      %2133 = vmatpush1.bf16.msra.mxu0 %v2116
      %2134 = vmatprep.subr.bf16.mxu0 0
      %2135 = vmatpush2.bf16.msra.mxu0 0
      %2136 = vmatprep.subr.bf16.mxu0 0
      %2137 = vmatpush2.bf16.msra.mxu0 0
      %2138 = vmatprep.subr.bf16.mxu0 0
      %2139 = vmatpush2.bf16.msra.mxu0 0
      %2140 = vmatprep.subr.bf16.mxu0 0
      %2141 = vmatpush2.bf16.msra.mxu0 0
      %2142 = vmatprep.subr.bf16.mxu0 0
      %2143 = vmatpush2.bf16.msra.mxu0 0
      %2144 = vmatprep.subr.bf16.mxu0 0
      %2145 = vmatpush2.bf16.msra.mxu0 0
      %2146 = vmatprep.subr.bf16.mxu0 0
      %2147 = vmatpush2.bf16.msra.mxu0 0
      %2148 = vmatprep.subr.bf16.mxu0 0
      %2149 = vmatpush2.bf16.msra.mxu0 0
      %2150 = vmatprep.mubr.bf16.mxu0 0
      %2151 = vmatmul.mubr.bf16.gmra.mxu0 %v2113
      %v2152 = vpop.f32.mrf.mxu0
      %v2153 = vadd.f32 0.0, %v2152
      %v2154 = vpop.f32.mrf.mxu0
      %v2155 = vpop.f32.mrf.mxu0
      %v2156 = vpop.f32.mrf.mxu0
      %2157 = vdwg.mxu0
      %2159 = vrot.lane.b32.xlu0 %v454, 120
      %v2160 = vpop.permute.xlu0 %2159
      %v2162 = vsel %vm457, %v1910, 0
      %v2165 = vsel %vm935, %v2160, 0
      %2167 = vmatprep.subr.bf16.mxu0 0
      %2168 = vmatpush1.bf16.msra.mxu0 0
      %2169 = vmatprep.subr.bf16.mxu0 0
      %2170 = vmatpush1.bf16.msra.mxu0 0
      %2171 = vmatprep.subr.bf16.mxu0 0
      %2172 = vmatpush1.bf16.msra.mxu0 0
      %2173 = vmatprep.subr.bf16.mxu0 0
      %2174 = vmatpush1.bf16.msra.mxu0 0
      %2175 = vmatprep.subr.bf16.mxu0 0
      %2176 = vmatpush1.bf16.msra.mxu0 0
      %2177 = vmatprep.subr.bf16.mxu0 0
      %2178 = vmatpush1.bf16.msra.mxu0 0
      %2179 = vmatprep.subr.bf16.mxu0 0
      %2180 = vmatpush1.bf16.msra.mxu0 0
      %2181 = vmatprep.subr.bf16.mxu0 0
      %2182 = vmatpush1.bf16.msra.mxu0 %v2165
      %2183 = vmatprep.subr.bf16.mxu0 0
      %2184 = vmatpush2.bf16.msra.mxu0 0
      %2185 = vmatprep.subr.bf16.mxu0 0
      %2186 = vmatpush2.bf16.msra.mxu0 0
      %2187 = vmatprep.subr.bf16.mxu0 0
      %2188 = vmatpush2.bf16.msra.mxu0 0
      %2189 = vmatprep.subr.bf16.mxu0 0
      %2190 = vmatpush2.bf16.msra.mxu0 0
      %2191 = vmatprep.subr.bf16.mxu0 0
      %2192 = vmatpush2.bf16.msra.mxu0 0
      %2193 = vmatprep.subr.bf16.mxu0 0
      %2194 = vmatpush2.bf16.msra.mxu0 0
      %2195 = vmatprep.subr.bf16.mxu0 0
      %2196 = vmatpush2.bf16.msra.mxu0 0
      %2197 = vmatprep.subr.bf16.mxu0 0
      %2198 = vmatpush2.bf16.msra.mxu0 0
      %2199 = vmatprep.mubr.bf16.mxu0 0
      %2200 = vmatmul.mubr.bf16.gmra.mxu0 %v2162
      %v2201 = vpop.f32.mrf.mxu0
      %v2202 = vadd.f32 0.0, %v2201
      %v2203 = vpop.f32.mrf.mxu0
      %v2204 = vpop.f32.mrf.mxu0
      %v2205 = vpop.f32.mrf.mxu0
      %2206 = vdwg.mxu0
      %2208 = vrot.lane.b32.xlu0 %v455, 120
      %v2209 = vpop.permute.xlu0 %2208
      %v2211 = vsel %vm457, %v1911, 0
      %v2214 = vsel %vm935, %v2209, 0
      %2216 = vmatprep.subr.bf16.mxu0 0
      %2217 = vmatpush1.bf16.msra.mxu0 0
      %2218 = vmatprep.subr.bf16.mxu0 0
      %2219 = vmatpush1.bf16.msra.mxu0 0
      %2220 = vmatprep.subr.bf16.mxu0 0
      %2221 = vmatpush1.bf16.msra.mxu0 0
      %2222 = vmatprep.subr.bf16.mxu0 0
      %2223 = vmatpush1.bf16.msra.mxu0 0
      %2224 = vmatprep.subr.bf16.mxu0 0
      %2225 = vmatpush1.bf16.msra.mxu0 0
      %2226 = vmatprep.subr.bf16.mxu0 0
      %2227 = vmatpush1.bf16.msra.mxu0 0
      %2228 = vmatprep.subr.bf16.mxu0 0
      %2229 = vmatpush1.bf16.msra.mxu0 0
      %2230 = vmatprep.subr.bf16.mxu0 0
      %2231 = vmatpush1.bf16.msra.mxu0 %v2214
      %2232 = vmatprep.subr.bf16.mxu0 0
      %2233 = vmatpush2.bf16.msra.mxu0 0
      %2234 = vmatprep.subr.bf16.mxu0 0
      %2235 = vmatpush2.bf16.msra.mxu0 0
      %2236 = vmatprep.subr.bf16.mxu0 0
      %2237 = vmatpush2.bf16.msra.mxu0 0
      %2238 = vmatprep.subr.bf16.mxu0 0
      %2239 = vmatpush2.bf16.msra.mxu0 0
      %2240 = vmatprep.subr.bf16.mxu0 0
      %2241 = vmatpush2.bf16.msra.mxu0 0
      %2242 = vmatprep.subr.bf16.mxu0 0
      %2243 = vmatpush2.bf16.msra.mxu0 0
      %2244 = vmatprep.subr.bf16.mxu0 0
      %2245 = vmatpush2.bf16.msra.mxu0 0
      %2246 = vmatprep.subr.bf16.mxu0 0
      %2247 = vmatpush2.bf16.msra.mxu0 0
      %2248 = vmatprep.mubr.bf16.mxu0 0
      %2249 = vmatmul.mubr.bf16.gmra.mxu0 %v2211
      %v2250 = vpop.f32.mrf.mxu0
      %v2251 = vadd.f32 0.0, %v2250
      %v2252 = vpop.f32.mrf.mxu0
      %v2253 = vpop.f32.mrf.mxu0
      %v2254 = vpop.f32.mrf.mxu0
      %2255 = vdwg.mxu0
      %2257 = vrot.lane.b32.xlu0 %v456, 120
      %v2258 = vpop.permute.xlu0 %2257
      %v2260 = vsel %vm457, %v1912, 0
      %v2263 = vsel %vm935, %v2258, 0
      %2265 = vmatprep.subr.bf16.mxu0 0
      %2266 = vmatpush1.bf16.msra.mxu0 0
      %2267 = vmatprep.subr.bf16.mxu0 0
      %2268 = vmatpush1.bf16.msra.mxu0 0
      %2269 = vmatprep.subr.bf16.mxu0 0
      %2270 = vmatpush1.bf16.msra.mxu0 0
      %2271 = vmatprep.subr.bf16.mxu0 0
      %2272 = vmatpush1.bf16.msra.mxu0 0
      %2273 = vmatprep.subr.bf16.mxu0 0
      %2274 = vmatpush1.bf16.msra.mxu0 0
      %2275 = vmatprep.subr.bf16.mxu0 0
      %2276 = vmatpush1.bf16.msra.mxu0 0
      %2277 = vmatprep.subr.bf16.mxu0 0
      %2278 = vmatpush1.bf16.msra.mxu0 0
      %2279 = vmatprep.subr.bf16.mxu0 0
      %2280 = vmatpush1.bf16.msra.mxu0 %v2263
      %2281 = vmatprep.subr.bf16.mxu0 0
      %2282 = vmatpush2.bf16.msra.mxu0 0
      %2283 = vmatprep.subr.bf16.mxu0 0
      %2284 = vmatpush2.bf16.msra.mxu0 0
      %2285 = vmatprep.subr.bf16.mxu0 0
      %2286 = vmatpush2.bf16.msra.mxu0 0
      %2287 = vmatprep.subr.bf16.mxu0 0
      %2288 = vmatpush2.bf16.msra.mxu0 0
      %2289 = vmatprep.subr.bf16.mxu0 0
      %2290 = vmatpush2.bf16.msra.mxu0 0
      %2291 = vmatprep.subr.bf16.mxu0 0
      %2292 = vmatpush2.bf16.msra.mxu0 0
      %2293 = vmatprep.subr.bf16.mxu0 0
      %2294 = vmatpush2.bf16.msra.mxu0 0
      %2295 = vmatprep.subr.bf16.mxu0 0
      %2296 = vmatpush2.bf16.msra.mxu0 0
      %2297 = vmatprep.mubr.bf16.mxu0 0
      %2298 = vmatmul.mubr.bf16.gmra.mxu0 %v2260
      %v2299 = vpop.f32.mrf.mxu0
      %v2300 = vadd.f32 0.0, %v2299
      %v2301 = vpop.f32.mrf.mxu0
      %v2302 = vpop.f32.mrf.mxu0
      %v2303 = vpop.f32.mrf.mxu0
      %2304 = vdwg.mxu0
      %v2305 = vpack.c.bf16 %v2006, %v1957
      %v2306 = vpack.c.bf16 %v2104, %v2055
      %v2307 = vpack.c.bf16 %v2202, %v2153
      %v2308 = vpack.c.bf16 %v2300, %v2251
      %v2310 = vsel %vm457, %v2305, 0
      %v2313 = vsel %vm457, %v2306, 0
      %v2316 = vsel %vm457, %v2307, 0
      %v2319 = vsel %vm457, %v2308, 0
      %v2322 = vsel %vm935, %v182, 0
      %2324 = vmatprep.subr.bf16.mxu0 0
      %2325 = vmatpush1.bf16.msra.mxu0 0
      %2326 = vmatprep.subr.bf16.mxu0 0
      %2327 = vmatpush1.bf16.msra.mxu0 0
      %2328 = vmatprep.subr.bf16.mxu0 0
      %2329 = vmatpush1.bf16.msra.mxu0 0
      %2330 = vmatprep.subr.bf16.mxu0 0
      %2331 = vmatpush1.bf16.msra.mxu0 0
      %2332 = vmatprep.subr.bf16.mxu0 0
      %2333 = vmatpush1.bf16.msra.mxu0 0
      %2334 = vmatprep.subr.bf16.mxu0 0
      %2335 = vmatpush1.bf16.msra.mxu0 0
      %2336 = vmatprep.subr.bf16.mxu0 0
      %2337 = vmatpush1.bf16.msra.mxu0 0
      %2338 = vmatprep.subr.bf16.mxu0 0
      %2339 = vmatpush1.bf16.msra.mxu0 %v2322
      %2340 = vmatprep.subr.bf16.mxu0 0
      %2341 = vmatpush2.bf16.msra.mxu0 0
      %2342 = vmatprep.subr.bf16.mxu0 0
      %2343 = vmatpush2.bf16.msra.mxu0 0
      %2344 = vmatprep.subr.bf16.mxu0 0
      %2345 = vmatpush2.bf16.msra.mxu0 0
      %2346 = vmatprep.subr.bf16.mxu0 0
      %2347 = vmatpush2.bf16.msra.mxu0 0
      %2348 = vmatprep.subr.bf16.mxu0 0
      %2349 = vmatpush2.bf16.msra.mxu0 0
      %2350 = vmatprep.subr.bf16.mxu0 0
      %2351 = vmatpush2.bf16.msra.mxu0 0
      %2352 = vmatprep.subr.bf16.mxu0 0
      %2353 = vmatpush2.bf16.msra.mxu0 0
      %2354 = vmatprep.subr.bf16.mxu0 0
      %2355 = vmatpush2.bf16.msra.mxu0 0
      %2356 = vmatprep.mubr.bf16.mxu0 0
      %2357 = vmatmul.mubr.bf16.gmra.mxu0 %v2310
      %v2358 = vpop.f32.mrf.mxu0
      %v2359 = vadd.f32 0.0, %v2358
      %v2360 = vpop.f32.mrf.mxu0
      %v2361 = vpop.f32.mrf.mxu0
      %v2362 = vadd.f32 0.0, %v2361
      %v2363 = vpop.f32.mrf.mxu0
      %2364 = vmatprep.mubr.bf16.mxu0 0
      %2365 = vmatmul.mubr.bf16.gmra.mxu0 %v2313
      %v2366 = vpop.f32.mrf.mxu0
      %v2367 = vadd.f32 0.0, %v2366
      %v2368 = vpop.f32.mrf.mxu0
      %v2369 = vpop.f32.mrf.mxu0
      %v2370 = vadd.f32 0.0, %v2369
      %v2371 = vpop.f32.mrf.mxu0
      %2372 = vmatprep.mubr.bf16.mxu0 0
      %2373 = vmatmul.mubr.bf16.gmra.mxu0 %v2316
      %v2374 = vpop.f32.mrf.mxu0
      %v2375 = vadd.f32 0.0, %v2374
      %v2376 = vpop.f32.mrf.mxu0
      %v2377 = vpop.f32.mrf.mxu0
      %v2378 = vadd.f32 0.0, %v2377
      %v2379 = vpop.f32.mrf.mxu0
      %2380 = vmatprep.mubr.bf16.mxu0 0
      %2381 = vmatmul.mubr.bf16.gmra.mxu0 %v2319
      %v2382 = vpop.f32.mrf.mxu0
      %v2383 = vadd.f32 0.0, %v2382
      %v2384 = vpop.f32.mrf.mxu0
      %v2385 = vpop.f32.mrf.mxu0
      %v2386 = vadd.f32 0.0, %v2385
      %v2387 = vpop.f32.mrf.mxu0
      %2388 = vdwg.mxu0
      %v2389 = vadd.f32 %v1385, %v2359
      %v2390 = vadd.f32 %v1386, %v2362
      %v2391 = vadd.f32 %v1387, %v2367
      %v2392 = vadd.f32 %v1388, %v2370
      %v2393 = vadd.f32 %v1389, %v2375
      %v2394 = vadd.f32 %v1390, %v2378
      %v2395 = vadd.f32 %v1391, %v2383
      %v2396 = vadd.f32 %v1392, %v2386
      %2397 = vrot.lane.b32.xlu0 %v433, 112
      %v2398 = vpop.permute.xlu0 %2397
      %2399 = vrot.lane.b32.xlu0 %v441, 112
      %v2400 = vpop.permute.xlu0 %2399
      %v2402 = vsel %vm457, %v2398, 0
      %v2405 = vsel %vm457, %v2400, 0
      %2407 = vmatprep.subr.bf16.mxu0 0
      %2408 = vmatpush1.bf16.xpose.msra.mxu0 0
      %2409 = vmatprep.subr.bf16.mxu0 0
      %2410 = vmatpush1.bf16.xpose.msra.mxu0 0
      %2411 = vmatprep.subr.bf16.mxu0 0
      %2412 = vmatpush1.bf16.xpose.msra.mxu0 0
      %2413 = vmatprep.subr.bf16.mxu0 0
      %2414 = vmatpush1.bf16.xpose.msra.mxu0 0
      %2415 = vmatprep.subr.bf16.mxu0 0
      %2416 = vmatpush1.bf16.xpose.msra.mxu0 0
      %2417 = vmatprep.subr.bf16.mxu0 0
      %2418 = vmatpush1.bf16.xpose.msra.mxu0 0
      %2419 = vmatprep.subr.bf16.mxu0 0
      %2420 = vmatpush1.bf16.xpose.msra.mxu0 0
      %2421 = vmatprep.subr.bf16.mxu0 0
      %2422 = vmatpush1.bf16.xpose.msra.mxu0 %v2405
      %2423 = vmatprep.subr.bf16.mxu0 0
      %2424 = vmatpush2.bf16.xpose.msra.mxu0 0
      %2425 = vmatprep.subr.bf16.mxu0 0
      %2426 = vmatpush2.bf16.xpose.msra.mxu0 0
      %2427 = vmatprep.subr.bf16.mxu0 0
      %2428 = vmatpush2.bf16.xpose.msra.mxu0 0
      %2429 = vmatprep.subr.bf16.mxu0 0
      %2430 = vmatpush2.bf16.xpose.msra.mxu0 0
      %2431 = vmatprep.subr.bf16.mxu0 0
      %2432 = vmatpush2.bf16.xpose.msra.mxu0 0
      %2433 = vmatprep.subr.bf16.mxu0 0
      %2434 = vmatpush2.bf16.xpose.msra.mxu0 0
      %2435 = vmatprep.subr.bf16.mxu0 0
      %2436 = vmatpush2.bf16.xpose.msra.mxu0 0
      %2437 = vmatprep.subr.bf16.mxu0 0
      %2438 = vmatpush2.bf16.xpose.msra.mxu0 0
      %2439 = vmatprep.mubr.bf16.mxu0 0
      %2440 = vmatmul.mubr.bf16.gmra.mxu0 %v2402
      %v2441 = vpop.f32.mrf.mxu0
      %v2442 = vadd.f32 0.0, %v2441
      %v2443 = vpop.f32.mrf.mxu0
      %v2444 = vpop.f32.mrf.mxu0
      %v2445 = vpop.f32.mrf.mxu0
      %2446 = vdwg.mxu0
      %2447 = vrot.lane.b32.xlu0 %v434, 112
      %v2448 = vpop.permute.xlu0 %2447
      %2449 = vrot.lane.b32.xlu0 %v442, 112
      %v2450 = vpop.permute.xlu0 %2449
      %v2452 = vsel %vm457, %v2448, 0
      %v2455 = vsel %vm457, %v2450, 0
      %2457 = vmatprep.subr.bf16.mxu0 0
      %2458 = vmatpush1.bf16.xpose.msra.mxu0 0
      %2459 = vmatprep.subr.bf16.mxu0 0
      %2460 = vmatpush1.bf16.xpose.msra.mxu0 0
      %2461 = vmatprep.subr.bf16.mxu0 0
      %2462 = vmatpush1.bf16.xpose.msra.mxu0 0
      %2463 = vmatprep.subr.bf16.mxu0 0
      %2464 = vmatpush1.bf16.xpose.msra.mxu0 0
      %2465 = vmatprep.subr.bf16.mxu0 0
      %2466 = vmatpush1.bf16.xpose.msra.mxu0 0
      %2467 = vmatprep.subr.bf16.mxu0 0
      %2468 = vmatpush1.bf16.xpose.msra.mxu0 0
      %2469 = vmatprep.subr.bf16.mxu0 0
      %2470 = vmatpush1.bf16.xpose.msra.mxu0 0
      %2471 = vmatprep.subr.bf16.mxu0 0
      %2472 = vmatpush1.bf16.xpose.msra.mxu0 %v2455
      %2473 = vmatprep.subr.bf16.mxu0 0
      %2474 = vmatpush2.bf16.xpose.msra.mxu0 0
      %2475 = vmatprep.subr.bf16.mxu0 0
      %2476 = vmatpush2.bf16.xpose.msra.mxu0 0
      %2477 = vmatprep.subr.bf16.mxu0 0
      %2478 = vmatpush2.bf16.xpose.msra.mxu0 0
      %2479 = vmatprep.subr.bf16.mxu0 0
      %2480 = vmatpush2.bf16.xpose.msra.mxu0 0
      %2481 = vmatprep.subr.bf16.mxu0 0
      %2482 = vmatpush2.bf16.xpose.msra.mxu0 0
      %2483 = vmatprep.subr.bf16.mxu0 0
      %2484 = vmatpush2.bf16.xpose.msra.mxu0 0
      %2485 = vmatprep.subr.bf16.mxu0 0
      %2486 = vmatpush2.bf16.xpose.msra.mxu0 0
      %2487 = vmatprep.subr.bf16.mxu0 0
      %2488 = vmatpush2.bf16.xpose.msra.mxu0 0
      %2489 = vmatprep.mubr.bf16.mxu0 0
      %2490 = vmatmul.mubr.bf16.gmra.mxu0 %v2452
      %v2491 = vpop.f32.mrf.mxu0
      %v2492 = vadd.f32 0.0, %v2491
      %v2493 = vpop.f32.mrf.mxu0
      %v2494 = vpop.f32.mrf.mxu0
      %v2495 = vpop.f32.mrf.mxu0
      %2496 = vdwg.mxu0
      %2497 = vrot.lane.b32.xlu0 %v435, 112
      %v2498 = vpop.permute.xlu0 %2497
      %2499 = vrot.lane.b32.xlu0 %v443, 112
      %v2500 = vpop.permute.xlu0 %2499
      %v2502 = vsel %vm457, %v2498, 0
      %v2505 = vsel %vm457, %v2500, 0
      %2507 = vmatprep.subr.bf16.mxu0 0
      %2508 = vmatpush1.bf16.xpose.msra.mxu0 0
      %2509 = vmatprep.subr.bf16.mxu0 0
      %2510 = vmatpush1.bf16.xpose.msra.mxu0 0
      %2511 = vmatprep.subr.bf16.mxu0 0
      %2512 = vmatpush1.bf16.xpose.msra.mxu0 0
      %2513 = vmatprep.subr.bf16.mxu0 0
      %2514 = vmatpush1.bf16.xpose.msra.mxu0 0
      %2515 = vmatprep.subr.bf16.mxu0 0
      %2516 = vmatpush1.bf16.xpose.msra.mxu0 0
      %2517 = vmatprep.subr.bf16.mxu0 0
      %2518 = vmatpush1.bf16.xpose.msra.mxu0 0
      %2519 = vmatprep.subr.bf16.mxu0 0
      %2520 = vmatpush1.bf16.xpose.msra.mxu0 0
      %2521 = vmatprep.subr.bf16.mxu0 0
      %2522 = vmatpush1.bf16.xpose.msra.mxu0 %v2505
      %2523 = vmatprep.subr.bf16.mxu0 0
      %2524 = vmatpush2.bf16.xpose.msra.mxu0 0
      %2525 = vmatprep.subr.bf16.mxu0 0
      %2526 = vmatpush2.bf16.xpose.msra.mxu0 0
      %2527 = vmatprep.subr.bf16.mxu0 0
      %2528 = vmatpush2.bf16.xpose.msra.mxu0 0
      %2529 = vmatprep.subr.bf16.mxu0 0
      %2530 = vmatpush2.bf16.xpose.msra.mxu0 0
      %2531 = vmatprep.subr.bf16.mxu0 0
      %2532 = vmatpush2.bf16.xpose.msra.mxu0 0
      %2533 = vmatprep.subr.bf16.mxu0 0
      %2534 = vmatpush2.bf16.xpose.msra.mxu0 0
      %2535 = vmatprep.subr.bf16.mxu0 0
      %2536 = vmatpush2.bf16.xpose.msra.mxu0 0
      %2537 = vmatprep.subr.bf16.mxu0 0
      %2538 = vmatpush2.bf16.xpose.msra.mxu0 0
      %2539 = vmatprep.mubr.bf16.mxu0 0
      %2540 = vmatmul.mubr.bf16.gmra.mxu0 %v2502
      %v2541 = vpop.f32.mrf.mxu0
      %v2542 = vadd.f32 0.0, %v2541
      %v2543 = vpop.f32.mrf.mxu0
      %v2544 = vpop.f32.mrf.mxu0
      %v2545 = vpop.f32.mrf.mxu0
      %2546 = vdwg.mxu0
      %2547 = vrot.lane.b32.xlu0 %v436, 112
      %v2548 = vpop.permute.xlu0 %2547
      %2549 = vrot.lane.b32.xlu0 %v444, 112
      %v2550 = vpop.permute.xlu0 %2549
      %v2552 = vsel %vm457, %v2548, 0
      %v2555 = vsel %vm457, %v2550, 0
      %2557 = vmatprep.subr.bf16.mxu0 0
      %2558 = vmatpush1.bf16.xpose.msra.mxu0 0
      %2559 = vmatprep.subr.bf16.mxu0 0
      %2560 = vmatpush1.bf16.xpose.msra.mxu0 0
      %2561 = vmatprep.subr.bf16.mxu0 0
      %2562 = vmatpush1.bf16.xpose.msra.mxu0 0
      %2563 = vmatprep.subr.bf16.mxu0 0
      %2564 = vmatpush1.bf16.xpose.msra.mxu0 0
      %2565 = vmatprep.subr.bf16.mxu0 0
      %2566 = vmatpush1.bf16.xpose.msra.mxu0 0
      %2567 = vmatprep.subr.bf16.mxu0 0
      %2568 = vmatpush1.bf16.xpose.msra.mxu0 0
      %2569 = vmatprep.subr.bf16.mxu0 0
      %2570 = vmatpush1.bf16.xpose.msra.mxu0 0
      %2571 = vmatprep.subr.bf16.mxu0 0
      %2572 = vmatpush1.bf16.xpose.msra.mxu0 %v2555
      %2573 = vmatprep.subr.bf16.mxu0 0
      %2574 = vmatpush2.bf16.xpose.msra.mxu0 0
      %2575 = vmatprep.subr.bf16.mxu0 0
      %2576 = vmatpush2.bf16.xpose.msra.mxu0 0
      %2577 = vmatprep.subr.bf16.mxu0 0
      %2578 = vmatpush2.bf16.xpose.msra.mxu0 0
      %2579 = vmatprep.subr.bf16.mxu0 0
      %2580 = vmatpush2.bf16.xpose.msra.mxu0 0
      %2581 = vmatprep.subr.bf16.mxu0 0
      %2582 = vmatpush2.bf16.xpose.msra.mxu0 0
      %2583 = vmatprep.subr.bf16.mxu0 0
      %2584 = vmatpush2.bf16.xpose.msra.mxu0 0
      %2585 = vmatprep.subr.bf16.mxu0 0
      %2586 = vmatpush2.bf16.xpose.msra.mxu0 0
      %2587 = vmatprep.subr.bf16.mxu0 0
      %2588 = vmatpush2.bf16.xpose.msra.mxu0 0
      %2589 = vmatprep.mubr.bf16.mxu0 0
      %2590 = vmatmul.mubr.bf16.gmra.mxu0 %v2552
      %v2591 = vpop.f32.mrf.mxu0
      %v2592 = vadd.f32 0.0, %v2591
      %v2593 = vpop.f32.mrf.mxu0
      %v2594 = vpop.f32.mrf.mxu0
      %v2595 = vpop.f32.mrf.mxu0
      %2596 = vdwg.mxu0
      %2597 = vrot.lane.b32.xlu0 %v437, 112
      %v2598 = vpop.permute.xlu0 %2597
      %2599 = vrot.lane.b32.xlu0 %v445, 112
      %v2600 = vpop.permute.xlu0 %2599
      %v2602 = vsel %vm457, %v2598, 0
      %v2605 = vsel %vm457, %v2600, 0
      %2607 = vmatprep.subr.bf16.mxu0 0
      %2608 = vmatpush1.bf16.xpose.msra.mxu0 0
      %2609 = vmatprep.subr.bf16.mxu0 0
      %2610 = vmatpush1.bf16.xpose.msra.mxu0 0
      %2611 = vmatprep.subr.bf16.mxu0 0
      %2612 = vmatpush1.bf16.xpose.msra.mxu0 0
      %2613 = vmatprep.subr.bf16.mxu0 0
      %2614 = vmatpush1.bf16.xpose.msra.mxu0 0
      %2615 = vmatprep.subr.bf16.mxu0 0
      %2616 = vmatpush1.bf16.xpose.msra.mxu0 0
      %2617 = vmatprep.subr.bf16.mxu0 0
      %2618 = vmatpush1.bf16.xpose.msra.mxu0 0
      %2619 = vmatprep.subr.bf16.mxu0 0
      %2620 = vmatpush1.bf16.xpose.msra.mxu0 0
      %2621 = vmatprep.subr.bf16.mxu0 0
      %2622 = vmatpush1.bf16.xpose.msra.mxu0 %v2605
      %2623 = vmatprep.subr.bf16.mxu0 0
      %2624 = vmatpush2.bf16.xpose.msra.mxu0 0
      %2625 = vmatprep.subr.bf16.mxu0 0
      %2626 = vmatpush2.bf16.xpose.msra.mxu0 0
      %2627 = vmatprep.subr.bf16.mxu0 0
      %2628 = vmatpush2.bf16.xpose.msra.mxu0 0
      %2629 = vmatprep.subr.bf16.mxu0 0
      %2630 = vmatpush2.bf16.xpose.msra.mxu0 0
      %2631 = vmatprep.subr.bf16.mxu0 0
      %2632 = vmatpush2.bf16.xpose.msra.mxu0 0
      %2633 = vmatprep.subr.bf16.mxu0 0
      %2634 = vmatpush2.bf16.xpose.msra.mxu0 0
      %2635 = vmatprep.subr.bf16.mxu0 0
      %2636 = vmatpush2.bf16.xpose.msra.mxu0 0
      %2637 = vmatprep.subr.bf16.mxu0 0
      %2638 = vmatpush2.bf16.xpose.msra.mxu0 0
      %2639 = vmatprep.mubr.bf16.mxu0 0
      %2640 = vmatmul.mubr.bf16.gmra.mxu0 %v2602
      %v2641 = vpop.f32.mrf.mxu0
      %v2642 = vadd.f32 0.0, %v2641
      %v2643 = vpop.f32.mrf.mxu0
      %v2644 = vpop.f32.mrf.mxu0
      %v2645 = vpop.f32.mrf.mxu0
      %2646 = vdwg.mxu0
      %2647 = vrot.lane.b32.xlu0 %v438, 112
      %v2648 = vpop.permute.xlu0 %2647
      %2649 = vrot.lane.b32.xlu0 %v446, 112
      %v2650 = vpop.permute.xlu0 %2649
      %v2652 = vsel %vm457, %v2648, 0
      %v2655 = vsel %vm457, %v2650, 0
      %2657 = vmatprep.subr.bf16.mxu0 0
      %2658 = vmatpush1.bf16.xpose.msra.mxu0 0
      %2659 = vmatprep.subr.bf16.mxu0 0
      %2660 = vmatpush1.bf16.xpose.msra.mxu0 0
      %2661 = vmatprep.subr.bf16.mxu0 0
      %2662 = vmatpush1.bf16.xpose.msra.mxu0 0
      %2663 = vmatprep.subr.bf16.mxu0 0
      %2664 = vmatpush1.bf16.xpose.msra.mxu0 0
      %2665 = vmatprep.subr.bf16.mxu0 0
      %2666 = vmatpush1.bf16.xpose.msra.mxu0 0
      %2667 = vmatprep.subr.bf16.mxu0 0
      %2668 = vmatpush1.bf16.xpose.msra.mxu0 0
      %2669 = vmatprep.subr.bf16.mxu0 0
      %2670 = vmatpush1.bf16.xpose.msra.mxu0 0
      %2671 = vmatprep.subr.bf16.mxu0 0
      %2672 = vmatpush1.bf16.xpose.msra.mxu0 %v2655
      %2673 = vmatprep.subr.bf16.mxu0 0
      %2674 = vmatpush2.bf16.xpose.msra.mxu0 0
      %2675 = vmatprep.subr.bf16.mxu0 0
      %2676 = vmatpush2.bf16.xpose.msra.mxu0 0
      %2677 = vmatprep.subr.bf16.mxu0 0
      %2678 = vmatpush2.bf16.xpose.msra.mxu0 0
      %2679 = vmatprep.subr.bf16.mxu0 0
      %2680 = vmatpush2.bf16.xpose.msra.mxu0 0
      %2681 = vmatprep.subr.bf16.mxu0 0
      %2682 = vmatpush2.bf16.xpose.msra.mxu0 0
      %2683 = vmatprep.subr.bf16.mxu0 0
      %2684 = vmatpush2.bf16.xpose.msra.mxu0 0
      %2685 = vmatprep.subr.bf16.mxu0 0
      %2686 = vmatpush2.bf16.xpose.msra.mxu0 0
      %2687 = vmatprep.subr.bf16.mxu0 0
      %2688 = vmatpush2.bf16.xpose.msra.mxu0 0
      %2689 = vmatprep.mubr.bf16.mxu0 0
      %2690 = vmatmul.mubr.bf16.gmra.mxu0 %v2652
      %v2691 = vpop.f32.mrf.mxu0
      %v2692 = vadd.f32 0.0, %v2691
      %v2693 = vpop.f32.mrf.mxu0
      %v2694 = vpop.f32.mrf.mxu0
      %v2695 = vpop.f32.mrf.mxu0
      %2696 = vdwg.mxu0
      %2697 = vrot.lane.b32.xlu0 %v439, 112
      %v2698 = vpop.permute.xlu0 %2697
      %2699 = vrot.lane.b32.xlu0 %v447, 112
      %v2700 = vpop.permute.xlu0 %2699
      %v2702 = vsel %vm457, %v2698, 0
      %v2705 = vsel %vm457, %v2700, 0
      %2707 = vmatprep.subr.bf16.mxu0 0
      %2708 = vmatpush1.bf16.xpose.msra.mxu0 0
      %2709 = vmatprep.subr.bf16.mxu0 0
      %2710 = vmatpush1.bf16.xpose.msra.mxu0 0
      %2711 = vmatprep.subr.bf16.mxu0 0
      %2712 = vmatpush1.bf16.xpose.msra.mxu0 0
      %2713 = vmatprep.subr.bf16.mxu0 0
      %2714 = vmatpush1.bf16.xpose.msra.mxu0 0
      %2715 = vmatprep.subr.bf16.mxu0 0
      %2716 = vmatpush1.bf16.xpose.msra.mxu0 0
      %2717 = vmatprep.subr.bf16.mxu0 0
      %2718 = vmatpush1.bf16.xpose.msra.mxu0 0
      %2719 = vmatprep.subr.bf16.mxu0 0
      %2720 = vmatpush1.bf16.xpose.msra.mxu0 0
      %2721 = vmatprep.subr.bf16.mxu0 0
      %2722 = vmatpush1.bf16.xpose.msra.mxu0 %v2705
      %2723 = vmatprep.subr.bf16.mxu0 0
      %2724 = vmatpush2.bf16.xpose.msra.mxu0 0
      %2725 = vmatprep.subr.bf16.mxu0 0
      %2726 = vmatpush2.bf16.xpose.msra.mxu0 0
      %2727 = vmatprep.subr.bf16.mxu0 0
      %2728 = vmatpush2.bf16.xpose.msra.mxu0 0
      %2729 = vmatprep.subr.bf16.mxu0 0
      %2730 = vmatpush2.bf16.xpose.msra.mxu0 0
      %2731 = vmatprep.subr.bf16.mxu0 0
      %2732 = vmatpush2.bf16.xpose.msra.mxu0 0
      %2733 = vmatprep.subr.bf16.mxu0 0
      %2734 = vmatpush2.bf16.xpose.msra.mxu0 0
      %2735 = vmatprep.subr.bf16.mxu0 0
      %2736 = vmatpush2.bf16.xpose.msra.mxu0 0
      %2737 = vmatprep.subr.bf16.mxu0 0
      %2738 = vmatpush2.bf16.xpose.msra.mxu0 0
      %2739 = vmatprep.mubr.bf16.mxu0 0
      %2740 = vmatmul.mubr.bf16.gmra.mxu0 %v2702
      %v2741 = vpop.f32.mrf.mxu0
      %v2742 = vadd.f32 0.0, %v2741
      %v2743 = vpop.f32.mrf.mxu0
      %v2744 = vpop.f32.mrf.mxu0
      %v2745 = vpop.f32.mrf.mxu0
      %2746 = vdwg.mxu0
      %2747 = vrot.lane.b32.xlu0 %v440, 112
      %v2748 = vpop.permute.xlu0 %2747
      %2749 = vrot.lane.b32.xlu0 %v448, 112
      %v2750 = vpop.permute.xlu0 %2749
      %v2752 = vsel %vm457, %v2748, 0
      %v2755 = vsel %vm457, %v2750, 0
      %2757 = vmatprep.subr.bf16.mxu0 0
      %2758 = vmatpush1.bf16.xpose.msra.mxu0 0
      %2759 = vmatprep.subr.bf16.mxu0 0
      %2760 = vmatpush1.bf16.xpose.msra.mxu0 0
      %2761 = vmatprep.subr.bf16.mxu0 0
      %2762 = vmatpush1.bf16.xpose.msra.mxu0 0
      %2763 = vmatprep.subr.bf16.mxu0 0
      %2764 = vmatpush1.bf16.xpose.msra.mxu0 0
      %2765 = vmatprep.subr.bf16.mxu0 0
      %2766 = vmatpush1.bf16.xpose.msra.mxu0 0
      %2767 = vmatprep.subr.bf16.mxu0 0
      %2768 = vmatpush1.bf16.xpose.msra.mxu0 0
      %2769 = vmatprep.subr.bf16.mxu0 0
      %2770 = vmatpush1.bf16.xpose.msra.mxu0 0
      %2771 = vmatprep.subr.bf16.mxu0 0
      %2772 = vmatpush1.bf16.xpose.msra.mxu0 %v2755
      %2773 = vmatprep.subr.bf16.mxu0 0
      %2774 = vmatpush2.bf16.xpose.msra.mxu0 0
      %2775 = vmatprep.subr.bf16.mxu0 0
      %2776 = vmatpush2.bf16.xpose.msra.mxu0 0
      %2777 = vmatprep.subr.bf16.mxu0 0
      %2778 = vmatpush2.bf16.xpose.msra.mxu0 0
      %2779 = vmatprep.subr.bf16.mxu0 0
      %2780 = vmatpush2.bf16.xpose.msra.mxu0 0
      %2781 = vmatprep.subr.bf16.mxu0 0
      %2782 = vmatpush2.bf16.xpose.msra.mxu0 0
      %2783 = vmatprep.subr.bf16.mxu0 0
      %2784 = vmatpush2.bf16.xpose.msra.mxu0 0
      %2785 = vmatprep.subr.bf16.mxu0 0
      %2786 = vmatpush2.bf16.xpose.msra.mxu0 0
      %2787 = vmatprep.subr.bf16.mxu0 0
      %2788 = vmatpush2.bf16.xpose.msra.mxu0 0
      %2789 = vmatprep.mubr.bf16.mxu0 0
      %2790 = vmatmul.mubr.bf16.gmra.mxu0 %v2752
      %v2791 = vpop.f32.mrf.mxu0
      %v2792 = vadd.f32 0.0, %v2791
      %v2793 = vpop.f32.mrf.mxu0
      %v2794 = vpop.f32.mrf.mxu0
      %v2795 = vpop.f32.mrf.mxu0
      %2796 = vdwg.mxu0
      %v2797 = vsel %vm827, %v2442, -1e+30
      %v2798 = vsel %vm827, %v2492, -1e+30
      %v2799 = vsel %vm827, %v2542, -1e+30
      %v2800 = vsel %vm827, %v2592, -1e+30
      %v2801 = vsel %vm827, %v2642, -1e+30
      %v2802 = vsel %vm827, %v2692, -1e+30
      %v2803 = vsel %vm827, %v2742, -1e+30
      %v2804 = vsel %vm827, %v2792, -1e+30
      %v2805 = vsel %vm457, %v2797, -inf
      %2806 = vmax.xlane.f32.xlu0 %v2805
      %v2807 = vpop.xlane.xlu0 %2806
      %v2808 = vsel %vm457, %v2798, -inf
      %2809 = vmax.xlane.f32.xlu0 %v2808
      %v2810 = vpop.xlane.xlu0 %2809
      %v2811 = vsel %vm457, %v2799, -inf
      %2812 = vmax.xlane.f32.xlu0 %v2811
      %v2813 = vpop.xlane.xlu0 %2812
      %v2814 = vsel %vm457, %v2800, -inf
      %2815 = vmax.xlane.f32.xlu0 %v2814
      %v2816 = vpop.xlane.xlu0 %2815
      %v2817 = vsel %vm457, %v2801, -inf
      %2818 = vmax.xlane.f32.xlu0 %v2817
      %v2819 = vpop.xlane.xlu0 %2818
      %v2820 = vsel %vm457, %v2802, -inf
      %2821 = vmax.xlane.f32.xlu0 %v2820
      %v2822 = vpop.xlane.xlu0 %2821
      %v2823 = vsel %vm457, %v2803, -inf
      %2824 = vmax.xlane.f32.xlu0 %v2823
      %v2825 = vpop.xlane.xlu0 %2824
      %v2826 = vsel %vm457, %v2804, -inf
      %2827 = vmax.xlane.f32.xlu0 %v2826
      %v2828 = vpop.xlane.xlu0 %2827
      %v2829 = vsub.f32 %v2797, %v2807
      %v2830 = vsub.f32 %v2798, %v2810
      %v2831 = vsub.f32 %v2799, %v2813
      %v2832 = vsub.f32 %v2800, %v2816
      %v2833 = vsub.f32 %v2801, %v2819
      %v2834 = vsub.f32 %v2802, %v2822
      %v2835 = vsub.f32 %v2803, %v2825
      %v2836 = vsub.f32 %v2804, %v2828
      %v2837 = vmul.f32 %v2829, 1.442695
      %v2838 = vpow.pop %v2837
      %v2839 = vmul.f32 %v2830, 1.442695
      %v2840 = vpow.pop %v2839
      %v2841 = vmul.f32 %v2831, 1.442695
      %v2842 = vpow.pop %v2841
      %v2843 = vmul.f32 %v2832, 1.442695
      %v2844 = vpow.pop %v2843
      %v2845 = vmul.f32 %v2833, 1.442695
      %v2846 = vpow.pop %v2845
      %v2847 = vmul.f32 %v2834, 1.442695
      %v2848 = vpow.pop %v2847
      %v2849 = vmul.f32 %v2835, 1.442695
      %v2850 = vpow.pop %v2849
      %v2851 = vmul.f32 %v2836, 1.442695
      %v2852 = vpow.pop %v2851
      %v2853 = vsel %vm457, %v2838, 0.0
      %2854 = vadd.xlane.f32.xlu0 %v2853
      %v2855 = vpop.xlane.xlu0 %2854
      %v2856 = vsel %vm457, %v2840, 0.0
      %2857 = vadd.xlane.f32.xlu0 %v2856
      %v2858 = vpop.xlane.xlu0 %2857
      %v2859 = vsel %vm457, %v2842, 0.0
      %2860 = vadd.xlane.f32.xlu0 %v2859
      %v2861 = vpop.xlane.xlu0 %2860
      %v2862 = vsel %vm457, %v2844, 0.0
      %2863 = vadd.xlane.f32.xlu0 %v2862
      %v2864 = vpop.xlane.xlu0 %2863
      %v2865 = vsel %vm457, %v2846, 0.0
      %2866 = vadd.xlane.f32.xlu0 %v2865
      %v2867 = vpop.xlane.xlu0 %2866
      %v2868 = vsel %vm457, %v2848, 0.0
      %2869 = vadd.xlane.f32.xlu0 %v2868
      %v2870 = vpop.xlane.xlu0 %2869
      %v2871 = vsel %vm457, %v2850, 0.0
      %2872 = vadd.xlane.f32.xlu0 %v2871
      %v2873 = vpop.xlane.xlu0 %2872
      %v2874 = vsel %vm457, %v2852, 0.0
      %2875 = vadd.xlane.f32.xlu0 %v2874
      %v2876 = vpop.xlane.xlu0 %2875
      %v2877 = vrcp.pop %v2855
      %v2878 = vrcp.pop %v2858
      %v2879 = vrcp.pop %v2861
      %v2880 = vrcp.pop %v2864
      %v2881 = vrcp.pop %v2867
      %v2882 = vrcp.pop %v2870
      %v2883 = vrcp.pop %v2873
      %v2884 = vrcp.pop %v2876
      %v2885 = vmul.f32 %v2838, %v2877
      %v2886 = vmul.f32 %v2840, %v2878
      %v2887 = vmul.f32 %v2842, %v2879
      %v2888 = vmul.f32 %v2844, %v2880
      %v2889 = vmul.f32 %v2846, %v2881
      %v2890 = vmul.f32 %v2848, %v2882
      %v2891 = vmul.f32 %v2850, %v2883
      %v2892 = vmul.f32 %v2852, %v2884
      %v2893 = vpack.c.bf16 %v2885, %v2885
      %v2894 = vpack.c.bf16 %v2886, %v2886
      %v2895 = vpack.c.bf16 %v2887, %v2887
      %v2896 = vpack.c.bf16 %v2888, %v2888
      %v2897 = vpack.c.bf16 %v2889, %v2889
      %v2898 = vpack.c.bf16 %v2890, %v2890
      %v2899 = vpack.c.bf16 %v2891, %v2891
      %v2900 = vpack.c.bf16 %v2892, %v2892
      %2901 = vrot.lane.b32.xlu0 %v449, 112
      %v2902 = vpop.permute.xlu0 %2901
      %v2904 = vsel %vm457, %v2893, 0
      %v2907 = vsel %vm935, %v2902, 0
      %2909 = vmatprep.subr.bf16.mxu0 0
      %2910 = vmatpush1.bf16.msra.mxu0 0
      %2911 = vmatprep.subr.bf16.mxu0 0
      %2912 = vmatpush1.bf16.msra.mxu0 0
      %2913 = vmatprep.subr.bf16.mxu0 0
      %2914 = vmatpush1.bf16.msra.mxu0 0
      %2915 = vmatprep.subr.bf16.mxu0 0
      %2916 = vmatpush1.bf16.msra.mxu0 0
      %2917 = vmatprep.subr.bf16.mxu0 0
      %2918 = vmatpush1.bf16.msra.mxu0 0
      %2919 = vmatprep.subr.bf16.mxu0 0
      %2920 = vmatpush1.bf16.msra.mxu0 0
      %2921 = vmatprep.subr.bf16.mxu0 0
      %2922 = vmatpush1.bf16.msra.mxu0 0
      %2923 = vmatprep.subr.bf16.mxu0 0
      %2924 = vmatpush1.bf16.msra.mxu0 %v2907
      %2925 = vmatprep.subr.bf16.mxu0 0
      %2926 = vmatpush2.bf16.msra.mxu0 0
      %2927 = vmatprep.subr.bf16.mxu0 0
      %2928 = vmatpush2.bf16.msra.mxu0 0
      %2929 = vmatprep.subr.bf16.mxu0 0
      %2930 = vmatpush2.bf16.msra.mxu0 0
      %2931 = vmatprep.subr.bf16.mxu0 0
      %2932 = vmatpush2.bf16.msra.mxu0 0
      %2933 = vmatprep.subr.bf16.mxu0 0
      %2934 = vmatpush2.bf16.msra.mxu0 0
      %2935 = vmatprep.subr.bf16.mxu0 0
      %2936 = vmatpush2.bf16.msra.mxu0 0
      %2937 = vmatprep.subr.bf16.mxu0 0
      %2938 = vmatpush2.bf16.msra.mxu0 0
      %2939 = vmatprep.subr.bf16.mxu0 0
      %2940 = vmatpush2.bf16.msra.mxu0 0
      %2941 = vmatprep.mubr.bf16.mxu0 0
      %2942 = vmatmul.mubr.bf16.gmra.mxu0 %v2904
      %v2943 = vpop.f32.mrf.mxu0
      %v2944 = vadd.f32 0.0, %v2943
      %v2945 = vpop.f32.mrf.mxu0
      %v2946 = vpop.f32.mrf.mxu0
      %v2947 = vpop.f32.mrf.mxu0
      %2948 = vdwg.mxu0
      %2949 = vrot.lane.b32.xlu0 %v450, 112
      %v2950 = vpop.permute.xlu0 %2949
      %v2952 = vsel %vm457, %v2894, 0
      %v2955 = vsel %vm935, %v2950, 0
      %2957 = vmatprep.subr.bf16.mxu0 0
      %2958 = vmatpush1.bf16.msra.mxu0 0
      %2959 = vmatprep.subr.bf16.mxu0 0
      %2960 = vmatpush1.bf16.msra.mxu0 0
      %2961 = vmatprep.subr.bf16.mxu0 0
      %2962 = vmatpush1.bf16.msra.mxu0 0
      %2963 = vmatprep.subr.bf16.mxu0 0
      %2964 = vmatpush1.bf16.msra.mxu0 0
      %2965 = vmatprep.subr.bf16.mxu0 0
      %2966 = vmatpush1.bf16.msra.mxu0 0
      %2967 = vmatprep.subr.bf16.mxu0 0
      %2968 = vmatpush1.bf16.msra.mxu0 0
      %2969 = vmatprep.subr.bf16.mxu0 0
      %2970 = vmatpush1.bf16.msra.mxu0 0
      %2971 = vmatprep.subr.bf16.mxu0 0
      %2972 = vmatpush1.bf16.msra.mxu0 %v2955
      %2973 = vmatprep.subr.bf16.mxu0 0
      %2974 = vmatpush2.bf16.msra.mxu0 0
      %2975 = vmatprep.subr.bf16.mxu0 0
      %2976 = vmatpush2.bf16.msra.mxu0 0
      %2977 = vmatprep.subr.bf16.mxu0 0
      %2978 = vmatpush2.bf16.msra.mxu0 0
      %2979 = vmatprep.subr.bf16.mxu0 0
      %2980 = vmatpush2.bf16.msra.mxu0 0
      %2981 = vmatprep.subr.bf16.mxu0 0
      %2982 = vmatpush2.bf16.msra.mxu0 0
      %2983 = vmatprep.subr.bf16.mxu0 0
      %2984 = vmatpush2.bf16.msra.mxu0 0
      %2985 = vmatprep.subr.bf16.mxu0 0
      %2986 = vmatpush2.bf16.msra.mxu0 0
      %2987 = vmatprep.subr.bf16.mxu0 0
      %2988 = vmatpush2.bf16.msra.mxu0 0
      %2989 = vmatprep.mubr.bf16.mxu0 0
      %2990 = vmatmul.mubr.bf16.gmra.mxu0 %v2952
      %v2991 = vpop.f32.mrf.mxu0
      %v2992 = vadd.f32 0.0, %v2991
      %v2993 = vpop.f32.mrf.mxu0
      %v2994 = vpop.f32.mrf.mxu0
      %v2995 = vpop.f32.mrf.mxu0
      %2996 = vdwg.mxu0
      %2997 = vrot.lane.b32.xlu0 %v451, 112
      %v2998 = vpop.permute.xlu0 %2997
      %v3000 = vsel %vm457, %v2895, 0
      %v3003 = vsel %vm935, %v2998, 0
      %3005 = vmatprep.subr.bf16.mxu0 0
      %3006 = vmatpush1.bf16.msra.mxu0 0
      %3007 = vmatprep.subr.bf16.mxu0 0
      %3008 = vmatpush1.bf16.msra.mxu0 0
      %3009 = vmatprep.subr.bf16.mxu0 0
      %3010 = vmatpush1.bf16.msra.mxu0 0
      %3011 = vmatprep.subr.bf16.mxu0 0
      %3012 = vmatpush1.bf16.msra.mxu0 0
      %3013 = vmatprep.subr.bf16.mxu0 0
      %3014 = vmatpush1.bf16.msra.mxu0 0
      %3015 = vmatprep.subr.bf16.mxu0 0
      %3016 = vmatpush1.bf16.msra.mxu0 0
      %3017 = vmatprep.subr.bf16.mxu0 0
      %3018 = vmatpush1.bf16.msra.mxu0 0
      %3019 = vmatprep.subr.bf16.mxu0 0
      %3020 = vmatpush1.bf16.msra.mxu0 %v3003
      %3021 = vmatprep.subr.bf16.mxu0 0
      %3022 = vmatpush2.bf16.msra.mxu0 0
      %3023 = vmatprep.subr.bf16.mxu0 0
      %3024 = vmatpush2.bf16.msra.mxu0 0
      %3025 = vmatprep.subr.bf16.mxu0 0
      %3026 = vmatpush2.bf16.msra.mxu0 0
      %3027 = vmatprep.subr.bf16.mxu0 0
      %3028 = vmatpush2.bf16.msra.mxu0 0
      %3029 = vmatprep.subr.bf16.mxu0 0
      %3030 = vmatpush2.bf16.msra.mxu0 0
      %3031 = vmatprep.subr.bf16.mxu0 0
      %3032 = vmatpush2.bf16.msra.mxu0 0
      %3033 = vmatprep.subr.bf16.mxu0 0
      %3034 = vmatpush2.bf16.msra.mxu0 0
      %3035 = vmatprep.subr.bf16.mxu0 0
      %3036 = vmatpush2.bf16.msra.mxu0 0
      %3037 = vmatprep.mubr.bf16.mxu0 0
      %3038 = vmatmul.mubr.bf16.gmra.mxu0 %v3000
      %v3039 = vpop.f32.mrf.mxu0
      %v3040 = vadd.f32 0.0, %v3039
      %v3041 = vpop.f32.mrf.mxu0
      %v3042 = vpop.f32.mrf.mxu0
      %v3043 = vpop.f32.mrf.mxu0
      %3044 = vdwg.mxu0
      %3045 = vrot.lane.b32.xlu0 %v452, 112
      %v3046 = vpop.permute.xlu0 %3045
      %v3048 = vsel %vm457, %v2896, 0
      %v3051 = vsel %vm935, %v3046, 0
      %3053 = vmatprep.subr.bf16.mxu0 0
      %3054 = vmatpush1.bf16.msra.mxu0 0
      %3055 = vmatprep.subr.bf16.mxu0 0
      %3056 = vmatpush1.bf16.msra.mxu0 0
      %3057 = vmatprep.subr.bf16.mxu0 0
      %3058 = vmatpush1.bf16.msra.mxu0 0
      %3059 = vmatprep.subr.bf16.mxu0 0
      %3060 = vmatpush1.bf16.msra.mxu0 0
      %3061 = vmatprep.subr.bf16.mxu0 0
      %3062 = vmatpush1.bf16.msra.mxu0 0
      %3063 = vmatprep.subr.bf16.mxu0 0
      %3064 = vmatpush1.bf16.msra.mxu0 0
      %3065 = vmatprep.subr.bf16.mxu0 0
      %3066 = vmatpush1.bf16.msra.mxu0 0
      %3067 = vmatprep.subr.bf16.mxu0 0
      %3068 = vmatpush1.bf16.msra.mxu0 %v3051
      %3069 = vmatprep.subr.bf16.mxu0 0
      %3070 = vmatpush2.bf16.msra.mxu0 0
      %3071 = vmatprep.subr.bf16.mxu0 0
      %3072 = vmatpush2.bf16.msra.mxu0 0
      %3073 = vmatprep.subr.bf16.mxu0 0
      %3074 = vmatpush2.bf16.msra.mxu0 0
      %3075 = vmatprep.subr.bf16.mxu0 0
      %3076 = vmatpush2.bf16.msra.mxu0 0
      %3077 = vmatprep.subr.bf16.mxu0 0
      %3078 = vmatpush2.bf16.msra.mxu0 0
      %3079 = vmatprep.subr.bf16.mxu0 0
      %3080 = vmatpush2.bf16.msra.mxu0 0
      %3081 = vmatprep.subr.bf16.mxu0 0
      %3082 = vmatpush2.bf16.msra.mxu0 0
      %3083 = vmatprep.subr.bf16.mxu0 0
      %3084 = vmatpush2.bf16.msra.mxu0 0
      %3085 = vmatprep.mubr.bf16.mxu0 0
      %3086 = vmatmul.mubr.bf16.gmra.mxu0 %v3048
      %v3087 = vpop.f32.mrf.mxu0
      %v3088 = vadd.f32 0.0, %v3087
      %v3089 = vpop.f32.mrf.mxu0
      %v3090 = vpop.f32.mrf.mxu0
      %v3091 = vpop.f32.mrf.mxu0
      %3092 = vdwg.mxu0
      %3093 = vrot.lane.b32.xlu0 %v453, 112
      %v3094 = vpop.permute.xlu0 %3093
      %v3096 = vsel %vm457, %v2897, 0
      %v3099 = vsel %vm935, %v3094, 0
      %3101 = vmatprep.subr.bf16.mxu0 0
      %3102 = vmatpush1.bf16.msra.mxu0 0
      %3103 = vmatprep.subr.bf16.mxu0 0
      %3104 = vmatpush1.bf16.msra.mxu0 0
      %3105 = vmatprep.subr.bf16.mxu0 0
      %3106 = vmatpush1.bf16.msra.mxu0 0
      %3107 = vmatprep.subr.bf16.mxu0 0
      %3108 = vmatpush1.bf16.msra.mxu0 0
      %3109 = vmatprep.subr.bf16.mxu0 0
      %3110 = vmatpush1.bf16.msra.mxu0 0
      %3111 = vmatprep.subr.bf16.mxu0 0
      %3112 = vmatpush1.bf16.msra.mxu0 0
      %3113 = vmatprep.subr.bf16.mxu0 0
      %3114 = vmatpush1.bf16.msra.mxu0 0
      %3115 = vmatprep.subr.bf16.mxu0 0
      %3116 = vmatpush1.bf16.msra.mxu0 %v3099
      %3117 = vmatprep.subr.bf16.mxu0 0
      %3118 = vmatpush2.bf16.msra.mxu0 0
      %3119 = vmatprep.subr.bf16.mxu0 0
      %3120 = vmatpush2.bf16.msra.mxu0 0
      %3121 = vmatprep.subr.bf16.mxu0 0
      %3122 = vmatpush2.bf16.msra.mxu0 0
      %3123 = vmatprep.subr.bf16.mxu0 0
      %3124 = vmatpush2.bf16.msra.mxu0 0
      %3125 = vmatprep.subr.bf16.mxu0 0
      %3126 = vmatpush2.bf16.msra.mxu0 0
      %3127 = vmatprep.subr.bf16.mxu0 0
      %3128 = vmatpush2.bf16.msra.mxu0 0
      %3129 = vmatprep.subr.bf16.mxu0 0
      %3130 = vmatpush2.bf16.msra.mxu0 0
      %3131 = vmatprep.subr.bf16.mxu0 0
      %3132 = vmatpush2.bf16.msra.mxu0 0
      %3133 = vmatprep.mubr.bf16.mxu0 0
      %3134 = vmatmul.mubr.bf16.gmra.mxu0 %v3096
      %v3135 = vpop.f32.mrf.mxu0
      %v3136 = vadd.f32 0.0, %v3135
      %v3137 = vpop.f32.mrf.mxu0
      %v3138 = vpop.f32.mrf.mxu0
      %v3139 = vpop.f32.mrf.mxu0
      %3140 = vdwg.mxu0
      %3141 = vrot.lane.b32.xlu0 %v454, 112
      %v3142 = vpop.permute.xlu0 %3141
      %v3144 = vsel %vm457, %v2898, 0
      %v3147 = vsel %vm935, %v3142, 0
      %3149 = vmatprep.subr.bf16.mxu0 0
      %3150 = vmatpush1.bf16.msra.mxu0 0
      %3151 = vmatprep.subr.bf16.mxu0 0
      %3152 = vmatpush1.bf16.msra.mxu0 0
      %3153 = vmatprep.subr.bf16.mxu0 0
      %3154 = vmatpush1.bf16.msra.mxu0 0
      %3155 = vmatprep.subr.bf16.mxu0 0
      %3156 = vmatpush1.bf16.msra.mxu0 0
      %3157 = vmatprep.subr.bf16.mxu0 0
      %3158 = vmatpush1.bf16.msra.mxu0 0
      %3159 = vmatprep.subr.bf16.mxu0 0
      %3160 = vmatpush1.bf16.msra.mxu0 0
      %3161 = vmatprep.subr.bf16.mxu0 0
      %3162 = vmatpush1.bf16.msra.mxu0 0
      %3163 = vmatprep.subr.bf16.mxu0 0
      %3164 = vmatpush1.bf16.msra.mxu0 %v3147
      %3165 = vmatprep.subr.bf16.mxu0 0
      %3166 = vmatpush2.bf16.msra.mxu0 0
      %3167 = vmatprep.subr.bf16.mxu0 0
      %3168 = vmatpush2.bf16.msra.mxu0 0
      %3169 = vmatprep.subr.bf16.mxu0 0
      %3170 = vmatpush2.bf16.msra.mxu0 0
      %3171 = vmatprep.subr.bf16.mxu0 0
      %3172 = vmatpush2.bf16.msra.mxu0 0
      %3173 = vmatprep.subr.bf16.mxu0 0
      %3174 = vmatpush2.bf16.msra.mxu0 0
      %3175 = vmatprep.subr.bf16.mxu0 0
      %3176 = vmatpush2.bf16.msra.mxu0 0
      %3177 = vmatprep.subr.bf16.mxu0 0
      %3178 = vmatpush2.bf16.msra.mxu0 0
      %3179 = vmatprep.subr.bf16.mxu0 0
      %3180 = vmatpush2.bf16.msra.mxu0 0
      %3181 = vmatprep.mubr.bf16.mxu0 0
      %3182 = vmatmul.mubr.bf16.gmra.mxu0 %v3144
      %v3183 = vpop.f32.mrf.mxu0
      %v3184 = vadd.f32 0.0, %v3183
      %v3185 = vpop.f32.mrf.mxu0
      %v3186 = vpop.f32.mrf.mxu0
      %v3187 = vpop.f32.mrf.mxu0
      %3188 = vdwg.mxu0
      %3189 = vrot.lane.b32.xlu0 %v455, 112
      %v3190 = vpop.permute.xlu0 %3189
      %v3192 = vsel %vm457, %v2899, 0
      %v3195 = vsel %vm935, %v3190, 0
      %3197 = vmatprep.subr.bf16.mxu0 0
      %3198 = vmatpush1.bf16.msra.mxu0 0
      %3199 = vmatprep.subr.bf16.mxu0 0
      %3200 = vmatpush1.bf16.msra.mxu0 0
      %3201 = vmatprep.subr.bf16.mxu0 0
      %3202 = vmatpush1.bf16.msra.mxu0 0
      %3203 = vmatprep.subr.bf16.mxu0 0
      %3204 = vmatpush1.bf16.msra.mxu0 0
      %3205 = vmatprep.subr.bf16.mxu0 0
      %3206 = vmatpush1.bf16.msra.mxu0 0
      %3207 = vmatprep.subr.bf16.mxu0 0
      %3208 = vmatpush1.bf16.msra.mxu0 0
      %3209 = vmatprep.subr.bf16.mxu0 0
      %3210 = vmatpush1.bf16.msra.mxu0 0
      %3211 = vmatprep.subr.bf16.mxu0 0
      %3212 = vmatpush1.bf16.msra.mxu0 %v3195
      %3213 = vmatprep.subr.bf16.mxu0 0
      %3214 = vmatpush2.bf16.msra.mxu0 0
      %3215 = vmatprep.subr.bf16.mxu0 0
      %3216 = vmatpush2.bf16.msra.mxu0 0
      %3217 = vmatprep.subr.bf16.mxu0 0
      %3218 = vmatpush2.bf16.msra.mxu0 0
      %3219 = vmatprep.subr.bf16.mxu0 0
      %3220 = vmatpush2.bf16.msra.mxu0 0
      %3221 = vmatprep.subr.bf16.mxu0 0
      %3222 = vmatpush2.bf16.msra.mxu0 0
      %3223 = vmatprep.subr.bf16.mxu0 0
      %3224 = vmatpush2.bf16.msra.mxu0 0
      %3225 = vmatprep.subr.bf16.mxu0 0
      %3226 = vmatpush2.bf16.msra.mxu0 0
      %3227 = vmatprep.subr.bf16.mxu0 0
      %3228 = vmatpush2.bf16.msra.mxu0 0
      %3229 = vmatprep.mubr.bf16.mxu0 0
      %3230 = vmatmul.mubr.bf16.gmra.mxu0 %v3192
      %v3231 = vpop.f32.mrf.mxu0
      %v3232 = vadd.f32 0.0, %v3231
      %v3233 = vpop.f32.mrf.mxu0
      %v3234 = vpop.f32.mrf.mxu0
      %v3235 = vpop.f32.mrf.mxu0
      %3236 = vdwg.mxu0
      %3237 = vrot.lane.b32.xlu0 %v456, 112
      %v3238 = vpop.permute.xlu0 %3237
      %v3240 = vsel %vm457, %v2900, 0
      %v3243 = vsel %vm935, %v3238, 0
      %3245 = vmatprep.subr.bf16.mxu0 0
      %3246 = vmatpush1.bf16.msra.mxu0 0
      %3247 = vmatprep.subr.bf16.mxu0 0
      %3248 = vmatpush1.bf16.msra.mxu0 0
      %3249 = vmatprep.subr.bf16.mxu0 0
      %3250 = vmatpush1.bf16.msra.mxu0 0
      %3251 = vmatprep.subr.bf16.mxu0 0
      %3252 = vmatpush1.bf16.msra.mxu0 0
      %3253 = vmatprep.subr.bf16.mxu0 0
      %3254 = vmatpush1.bf16.msra.mxu0 0
      %3255 = vmatprep.subr.bf16.mxu0 0
      %3256 = vmatpush1.bf16.msra.mxu0 0
      %3257 = vmatprep.subr.bf16.mxu0 0
      %3258 = vmatpush1.bf16.msra.mxu0 0
      %3259 = vmatprep.subr.bf16.mxu0 0
      %3260 = vmatpush1.bf16.msra.mxu0 %v3243
      %3261 = vmatprep.subr.bf16.mxu0 0
      %3262 = vmatpush2.bf16.msra.mxu0 0
      %3263 = vmatprep.subr.bf16.mxu0 0
      %3264 = vmatpush2.bf16.msra.mxu0 0
      %3265 = vmatprep.subr.bf16.mxu0 0
      %3266 = vmatpush2.bf16.msra.mxu0 0
      %3267 = vmatprep.subr.bf16.mxu0 0
      %3268 = vmatpush2.bf16.msra.mxu0 0
      %3269 = vmatprep.subr.bf16.mxu0 0
      %3270 = vmatpush2.bf16.msra.mxu0 0
      %3271 = vmatprep.subr.bf16.mxu0 0
      %3272 = vmatpush2.bf16.msra.mxu0 0
      %3273 = vmatprep.subr.bf16.mxu0 0
      %3274 = vmatpush2.bf16.msra.mxu0 0
      %3275 = vmatprep.subr.bf16.mxu0 0
      %3276 = vmatpush2.bf16.msra.mxu0 0
      %3277 = vmatprep.mubr.bf16.mxu0 0
      %3278 = vmatmul.mubr.bf16.gmra.mxu0 %v3240
      %v3279 = vpop.f32.mrf.mxu0
      %v3280 = vadd.f32 0.0, %v3279
      %v3281 = vpop.f32.mrf.mxu0
      %v3282 = vpop.f32.mrf.mxu0
      %v3283 = vpop.f32.mrf.mxu0
      %3284 = vdwg.mxu0
      %v3285 = vpack.c.bf16 %v2992, %v2944
      %v3286 = vpack.c.bf16 %v3088, %v3040
      %v3287 = vpack.c.bf16 %v3184, %v3136
      %v3288 = vpack.c.bf16 %v3280, %v3232
      %v3290 = vsel %vm457, %v3285, 0
      %v3293 = vsel %vm457, %v3286, 0
      %v3296 = vsel %vm457, %v3287, 0
      %v3299 = vsel %vm457, %v3288, 0
      %v3302 = vsel %vm935, %v183, 0
      %3304 = vmatprep.subr.bf16.mxu0 0
      %3305 = vmatpush1.bf16.msra.mxu0 0
      %3306 = vmatprep.subr.bf16.mxu0 0
      %3307 = vmatpush1.bf16.msra.mxu0 0
      %3308 = vmatprep.subr.bf16.mxu0 0
      %3309 = vmatpush1.bf16.msra.mxu0 0
      %3310 = vmatprep.subr.bf16.mxu0 0
      %3311 = vmatpush1.bf16.msra.mxu0 0
      %3312 = vmatprep.subr.bf16.mxu0 0
      %3313 = vmatpush1.bf16.msra.mxu0 0
      %3314 = vmatprep.subr.bf16.mxu0 0
      %3315 = vmatpush1.bf16.msra.mxu0 0
      %3316 = vmatprep.subr.bf16.mxu0 0
      %3317 = vmatpush1.bf16.msra.mxu0 0
      %3318 = vmatprep.subr.bf16.mxu0 0
      %3319 = vmatpush1.bf16.msra.mxu0 %v3302
      %3320 = vmatprep.subr.bf16.mxu0 0
      %3321 = vmatpush2.bf16.msra.mxu0 0
      %3322 = vmatprep.subr.bf16.mxu0 0
      %3323 = vmatpush2.bf16.msra.mxu0 0
      %3324 = vmatprep.subr.bf16.mxu0 0
      %3325 = vmatpush2.bf16.msra.mxu0 0
      %3326 = vmatprep.subr.bf16.mxu0 0
      %3327 = vmatpush2.bf16.msra.mxu0 0
      %3328 = vmatprep.subr.bf16.mxu0 0
      %3329 = vmatpush2.bf16.msra.mxu0 0
      %3330 = vmatprep.subr.bf16.mxu0 0
      %3331 = vmatpush2.bf16.msra.mxu0 0
      %3332 = vmatprep.subr.bf16.mxu0 0
      %3333 = vmatpush2.bf16.msra.mxu0 0
      %3334 = vmatprep.subr.bf16.mxu0 0
      %3335 = vmatpush2.bf16.msra.mxu0 0
      %3336 = vmatprep.mubr.bf16.mxu0 0
      %3337 = vmatmul.mubr.bf16.gmra.mxu0 %v3290
      %v3338 = vpop.f32.mrf.mxu0
      %v3339 = vadd.f32 0.0, %v3338
      %v3340 = vpop.f32.mrf.mxu0
      %v3341 = vpop.f32.mrf.mxu0
      %v3342 = vadd.f32 0.0, %v3341
      %v3343 = vpop.f32.mrf.mxu0
      %3344 = vmatprep.mubr.bf16.mxu0 0
      %3345 = vmatmul.mubr.bf16.gmra.mxu0 %v3293
      %v3346 = vpop.f32.mrf.mxu0
      %v3347 = vadd.f32 0.0, %v3346
      %v3348 = vpop.f32.mrf.mxu0
      %v3349 = vpop.f32.mrf.mxu0
      %v3350 = vadd.f32 0.0, %v3349
      %v3351 = vpop.f32.mrf.mxu0
      %3352 = vmatprep.mubr.bf16.mxu0 0
      %3353 = vmatmul.mubr.bf16.gmra.mxu0 %v3296
      %v3354 = vpop.f32.mrf.mxu0
      %v3355 = vadd.f32 0.0, %v3354
      %v3356 = vpop.f32.mrf.mxu0
      %v3357 = vpop.f32.mrf.mxu0
      %v3358 = vadd.f32 0.0, %v3357
      %v3359 = vpop.f32.mrf.mxu0
      %3360 = vmatprep.mubr.bf16.mxu0 0
      %3361 = vmatmul.mubr.bf16.gmra.mxu0 %v3299
      %v3362 = vpop.f32.mrf.mxu0
      %v3363 = vadd.f32 0.0, %v3362
      %v3364 = vpop.f32.mrf.mxu0
      %v3365 = vpop.f32.mrf.mxu0
      %v3366 = vadd.f32 0.0, %v3365
      %v3367 = vpop.f32.mrf.mxu0
      %3368 = vdwg.mxu0
      %v3369 = vadd.f32 %v2389, %v3339
      %v3370 = vadd.f32 %v2390, %v3342
      %v3371 = vadd.f32 %v2391, %v3347
      %v3372 = vadd.f32 %v2392, %v3350
      %v3373 = vadd.f32 %v2393, %v3355
      %v3374 = vadd.f32 %v2394, %v3358
      %v3375 = vadd.f32 %v2395, %v3363
      %v3376 = vadd.f32 %v2396, %v3366
      %3377 = vrot.lane.b32.xlu0 %v433, 104
      %v3378 = vpop.permute.xlu0 %3377
      %3379 = vrot.lane.b32.xlu0 %v441, 104
      %v3380 = vpop.permute.xlu0 %3379
      %v3382 = vsel %vm457, %v3378, 0
      %v3385 = vsel %vm457, %v3380, 0
      %3387 = vmatprep.subr.bf16.mxu0 0
      %3388 = vmatpush1.bf16.xpose.msra.mxu0 0
      %3389 = vmatprep.subr.bf16.mxu0 0
      %3390 = vmatpush1.bf16.xpose.msra.mxu0 0
      %3391 = vmatprep.subr.bf16.mxu0 0
      %3392 = vmatpush1.bf16.xpose.msra.mxu0 0
      %3393 = vmatprep.subr.bf16.mxu0 0
      %3394 = vmatpush1.bf16.xpose.msra.mxu0 0
      %3395 = vmatprep.subr.bf16.mxu0 0
      %3396 = vmatpush1.bf16.xpose.msra.mxu0 0
      %3397 = vmatprep.subr.bf16.mxu0 0
      %3398 = vmatpush1.bf16.xpose.msra.mxu0 0
      %3399 = vmatprep.subr.bf16.mxu0 0
      %3400 = vmatpush1.bf16.xpose.msra.mxu0 0
      %3401 = vmatprep.subr.bf16.mxu0 0
      %3402 = vmatpush1.bf16.xpose.msra.mxu0 %v3385
      %3403 = vmatprep.subr.bf16.mxu0 0
      %3404 = vmatpush2.bf16.xpose.msra.mxu0 0
      %3405 = vmatprep.subr.bf16.mxu0 0
      %3406 = vmatpush2.bf16.xpose.msra.mxu0 0
      %3407 = vmatprep.subr.bf16.mxu0 0
      %3408 = vmatpush2.bf16.xpose.msra.mxu0 0
      %3409 = vmatprep.subr.bf16.mxu0 0
      %3410 = vmatpush2.bf16.xpose.msra.mxu0 0
      %3411 = vmatprep.subr.bf16.mxu0 0
      %3412 = vmatpush2.bf16.xpose.msra.mxu0 0
      %3413 = vmatprep.subr.bf16.mxu0 0
      %3414 = vmatpush2.bf16.xpose.msra.mxu0 0
      %3415 = vmatprep.subr.bf16.mxu0 0
      %3416 = vmatpush2.bf16.xpose.msra.mxu0 0
      %3417 = vmatprep.subr.bf16.mxu0 0
      %3418 = vmatpush2.bf16.xpose.msra.mxu0 0
      %3419 = vmatprep.mubr.bf16.mxu0 0
      %3420 = vmatmul.mubr.bf16.gmra.mxu0 %v3382
      %v3421 = vpop.f32.mrf.mxu0
      %v3422 = vadd.f32 0.0, %v3421
      %v3423 = vpop.f32.mrf.mxu0
      %v3424 = vpop.f32.mrf.mxu0
      %v3425 = vpop.f32.mrf.mxu0
      %3426 = vdwg.mxu0
      %3427 = vrot.lane.b32.xlu0 %v434, 104
      %v3428 = vpop.permute.xlu0 %3427
      %3429 = vrot.lane.b32.xlu0 %v442, 104
      %v3430 = vpop.permute.xlu0 %3429
      %v3432 = vsel %vm457, %v3428, 0
      %v3435 = vsel %vm457, %v3430, 0
      %3437 = vmatprep.subr.bf16.mxu0 0
      %3438 = vmatpush1.bf16.xpose.msra.mxu0 0
      %3439 = vmatprep.subr.bf16.mxu0 0
      %3440 = vmatpush1.bf16.xpose.msra.mxu0 0
      %3441 = vmatprep.subr.bf16.mxu0 0
      %3442 = vmatpush1.bf16.xpose.msra.mxu0 0
      %3443 = vmatprep.subr.bf16.mxu0 0
      %3444 = vmatpush1.bf16.xpose.msra.mxu0 0
      %3445 = vmatprep.subr.bf16.mxu0 0
      %3446 = vmatpush1.bf16.xpose.msra.mxu0 0
      %3447 = vmatprep.subr.bf16.mxu0 0
      %3448 = vmatpush1.bf16.xpose.msra.mxu0 0
      %3449 = vmatprep.subr.bf16.mxu0 0
      %3450 = vmatpush1.bf16.xpose.msra.mxu0 0
      %3451 = vmatprep.subr.bf16.mxu0 0
      %3452 = vmatpush1.bf16.xpose.msra.mxu0 %v3435
      %3453 = vmatprep.subr.bf16.mxu0 0
      %3454 = vmatpush2.bf16.xpose.msra.mxu0 0
      %3455 = vmatprep.subr.bf16.mxu0 0
      %3456 = vmatpush2.bf16.xpose.msra.mxu0 0
      %3457 = vmatprep.subr.bf16.mxu0 0
      %3458 = vmatpush2.bf16.xpose.msra.mxu0 0
      %3459 = vmatprep.subr.bf16.mxu0 0
      %3460 = vmatpush2.bf16.xpose.msra.mxu0 0
      %3461 = vmatprep.subr.bf16.mxu0 0
      %3462 = vmatpush2.bf16.xpose.msra.mxu0 0
      %3463 = vmatprep.subr.bf16.mxu0 0
      %3464 = vmatpush2.bf16.xpose.msra.mxu0 0
      %3465 = vmatprep.subr.bf16.mxu0 0
      %3466 = vmatpush2.bf16.xpose.msra.mxu0 0
      %3467 = vmatprep.subr.bf16.mxu0 0
      %3468 = vmatpush2.bf16.xpose.msra.mxu0 0
      %3469 = vmatprep.mubr.bf16.mxu0 0
      %3470 = vmatmul.mubr.bf16.gmra.mxu0 %v3432
      %v3471 = vpop.f32.mrf.mxu0
      %v3472 = vadd.f32 0.0, %v3471
      %v3473 = vpop.f32.mrf.mxu0
      %v3474 = vpop.f32.mrf.mxu0
      %v3475 = vpop.f32.mrf.mxu0
      %3476 = vdwg.mxu0
      %3477 = vrot.lane.b32.xlu0 %v435, 104
      %v3478 = vpop.permute.xlu0 %3477
      %3479 = vrot.lane.b32.xlu0 %v443, 104
      %v3480 = vpop.permute.xlu0 %3479
      %v3482 = vsel %vm457, %v3478, 0
      %v3485 = vsel %vm457, %v3480, 0
      %3487 = vmatprep.subr.bf16.mxu0 0
      %3488 = vmatpush1.bf16.xpose.msra.mxu0 0
      %3489 = vmatprep.subr.bf16.mxu0 0
      %3490 = vmatpush1.bf16.xpose.msra.mxu0 0
      %3491 = vmatprep.subr.bf16.mxu0 0
      %3492 = vmatpush1.bf16.xpose.msra.mxu0 0
      %3493 = vmatprep.subr.bf16.mxu0 0
      %3494 = vmatpush1.bf16.xpose.msra.mxu0 0
      %3495 = vmatprep.subr.bf16.mxu0 0
      %3496 = vmatpush1.bf16.xpose.msra.mxu0 0
      %3497 = vmatprep.subr.bf16.mxu0 0
      %3498 = vmatpush1.bf16.xpose.msra.mxu0 0
      %3499 = vmatprep.subr.bf16.mxu0 0
      %3500 = vmatpush1.bf16.xpose.msra.mxu0 0
      %3501 = vmatprep.subr.bf16.mxu0 0
      %3502 = vmatpush1.bf16.xpose.msra.mxu0 %v3485
      %3503 = vmatprep.subr.bf16.mxu0 0
      %3504 = vmatpush2.bf16.xpose.msra.mxu0 0
      %3505 = vmatprep.subr.bf16.mxu0 0
      %3506 = vmatpush2.bf16.xpose.msra.mxu0 0
      %3507 = vmatprep.subr.bf16.mxu0 0
      %3508 = vmatpush2.bf16.xpose.msra.mxu0 0
      %3509 = vmatprep.subr.bf16.mxu0 0
      %3510 = vmatpush2.bf16.xpose.msra.mxu0 0
      %3511 = vmatprep.subr.bf16.mxu0 0
      %3512 = vmatpush2.bf16.xpose.msra.mxu0 0
      %3513 = vmatprep.subr.bf16.mxu0 0
      %3514 = vmatpush2.bf16.xpose.msra.mxu0 0
      %3515 = vmatprep.subr.bf16.mxu0 0
      %3516 = vmatpush2.bf16.xpose.msra.mxu0 0
      %3517 = vmatprep.subr.bf16.mxu0 0
      %3518 = vmatpush2.bf16.xpose.msra.mxu0 0
      %3519 = vmatprep.mubr.bf16.mxu0 0
      %3520 = vmatmul.mubr.bf16.gmra.mxu0 %v3482
      %v3521 = vpop.f32.mrf.mxu0
      %v3522 = vadd.f32 0.0, %v3521
      %v3523 = vpop.f32.mrf.mxu0
      %v3524 = vpop.f32.mrf.mxu0
      %v3525 = vpop.f32.mrf.mxu0
      %3526 = vdwg.mxu0
      %3527 = vrot.lane.b32.xlu0 %v436, 104
      %v3528 = vpop.permute.xlu0 %3527
      %3529 = vrot.lane.b32.xlu0 %v444, 104
      %v3530 = vpop.permute.xlu0 %3529
      %v3532 = vsel %vm457, %v3528, 0
      %v3535 = vsel %vm457, %v3530, 0
      %3537 = vmatprep.subr.bf16.mxu0 0
      %3538 = vmatpush1.bf16.xpose.msra.mxu0 0
      %3539 = vmatprep.subr.bf16.mxu0 0
      %3540 = vmatpush1.bf16.xpose.msra.mxu0 0
      %3541 = vmatprep.subr.bf16.mxu0 0
      %3542 = vmatpush1.bf16.xpose.msra.mxu0 0
      %3543 = vmatprep.subr.bf16.mxu0 0
      %3544 = vmatpush1.bf16.xpose.msra.mxu0 0
      %3545 = vmatprep.subr.bf16.mxu0 0
      %3546 = vmatpush1.bf16.xpose.msra.mxu0 0
      %3547 = vmatprep.subr.bf16.mxu0 0
      %3548 = vmatpush1.bf16.xpose.msra.mxu0 0
      %3549 = vmatprep.subr.bf16.mxu0 0
      %3550 = vmatpush1.bf16.xpose.msra.mxu0 0
      %3551 = vmatprep.subr.bf16.mxu0 0
      %3552 = vmatpush1.bf16.xpose.msra.mxu0 %v3535
      %3553 = vmatprep.subr.bf16.mxu0 0
      %3554 = vmatpush2.bf16.xpose.msra.mxu0 0
      %3555 = vmatprep.subr.bf16.mxu0 0
      %3556 = vmatpush2.bf16.xpose.msra.mxu0 0
      %3557 = vmatprep.subr.bf16.mxu0 0
      %3558 = vmatpush2.bf16.xpose.msra.mxu0 0
      %3559 = vmatprep.subr.bf16.mxu0 0
      %3560 = vmatpush2.bf16.xpose.msra.mxu0 0
      %3561 = vmatprep.subr.bf16.mxu0 0
      %3562 = vmatpush2.bf16.xpose.msra.mxu0 0
      %3563 = vmatprep.subr.bf16.mxu0 0
      %3564 = vmatpush2.bf16.xpose.msra.mxu0 0
      %3565 = vmatprep.subr.bf16.mxu0 0
      %3566 = vmatpush2.bf16.xpose.msra.mxu0 0
      %3567 = vmatprep.subr.bf16.mxu0 0
      %3568 = vmatpush2.bf16.xpose.msra.mxu0 0
      %3569 = vmatprep.mubr.bf16.mxu0 0
      %3570 = vmatmul.mubr.bf16.gmra.mxu0 %v3532
      %v3571 = vpop.f32.mrf.mxu0
      %v3572 = vadd.f32 0.0, %v3571
      %v3573 = vpop.f32.mrf.mxu0
      %v3574 = vpop.f32.mrf.mxu0
      %v3575 = vpop.f32.mrf.mxu0
      %3576 = vdwg.mxu0
      %3577 = vrot.lane.b32.xlu0 %v437, 104
      %v3578 = vpop.permute.xlu0 %3577
      %3579 = vrot.lane.b32.xlu0 %v445, 104
      %v3580 = vpop.permute.xlu0 %3579
      %v3582 = vsel %vm457, %v3578, 0
      %v3585 = vsel %vm457, %v3580, 0
      %3587 = vmatprep.subr.bf16.mxu0 0
      %3588 = vmatpush1.bf16.xpose.msra.mxu0 0
      %3589 = vmatprep.subr.bf16.mxu0 0
      %3590 = vmatpush1.bf16.xpose.msra.mxu0 0
      %3591 = vmatprep.subr.bf16.mxu0 0
      %3592 = vmatpush1.bf16.xpose.msra.mxu0 0
      %3593 = vmatprep.subr.bf16.mxu0 0
      %3594 = vmatpush1.bf16.xpose.msra.mxu0 0
      %3595 = vmatprep.subr.bf16.mxu0 0
      %3596 = vmatpush1.bf16.xpose.msra.mxu0 0
      %3597 = vmatprep.subr.bf16.mxu0 0
      %3598 = vmatpush1.bf16.xpose.msra.mxu0 0
      %3599 = vmatprep.subr.bf16.mxu0 0
      %3600 = vmatpush1.bf16.xpose.msra.mxu0 0
      %3601 = vmatprep.subr.bf16.mxu0 0
      %3602 = vmatpush1.bf16.xpose.msra.mxu0 %v3585
      %3603 = vmatprep.subr.bf16.mxu0 0
      %3604 = vmatpush2.bf16.xpose.msra.mxu0 0
      %3605 = vmatprep.subr.bf16.mxu0 0
      %3606 = vmatpush2.bf16.xpose.msra.mxu0 0
      %3607 = vmatprep.subr.bf16.mxu0 0
      %3608 = vmatpush2.bf16.xpose.msra.mxu0 0
      %3609 = vmatprep.subr.bf16.mxu0 0
      %3610 = vmatpush2.bf16.xpose.msra.mxu0 0
      %3611 = vmatprep.subr.bf16.mxu0 0
      %3612 = vmatpush2.bf16.xpose.msra.mxu0 0
      %3613 = vmatprep.subr.bf16.mxu0 0
      %3614 = vmatpush2.bf16.xpose.msra.mxu0 0
      %3615 = vmatprep.subr.bf16.mxu0 0
      %3616 = vmatpush2.bf16.xpose.msra.mxu0 0
      %3617 = vmatprep.subr.bf16.mxu0 0
      %3618 = vmatpush2.bf16.xpose.msra.mxu0 0
      %3619 = vmatprep.mubr.bf16.mxu0 0
      %3620 = vmatmul.mubr.bf16.gmra.mxu0 %v3582
      %v3621 = vpop.f32.mrf.mxu0
      %v3622 = vadd.f32 0.0, %v3621
      %v3623 = vpop.f32.mrf.mxu0
      %v3624 = vpop.f32.mrf.mxu0
      %v3625 = vpop.f32.mrf.mxu0
      %3626 = vdwg.mxu0
      %3627 = vrot.lane.b32.xlu0 %v438, 104
      %v3628 = vpop.permute.xlu0 %3627
      %3629 = vrot.lane.b32.xlu0 %v446, 104
      %v3630 = vpop.permute.xlu0 %3629
      %v3632 = vsel %vm457, %v3628, 0
      %v3635 = vsel %vm457, %v3630, 0
      %3637 = vmatprep.subr.bf16.mxu0 0
      %3638 = vmatpush1.bf16.xpose.msra.mxu0 0
      %3639 = vmatprep.subr.bf16.mxu0 0
      %3640 = vmatpush1.bf16.xpose.msra.mxu0 0
      %3641 = vmatprep.subr.bf16.mxu0 0
      %3642 = vmatpush1.bf16.xpose.msra.mxu0 0
      %3643 = vmatprep.subr.bf16.mxu0 0
      %3644 = vmatpush1.bf16.xpose.msra.mxu0 0
      %3645 = vmatprep.subr.bf16.mxu0 0
      %3646 = vmatpush1.bf16.xpose.msra.mxu0 0
      %3647 = vmatprep.subr.bf16.mxu0 0
      %3648 = vmatpush1.bf16.xpose.msra.mxu0 0
      %3649 = vmatprep.subr.bf16.mxu0 0
      %3650 = vmatpush1.bf16.xpose.msra.mxu0 0
      %3651 = vmatprep.subr.bf16.mxu0 0
      %3652 = vmatpush1.bf16.xpose.msra.mxu0 %v3635
      %3653 = vmatprep.subr.bf16.mxu0 0
      %3654 = vmatpush2.bf16.xpose.msra.mxu0 0
      %3655 = vmatprep.subr.bf16.mxu0 0
      %3656 = vmatpush2.bf16.xpose.msra.mxu0 0
      %3657 = vmatprep.subr.bf16.mxu0 0
      %3658 = vmatpush2.bf16.xpose.msra.mxu0 0
      %3659 = vmatprep.subr.bf16.mxu0 0
      %3660 = vmatpush2.bf16.xpose.msra.mxu0 0
      %3661 = vmatprep.subr.bf16.mxu0 0
      %3662 = vmatpush2.bf16.xpose.msra.mxu0 0
      %3663 = vmatprep.subr.bf16.mxu0 0
      %3664 = vmatpush2.bf16.xpose.msra.mxu0 0
      %3665 = vmatprep.subr.bf16.mxu0 0
      %3666 = vmatpush2.bf16.xpose.msra.mxu0 0
      %3667 = vmatprep.subr.bf16.mxu0 0
      %3668 = vmatpush2.bf16.xpose.msra.mxu0 0
      %3669 = vmatprep.mubr.bf16.mxu0 0
      %3670 = vmatmul.mubr.bf16.gmra.mxu0 %v3632
      %v3671 = vpop.f32.mrf.mxu0
      %v3672 = vadd.f32 0.0, %v3671
      %v3673 = vpop.f32.mrf.mxu0
      %v3674 = vpop.f32.mrf.mxu0
      %v3675 = vpop.f32.mrf.mxu0
      %3676 = vdwg.mxu0
      %3677 = vrot.lane.b32.xlu0 %v439, 104
      %v3678 = vpop.permute.xlu0 %3677
      %3679 = vrot.lane.b32.xlu0 %v447, 104
      %v3680 = vpop.permute.xlu0 %3679
      %v3682 = vsel %vm457, %v3678, 0
      %v3685 = vsel %vm457, %v3680, 0
      %3687 = vmatprep.subr.bf16.mxu0 0
      %3688 = vmatpush1.bf16.xpose.msra.mxu0 0
      %3689 = vmatprep.subr.bf16.mxu0 0
      %3690 = vmatpush1.bf16.xpose.msra.mxu0 0
      %3691 = vmatprep.subr.bf16.mxu0 0
      %3692 = vmatpush1.bf16.xpose.msra.mxu0 0
      %3693 = vmatprep.subr.bf16.mxu0 0
      %3694 = vmatpush1.bf16.xpose.msra.mxu0 0
      %3695 = vmatprep.subr.bf16.mxu0 0
      %3696 = vmatpush1.bf16.xpose.msra.mxu0 0
      %3697 = vmatprep.subr.bf16.mxu0 0
      %3698 = vmatpush1.bf16.xpose.msra.mxu0 0
      %3699 = vmatprep.subr.bf16.mxu0 0
      %3700 = vmatpush1.bf16.xpose.msra.mxu0 0
      %3701 = vmatprep.subr.bf16.mxu0 0
      %3702 = vmatpush1.bf16.xpose.msra.mxu0 %v3685
      %3703 = vmatprep.subr.bf16.mxu0 0
      %3704 = vmatpush2.bf16.xpose.msra.mxu0 0
      %3705 = vmatprep.subr.bf16.mxu0 0
      %3706 = vmatpush2.bf16.xpose.msra.mxu0 0
      %3707 = vmatprep.subr.bf16.mxu0 0
      %3708 = vmatpush2.bf16.xpose.msra.mxu0 0
      %3709 = vmatprep.subr.bf16.mxu0 0
      %3710 = vmatpush2.bf16.xpose.msra.mxu0 0
      %3711 = vmatprep.subr.bf16.mxu0 0
      %3712 = vmatpush2.bf16.xpose.msra.mxu0 0
      %3713 = vmatprep.subr.bf16.mxu0 0
      %3714 = vmatpush2.bf16.xpose.msra.mxu0 0
      %3715 = vmatprep.subr.bf16.mxu0 0
      %3716 = vmatpush2.bf16.xpose.msra.mxu0 0
      %3717 = vmatprep.subr.bf16.mxu0 0
      %3718 = vmatpush2.bf16.xpose.msra.mxu0 0
      %3719 = vmatprep.mubr.bf16.mxu0 0
      %3720 = vmatmul.mubr.bf16.gmra.mxu0 %v3682
      %v3721 = vpop.f32.mrf.mxu0
      %v3722 = vadd.f32 0.0, %v3721
      %v3723 = vpop.f32.mrf.mxu0
      %v3724 = vpop.f32.mrf.mxu0
      %v3725 = vpop.f32.mrf.mxu0
      %3726 = vdwg.mxu0
      %3727 = vrot.lane.b32.xlu0 %v440, 104
      %v3728 = vpop.permute.xlu0 %3727
      %3729 = vrot.lane.b32.xlu0 %v448, 104
      %v3730 = vpop.permute.xlu0 %3729
      %v3732 = vsel %vm457, %v3728, 0
      %v3735 = vsel %vm457, %v3730, 0
      %3737 = vmatprep.subr.bf16.mxu0 0
      %3738 = vmatpush1.bf16.xpose.msra.mxu0 0
      %3739 = vmatprep.subr.bf16.mxu0 0
      %3740 = vmatpush1.bf16.xpose.msra.mxu0 0
      %3741 = vmatprep.subr.bf16.mxu0 0
      %3742 = vmatpush1.bf16.xpose.msra.mxu0 0
      %3743 = vmatprep.subr.bf16.mxu0 0
      %3744 = vmatpush1.bf16.xpose.msra.mxu0 0
      %3745 = vmatprep.subr.bf16.mxu0 0
      %3746 = vmatpush1.bf16.xpose.msra.mxu0 0
      %3747 = vmatprep.subr.bf16.mxu0 0
      %3748 = vmatpush1.bf16.xpose.msra.mxu0 0
      %3749 = vmatprep.subr.bf16.mxu0 0
      %3750 = vmatpush1.bf16.xpose.msra.mxu0 0
      %3751 = vmatprep.subr.bf16.mxu0 0
      %3752 = vmatpush1.bf16.xpose.msra.mxu0 %v3735
      %3753 = vmatprep.subr.bf16.mxu0 0
      %3754 = vmatpush2.bf16.xpose.msra.mxu0 0
      %3755 = vmatprep.subr.bf16.mxu0 0
      %3756 = vmatpush2.bf16.xpose.msra.mxu0 0
      %3757 = vmatprep.subr.bf16.mxu0 0
      %3758 = vmatpush2.bf16.xpose.msra.mxu0 0
      %3759 = vmatprep.subr.bf16.mxu0 0
      %3760 = vmatpush2.bf16.xpose.msra.mxu0 0
      %3761 = vmatprep.subr.bf16.mxu0 0
      %3762 = vmatpush2.bf16.xpose.msra.mxu0 0
      %3763 = vmatprep.subr.bf16.mxu0 0
      %3764 = vmatpush2.bf16.xpose.msra.mxu0 0
      %3765 = vmatprep.subr.bf16.mxu0 0
      %3766 = vmatpush2.bf16.xpose.msra.mxu0 0
      %3767 = vmatprep.subr.bf16.mxu0 0
      %3768 = vmatpush2.bf16.xpose.msra.mxu0 0
      %3769 = vmatprep.mubr.bf16.mxu0 0
      %3770 = vmatmul.mubr.bf16.gmra.mxu0 %v3732
      %v3771 = vpop.f32.mrf.mxu0
      %v3772 = vadd.f32 0.0, %v3771
      %v3773 = vpop.f32.mrf.mxu0
      %v3774 = vpop.f32.mrf.mxu0
      %v3775 = vpop.f32.mrf.mxu0
      %3776 = vdwg.mxu0
      %v3777 = vsel %vm827, %v3422, -1e+30
      %v3778 = vsel %vm827, %v3472, -1e+30
      %v3779 = vsel %vm827, %v3522, -1e+30
      %v3780 = vsel %vm827, %v3572, -1e+30
      %v3781 = vsel %vm827, %v3622, -1e+30
      %v3782 = vsel %vm827, %v3672, -1e+30
      %v3783 = vsel %vm827, %v3722, -1e+30
      %v3784 = vsel %vm827, %v3772, -1e+30
      %v3785 = vsel %vm457, %v3777, -inf
      %3786 = vmax.xlane.f32.xlu0 %v3785
      %v3787 = vpop.xlane.xlu0 %3786
      %v3788 = vsel %vm457, %v3778, -inf
      %3789 = vmax.xlane.f32.xlu0 %v3788
      %v3790 = vpop.xlane.xlu0 %3789
      %v3791 = vsel %vm457, %v3779, -inf
      %3792 = vmax.xlane.f32.xlu0 %v3791
      %v3793 = vpop.xlane.xlu0 %3792
      %v3794 = vsel %vm457, %v3780, -inf
      %3795 = vmax.xlane.f32.xlu0 %v3794
      %v3796 = vpop.xlane.xlu0 %3795
      %v3797 = vsel %vm457, %v3781, -inf
      %3798 = vmax.xlane.f32.xlu0 %v3797
      %v3799 = vpop.xlane.xlu0 %3798
      %v3800 = vsel %vm457, %v3782, -inf
      %3801 = vmax.xlane.f32.xlu0 %v3800
      %v3802 = vpop.xlane.xlu0 %3801
      %v3803 = vsel %vm457, %v3783, -inf
      %3804 = vmax.xlane.f32.xlu0 %v3803
      %v3805 = vpop.xlane.xlu0 %3804
      %v3806 = vsel %vm457, %v3784, -inf
      %3807 = vmax.xlane.f32.xlu0 %v3806
      %v3808 = vpop.xlane.xlu0 %3807
      %v3809 = vsub.f32 %v3777, %v3787
      %v3810 = vsub.f32 %v3778, %v3790
      %v3811 = vsub.f32 %v3779, %v3793
      %v3812 = vsub.f32 %v3780, %v3796
      %v3813 = vsub.f32 %v3781, %v3799
      %v3814 = vsub.f32 %v3782, %v3802
      %v3815 = vsub.f32 %v3783, %v3805
      %v3816 = vsub.f32 %v3784, %v3808
      %v3817 = vmul.f32 %v3809, 1.442695
      %v3818 = vpow.pop %v3817
      %v3819 = vmul.f32 %v3810, 1.442695
      %v3820 = vpow.pop %v3819
      %v3821 = vmul.f32 %v3811, 1.442695
      %v3822 = vpow.pop %v3821
      %v3823 = vmul.f32 %v3812, 1.442695
      %v3824 = vpow.pop %v3823
      %v3825 = vmul.f32 %v3813, 1.442695
      %v3826 = vpow.pop %v3825
      %v3827 = vmul.f32 %v3814, 1.442695
      %v3828 = vpow.pop %v3827
      %v3829 = vmul.f32 %v3815, 1.442695
      %v3830 = vpow.pop %v3829
      %v3831 = vmul.f32 %v3816, 1.442695
      %v3832 = vpow.pop %v3831
      %v3833 = vsel %vm457, %v3818, 0.0
      %3834 = vadd.xlane.f32.xlu0 %v3833
      %v3835 = vpop.xlane.xlu0 %3834
      %v3836 = vsel %vm457, %v3820, 0.0
      %3837 = vadd.xlane.f32.xlu0 %v3836
      %v3838 = vpop.xlane.xlu0 %3837
      %v3839 = vsel %vm457, %v3822, 0.0
      %3840 = vadd.xlane.f32.xlu0 %v3839
      %v3841 = vpop.xlane.xlu0 %3840
      %v3842 = vsel %vm457, %v3824, 0.0
      %3843 = vadd.xlane.f32.xlu0 %v3842
      %v3844 = vpop.xlane.xlu0 %3843
      %v3845 = vsel %vm457, %v3826, 0.0
      %3846 = vadd.xlane.f32.xlu0 %v3845
      %v3847 = vpop.xlane.xlu0 %3846
      %v3848 = vsel %vm457, %v3828, 0.0
      %3849 = vadd.xlane.f32.xlu0 %v3848
      %v3850 = vpop.xlane.xlu0 %3849
      %v3851 = vsel %vm457, %v3830, 0.0
      %3852 = vadd.xlane.f32.xlu0 %v3851
      %v3853 = vpop.xlane.xlu0 %3852
      %v3854 = vsel %vm457, %v3832, 0.0
      %3855 = vadd.xlane.f32.xlu0 %v3854
      %v3856 = vpop.xlane.xlu0 %3855
      %v3857 = vrcp.pop %v3835
      %v3858 = vrcp.pop %v3838
      %v3859 = vrcp.pop %v3841
      %v3860 = vrcp.pop %v3844
      %v3861 = vrcp.pop %v3847
      %v3862 = vrcp.pop %v3850
      %v3863 = vrcp.pop %v3853
      %v3864 = vrcp.pop %v3856
      %v3865 = vmul.f32 %v3818, %v3857
      %v3866 = vmul.f32 %v3820, %v3858
      %v3867 = vmul.f32 %v3822, %v3859
      %v3868 = vmul.f32 %v3824, %v3860
      %v3869 = vmul.f32 %v3826, %v3861
      %v3870 = vmul.f32 %v3828, %v3862
      %v3871 = vmul.f32 %v3830, %v3863
      %v3872 = vmul.f32 %v3832, %v3864
      %v3873 = vpack.c.bf16 %v3865, %v3865
      %v3874 = vpack.c.bf16 %v3866, %v3866
      %v3875 = vpack.c.bf16 %v3867, %v3867
      %v3876 = vpack.c.bf16 %v3868, %v3868
      %v3877 = vpack.c.bf16 %v3869, %v3869
      %v3878 = vpack.c.bf16 %v3870, %v3870
      %v3879 = vpack.c.bf16 %v3871, %v3871
      %v3880 = vpack.c.bf16 %v3872, %v3872
      %3881 = vrot.lane.b32.xlu0 %v449, 104
      %v3882 = vpop.permute.xlu0 %3881
      %v3884 = vsel %vm457, %v3873, 0
      %v3887 = vsel %vm935, %v3882, 0
      %3889 = vmatprep.subr.bf16.mxu0 0
      %3890 = vmatpush1.bf16.msra.mxu0 0
      %3891 = vmatprep.subr.bf16.mxu0 0
      %3892 = vmatpush1.bf16.msra.mxu0 0
      %3893 = vmatprep.subr.bf16.mxu0 0
      %3894 = vmatpush1.bf16.msra.mxu0 0
      %3895 = vmatprep.subr.bf16.mxu0 0
      %3896 = vmatpush1.bf16.msra.mxu0 0
      %3897 = vmatprep.subr.bf16.mxu0 0
      %3898 = vmatpush1.bf16.msra.mxu0 0
      %3899 = vmatprep.subr.bf16.mxu0 0
      %3900 = vmatpush1.bf16.msra.mxu0 0
      %3901 = vmatprep.subr.bf16.mxu0 0
      %3902 = vmatpush1.bf16.msra.mxu0 0
      %3903 = vmatprep.subr.bf16.mxu0 0
      %3904 = vmatpush1.bf16.msra.mxu0 %v3887
      %3905 = vmatprep.subr.bf16.mxu0 0
      %3906 = vmatpush2.bf16.msra.mxu0 0
      %3907 = vmatprep.subr.bf16.mxu0 0
      %3908 = vmatpush2.bf16.msra.mxu0 0
      %3909 = vmatprep.subr.bf16.mxu0 0
      %3910 = vmatpush2.bf16.msra.mxu0 0
      %3911 = vmatprep.subr.bf16.mxu0 0
      %3912 = vmatpush2.bf16.msra.mxu0 0
      %3913 = vmatprep.subr.bf16.mxu0 0
      %3914 = vmatpush2.bf16.msra.mxu0 0
      %3915 = vmatprep.subr.bf16.mxu0 0
      %3916 = vmatpush2.bf16.msra.mxu0 0
      %3917 = vmatprep.subr.bf16.mxu0 0
      %3918 = vmatpush2.bf16.msra.mxu0 0
      %3919 = vmatprep.subr.bf16.mxu0 0
      %3920 = vmatpush2.bf16.msra.mxu0 0
      %3921 = vmatprep.mubr.bf16.mxu0 0
      %3922 = vmatmul.mubr.bf16.gmra.mxu0 %v3884
      %v3923 = vpop.f32.mrf.mxu0
      %v3924 = vadd.f32 0.0, %v3923
      %v3925 = vpop.f32.mrf.mxu0
      %v3926 = vpop.f32.mrf.mxu0
      %v3927 = vpop.f32.mrf.mxu0
      %3928 = vdwg.mxu0
      %3929 = vrot.lane.b32.xlu0 %v450, 104
      %v3930 = vpop.permute.xlu0 %3929
      %v3932 = vsel %vm457, %v3874, 0
      %v3935 = vsel %vm935, %v3930, 0
      %3937 = vmatprep.subr.bf16.mxu0 0
      %3938 = vmatpush1.bf16.msra.mxu0 0
      %3939 = vmatprep.subr.bf16.mxu0 0
      %3940 = vmatpush1.bf16.msra.mxu0 0
      %3941 = vmatprep.subr.bf16.mxu0 0
      %3942 = vmatpush1.bf16.msra.mxu0 0
      %3943 = vmatprep.subr.bf16.mxu0 0
      %3944 = vmatpush1.bf16.msra.mxu0 0
      %3945 = vmatprep.subr.bf16.mxu0 0
      %3946 = vmatpush1.bf16.msra.mxu0 0
      %3947 = vmatprep.subr.bf16.mxu0 0
      %3948 = vmatpush1.bf16.msra.mxu0 0
      %3949 = vmatprep.subr.bf16.mxu0 0
      %3950 = vmatpush1.bf16.msra.mxu0 0
      %3951 = vmatprep.subr.bf16.mxu0 0
      %3952 = vmatpush1.bf16.msra.mxu0 %v3935
      %3953 = vmatprep.subr.bf16.mxu0 0
      %3954 = vmatpush2.bf16.msra.mxu0 0
      %3955 = vmatprep.subr.bf16.mxu0 0
      %3956 = vmatpush2.bf16.msra.mxu0 0
      %3957 = vmatprep.subr.bf16.mxu0 0
      %3958 = vmatpush2.bf16.msra.mxu0 0
      %3959 = vmatprep.subr.bf16.mxu0 0
      %3960 = vmatpush2.bf16.msra.mxu0 0
      %3961 = vmatprep.subr.bf16.mxu0 0
      %3962 = vmatpush2.bf16.msra.mxu0 0
      %3963 = vmatprep.subr.bf16.mxu0 0
      %3964 = vmatpush2.bf16.msra.mxu0 0
      %3965 = vmatprep.subr.bf16.mxu0 0
      %3966 = vmatpush2.bf16.msra.mxu0 0
      %3967 = vmatprep.subr.bf16.mxu0 0
      %3968 = vmatpush2.bf16.msra.mxu0 0
      %3969 = vmatprep.mubr.bf16.mxu0 0
      %3970 = vmatmul.mubr.bf16.gmra.mxu0 %v3932
      %v3971 = vpop.f32.mrf.mxu0
      %v3972 = vadd.f32 0.0, %v3971
      %v3973 = vpop.f32.mrf.mxu0
      %v3974 = vpop.f32.mrf.mxu0
      %v3975 = vpop.f32.mrf.mxu0
      %3976 = vdwg.mxu0
      %3977 = vrot.lane.b32.xlu0 %v451, 104
      %v3978 = vpop.permute.xlu0 %3977
      %v3980 = vsel %vm457, %v3875, 0
      %v3983 = vsel %vm935, %v3978, 0
      %3985 = vmatprep.subr.bf16.mxu0 0
      %3986 = vmatpush1.bf16.msra.mxu0 0
      %3987 = vmatprep.subr.bf16.mxu0 0
      %3988 = vmatpush1.bf16.msra.mxu0 0
      %3989 = vmatprep.subr.bf16.mxu0 0
      %3990 = vmatpush1.bf16.msra.mxu0 0
      %3991 = vmatprep.subr.bf16.mxu0 0
      %3992 = vmatpush1.bf16.msra.mxu0 0
      %3993 = vmatprep.subr.bf16.mxu0 0
      %3994 = vmatpush1.bf16.msra.mxu0 0
      %3995 = vmatprep.subr.bf16.mxu0 0
      %3996 = vmatpush1.bf16.msra.mxu0 0
      %3997 = vmatprep.subr.bf16.mxu0 0
      %3998 = vmatpush1.bf16.msra.mxu0 0
      %3999 = vmatprep.subr.bf16.mxu0 0
      %4000 = vmatpush1.bf16.msra.mxu0 %v3983
      %4001 = vmatprep.subr.bf16.mxu0 0
      %4002 = vmatpush2.bf16.msra.mxu0 0
      %4003 = vmatprep.subr.bf16.mxu0 0
      %4004 = vmatpush2.bf16.msra.mxu0 0
      %4005 = vmatprep.subr.bf16.mxu0 0
      %4006 = vmatpush2.bf16.msra.mxu0 0
      %4007 = vmatprep.subr.bf16.mxu0 0
      %4008 = vmatpush2.bf16.msra.mxu0 0
      %4009 = vmatprep.subr.bf16.mxu0 0
      %4010 = vmatpush2.bf16.msra.mxu0 0
      %4011 = vmatprep.subr.bf16.mxu0 0
      %4012 = vmatpush2.bf16.msra.mxu0 0
      %4013 = vmatprep.subr.bf16.mxu0 0
      %4014 = vmatpush2.bf16.msra.mxu0 0
      %4015 = vmatprep.subr.bf16.mxu0 0
      %4016 = vmatpush2.bf16.msra.mxu0 0
      %4017 = vmatprep.mubr.bf16.mxu0 0
      %4018 = vmatmul.mubr.bf16.gmra.mxu0 %v3980
      %v4019 = vpop.f32.mrf.mxu0
      %v4020 = vadd.f32 0.0, %v4019
      %v4021 = vpop.f32.mrf.mxu0
      %v4022 = vpop.f32.mrf.mxu0
      %v4023 = vpop.f32.mrf.mxu0
      %4024 = vdwg.mxu0
      %4025 = vrot.lane.b32.xlu0 %v452, 104
      %v4026 = vpop.permute.xlu0 %4025
      %v4028 = vsel %vm457, %v3876, 0
      %v4031 = vsel %vm935, %v4026, 0
      %4033 = vmatprep.subr.bf16.mxu0 0
      %4034 = vmatpush1.bf16.msra.mxu0 0
      %4035 = vmatprep.subr.bf16.mxu0 0
      %4036 = vmatpush1.bf16.msra.mxu0 0
      %4037 = vmatprep.subr.bf16.mxu0 0
      %4038 = vmatpush1.bf16.msra.mxu0 0
      %4039 = vmatprep.subr.bf16.mxu0 0
      %4040 = vmatpush1.bf16.msra.mxu0 0
      %4041 = vmatprep.subr.bf16.mxu0 0
      %4042 = vmatpush1.bf16.msra.mxu0 0
      %4043 = vmatprep.subr.bf16.mxu0 0
      %4044 = vmatpush1.bf16.msra.mxu0 0
      %4045 = vmatprep.subr.bf16.mxu0 0
      %4046 = vmatpush1.bf16.msra.mxu0 0
      %4047 = vmatprep.subr.bf16.mxu0 0
      %4048 = vmatpush1.bf16.msra.mxu0 %v4031
      %4049 = vmatprep.subr.bf16.mxu0 0
      %4050 = vmatpush2.bf16.msra.mxu0 0
      %4051 = vmatprep.subr.bf16.mxu0 0
      %4052 = vmatpush2.bf16.msra.mxu0 0
      %4053 = vmatprep.subr.bf16.mxu0 0
      %4054 = vmatpush2.bf16.msra.mxu0 0
      %4055 = vmatprep.subr.bf16.mxu0 0
      %4056 = vmatpush2.bf16.msra.mxu0 0
      %4057 = vmatprep.subr.bf16.mxu0 0
      %4058 = vmatpush2.bf16.msra.mxu0 0
      %4059 = vmatprep.subr.bf16.mxu0 0
      %4060 = vmatpush2.bf16.msra.mxu0 0
      %4061 = vmatprep.subr.bf16.mxu0 0
      %4062 = vmatpush2.bf16.msra.mxu0 0
      %4063 = vmatprep.subr.bf16.mxu0 0
      %4064 = vmatpush2.bf16.msra.mxu0 0
      %4065 = vmatprep.mubr.bf16.mxu0 0
      %4066 = vmatmul.mubr.bf16.gmra.mxu0 %v4028
      %v4067 = vpop.f32.mrf.mxu0
      %v4068 = vadd.f32 0.0, %v4067
      %v4069 = vpop.f32.mrf.mxu0
      %v4070 = vpop.f32.mrf.mxu0
      %v4071 = vpop.f32.mrf.mxu0
      %4072 = vdwg.mxu0
      %4073 = vrot.lane.b32.xlu0 %v453, 104
      %v4074 = vpop.permute.xlu0 %4073
      %v4076 = vsel %vm457, %v3877, 0
      %v4079 = vsel %vm935, %v4074, 0
      %4081 = vmatprep.subr.bf16.mxu0 0
      %4082 = vmatpush1.bf16.msra.mxu0 0
      %4083 = vmatprep.subr.bf16.mxu0 0
      %4084 = vmatpush1.bf16.msra.mxu0 0
      %4085 = vmatprep.subr.bf16.mxu0 0
      %4086 = vmatpush1.bf16.msra.mxu0 0
      %4087 = vmatprep.subr.bf16.mxu0 0
      %4088 = vmatpush1.bf16.msra.mxu0 0
      %4089 = vmatprep.subr.bf16.mxu0 0
      %4090 = vmatpush1.bf16.msra.mxu0 0
      %4091 = vmatprep.subr.bf16.mxu0 0
      %4092 = vmatpush1.bf16.msra.mxu0 0
      %4093 = vmatprep.subr.bf16.mxu0 0
      %4094 = vmatpush1.bf16.msra.mxu0 0
      %4095 = vmatprep.subr.bf16.mxu0 0
      %4096 = vmatpush1.bf16.msra.mxu0 %v4079
      %4097 = vmatprep.subr.bf16.mxu0 0
      %4098 = vmatpush2.bf16.msra.mxu0 0
      %4099 = vmatprep.subr.bf16.mxu0 0
      %4100 = vmatpush2.bf16.msra.mxu0 0
      %4101 = vmatprep.subr.bf16.mxu0 0
      %4102 = vmatpush2.bf16.msra.mxu0 0
      %4103 = vmatprep.subr.bf16.mxu0 0
      %4104 = vmatpush2.bf16.msra.mxu0 0
      %4105 = vmatprep.subr.bf16.mxu0 0
      %4106 = vmatpush2.bf16.msra.mxu0 0
      %4107 = vmatprep.subr.bf16.mxu0 0
      %4108 = vmatpush2.bf16.msra.mxu0 0
      %4109 = vmatprep.subr.bf16.mxu0 0
      %4110 = vmatpush2.bf16.msra.mxu0 0
      %4111 = vmatprep.subr.bf16.mxu0 0
      %4112 = vmatpush2.bf16.msra.mxu0 0
      %4113 = vmatprep.mubr.bf16.mxu0 0
      %4114 = vmatmul.mubr.bf16.gmra.mxu0 %v4076
      %v4115 = vpop.f32.mrf.mxu0
      %v4116 = vadd.f32 0.0, %v4115
      %v4117 = vpop.f32.mrf.mxu0
      %v4118 = vpop.f32.mrf.mxu0
      %v4119 = vpop.f32.mrf.mxu0
      %4120 = vdwg.mxu0
      %4121 = vrot.lane.b32.xlu0 %v454, 104
      %v4122 = vpop.permute.xlu0 %4121
      %v4124 = vsel %vm457, %v3878, 0
      %v4127 = vsel %vm935, %v4122, 0
      %4129 = vmatprep.subr.bf16.mxu0 0
      %4130 = vmatpush1.bf16.msra.mxu0 0
      %4131 = vmatprep.subr.bf16.mxu0 0
      %4132 = vmatpush1.bf16.msra.mxu0 0
      %4133 = vmatprep.subr.bf16.mxu0 0
      %4134 = vmatpush1.bf16.msra.mxu0 0
      %4135 = vmatprep.subr.bf16.mxu0 0
      %4136 = vmatpush1.bf16.msra.mxu0 0
      %4137 = vmatprep.subr.bf16.mxu0 0
      %4138 = vmatpush1.bf16.msra.mxu0 0
      %4139 = vmatprep.subr.bf16.mxu0 0
      %4140 = vmatpush1.bf16.msra.mxu0 0
      %4141 = vmatprep.subr.bf16.mxu0 0
      %4142 = vmatpush1.bf16.msra.mxu0 0
      %4143 = vmatprep.subr.bf16.mxu0 0
      %4144 = vmatpush1.bf16.msra.mxu0 %v4127
      %4145 = vmatprep.subr.bf16.mxu0 0
      %4146 = vmatpush2.bf16.msra.mxu0 0
      %4147 = vmatprep.subr.bf16.mxu0 0
      %4148 = vmatpush2.bf16.msra.mxu0 0
      %4149 = vmatprep.subr.bf16.mxu0 0
      %4150 = vmatpush2.bf16.msra.mxu0 0
      %4151 = vmatprep.subr.bf16.mxu0 0
      %4152 = vmatpush2.bf16.msra.mxu0 0
      %4153 = vmatprep.subr.bf16.mxu0 0
      %4154 = vmatpush2.bf16.msra.mxu0 0
      %4155 = vmatprep.subr.bf16.mxu0 0
      %4156 = vmatpush2.bf16.msra.mxu0 0
      %4157 = vmatprep.subr.bf16.mxu0 0
      %4158 = vmatpush2.bf16.msra.mxu0 0
      %4159 = vmatprep.subr.bf16.mxu0 0
      %4160 = vmatpush2.bf16.msra.mxu0 0
      %4161 = vmatprep.mubr.bf16.mxu0 0
      %4162 = vmatmul.mubr.bf16.gmra.mxu0 %v4124
      %v4163 = vpop.f32.mrf.mxu0
      %v4164 = vadd.f32 0.0, %v4163
      %v4165 = vpop.f32.mrf.mxu0
      %v4166 = vpop.f32.mrf.mxu0
      %v4167 = vpop.f32.mrf.mxu0
      %4168 = vdwg.mxu0
      %4169 = vrot.lane.b32.xlu0 %v455, 104
      %v4170 = vpop.permute.xlu0 %4169
      %v4172 = vsel %vm457, %v3879, 0
      %v4175 = vsel %vm935, %v4170, 0
      %4177 = vmatprep.subr.bf16.mxu0 0
      %4178 = vmatpush1.bf16.msra.mxu0 0
      %4179 = vmatprep.subr.bf16.mxu0 0
      %4180 = vmatpush1.bf16.msra.mxu0 0
      %4181 = vmatprep.subr.bf16.mxu0 0
      %4182 = vmatpush1.bf16.msra.mxu0 0
      %4183 = vmatprep.subr.bf16.mxu0 0
      %4184 = vmatpush1.bf16.msra.mxu0 0
      %4185 = vmatprep.subr.bf16.mxu0 0
      %4186 = vmatpush1.bf16.msra.mxu0 0
      %4187 = vmatprep.subr.bf16.mxu0 0
      %4188 = vmatpush1.bf16.msra.mxu0 0
      %4189 = vmatprep.subr.bf16.mxu0 0
      %4190 = vmatpush1.bf16.msra.mxu0 0
      %4191 = vmatprep.subr.bf16.mxu0 0
      %4192 = vmatpush1.bf16.msra.mxu0 %v4175
      %4193 = vmatprep.subr.bf16.mxu0 0
      %4194 = vmatpush2.bf16.msra.mxu0 0
      %4195 = vmatprep.subr.bf16.mxu0 0
      %4196 = vmatpush2.bf16.msra.mxu0 0
      %4197 = vmatprep.subr.bf16.mxu0 0
      %4198 = vmatpush2.bf16.msra.mxu0 0
      %4199 = vmatprep.subr.bf16.mxu0 0
      %4200 = vmatpush2.bf16.msra.mxu0 0
      %4201 = vmatprep.subr.bf16.mxu0 0
      %4202 = vmatpush2.bf16.msra.mxu0 0
      %4203 = vmatprep.subr.bf16.mxu0 0
      %4204 = vmatpush2.bf16.msra.mxu0 0
      %4205 = vmatprep.subr.bf16.mxu0 0
      %4206 = vmatpush2.bf16.msra.mxu0 0
      %4207 = vmatprep.subr.bf16.mxu0 0
      %4208 = vmatpush2.bf16.msra.mxu0 0
      %4209 = vmatprep.mubr.bf16.mxu0 0
      %4210 = vmatmul.mubr.bf16.gmra.mxu0 %v4172
      %v4211 = vpop.f32.mrf.mxu0
      %v4212 = vadd.f32 0.0, %v4211
      %v4213 = vpop.f32.mrf.mxu0
      %v4214 = vpop.f32.mrf.mxu0
      %v4215 = vpop.f32.mrf.mxu0
      %4216 = vdwg.mxu0
      %4217 = vrot.lane.b32.xlu0 %v456, 104
      %v4218 = vpop.permute.xlu0 %4217
      %v4220 = vsel %vm457, %v3880, 0
      %v4223 = vsel %vm935, %v4218, 0
      %4225 = vmatprep.subr.bf16.mxu0 0
      %4226 = vmatpush1.bf16.msra.mxu0 0
      %4227 = vmatprep.subr.bf16.mxu0 0
      %4228 = vmatpush1.bf16.msra.mxu0 0
      %4229 = vmatprep.subr.bf16.mxu0 0
      %4230 = vmatpush1.bf16.msra.mxu0 0
      %4231 = vmatprep.subr.bf16.mxu0 0
      %4232 = vmatpush1.bf16.msra.mxu0 0
      %4233 = vmatprep.subr.bf16.mxu0 0
      %4234 = vmatpush1.bf16.msra.mxu0 0
      %4235 = vmatprep.subr.bf16.mxu0 0
      %4236 = vmatpush1.bf16.msra.mxu0 0
      %4237 = vmatprep.subr.bf16.mxu0 0
      %4238 = vmatpush1.bf16.msra.mxu0 0
      %4239 = vmatprep.subr.bf16.mxu0 0
      %4240 = vmatpush1.bf16.msra.mxu0 %v4223
      %4241 = vmatprep.subr.bf16.mxu0 0
      %4242 = vmatpush2.bf16.msra.mxu0 0
      %4243 = vmatprep.subr.bf16.mxu0 0
      %4244 = vmatpush2.bf16.msra.mxu0 0
      %4245 = vmatprep.subr.bf16.mxu0 0
      %4246 = vmatpush2.bf16.msra.mxu0 0
      %4247 = vmatprep.subr.bf16.mxu0 0
      %4248 = vmatpush2.bf16.msra.mxu0 0
      %4249 = vmatprep.subr.bf16.mxu0 0
      %4250 = vmatpush2.bf16.msra.mxu0 0
      %4251 = vmatprep.subr.bf16.mxu0 0
      %4252 = vmatpush2.bf16.msra.mxu0 0
      %4253 = vmatprep.subr.bf16.mxu0 0
      %4254 = vmatpush2.bf16.msra.mxu0 0
      %4255 = vmatprep.subr.bf16.mxu0 0
      %4256 = vmatpush2.bf16.msra.mxu0 0
      %4257 = vmatprep.mubr.bf16.mxu0 0
      %4258 = vmatmul.mubr.bf16.gmra.mxu0 %v4220
      %v4259 = vpop.f32.mrf.mxu0
      %v4260 = vadd.f32 0.0, %v4259
      %v4261 = vpop.f32.mrf.mxu0
      %v4262 = vpop.f32.mrf.mxu0
      %v4263 = vpop.f32.mrf.mxu0
      %4264 = vdwg.mxu0
      %v4265 = vpack.c.bf16 %v3972, %v3924
      %v4266 = vpack.c.bf16 %v4068, %v4020
      %v4267 = vpack.c.bf16 %v4164, %v4116
      %v4268 = vpack.c.bf16 %v4260, %v4212
      %v4270 = vsel %vm457, %v4265, 0
      %v4273 = vsel %vm457, %v4266, 0
      %v4276 = vsel %vm457, %v4267, 0
      %v4279 = vsel %vm457, %v4268, 0
      %v4282 = vsel %vm935, %v184, 0
      %4284 = vmatprep.subr.bf16.mxu0 0
      %4285 = vmatpush1.bf16.msra.mxu0 0
      %4286 = vmatprep.subr.bf16.mxu0 0
      %4287 = vmatpush1.bf16.msra.mxu0 0
      %4288 = vmatprep.subr.bf16.mxu0 0
      %4289 = vmatpush1.bf16.msra.mxu0 0
      %4290 = vmatprep.subr.bf16.mxu0 0
      %4291 = vmatpush1.bf16.msra.mxu0 0
      %4292 = vmatprep.subr.bf16.mxu0 0
      %4293 = vmatpush1.bf16.msra.mxu0 0
      %4294 = vmatprep.subr.bf16.mxu0 0
      %4295 = vmatpush1.bf16.msra.mxu0 0
      %4296 = vmatprep.subr.bf16.mxu0 0
      %4297 = vmatpush1.bf16.msra.mxu0 0
      %4298 = vmatprep.subr.bf16.mxu0 0
      %4299 = vmatpush1.bf16.msra.mxu0 %v4282
      %4300 = vmatprep.subr.bf16.mxu0 0
      %4301 = vmatpush2.bf16.msra.mxu0 0
      %4302 = vmatprep.subr.bf16.mxu0 0
      %4303 = vmatpush2.bf16.msra.mxu0 0
      %4304 = vmatprep.subr.bf16.mxu0 0
      %4305 = vmatpush2.bf16.msra.mxu0 0
      %4306 = vmatprep.subr.bf16.mxu0 0
      %4307 = vmatpush2.bf16.msra.mxu0 0
      %4308 = vmatprep.subr.bf16.mxu0 0
      %4309 = vmatpush2.bf16.msra.mxu0 0
      %4310 = vmatprep.subr.bf16.mxu0 0
      %4311 = vmatpush2.bf16.msra.mxu0 0
      %4312 = vmatprep.subr.bf16.mxu0 0
      %4313 = vmatpush2.bf16.msra.mxu0 0
      %4314 = vmatprep.subr.bf16.mxu0 0
      %4315 = vmatpush2.bf16.msra.mxu0 0
      %4316 = vmatprep.mubr.bf16.mxu0 0
      %4317 = vmatmul.mubr.bf16.gmra.mxu0 %v4270
      %v4318 = vpop.f32.mrf.mxu0
      %v4319 = vadd.f32 0.0, %v4318
      %v4320 = vpop.f32.mrf.mxu0
      %v4321 = vpop.f32.mrf.mxu0
      %v4322 = vadd.f32 0.0, %v4321
      %v4323 = vpop.f32.mrf.mxu0
      %4324 = vmatprep.mubr.bf16.mxu0 0
      %4325 = vmatmul.mubr.bf16.gmra.mxu0 %v4273
      %v4326 = vpop.f32.mrf.mxu0
      %v4327 = vadd.f32 0.0, %v4326
      %v4328 = vpop.f32.mrf.mxu0
      %v4329 = vpop.f32.mrf.mxu0
      %v4330 = vadd.f32 0.0, %v4329
      %v4331 = vpop.f32.mrf.mxu0
      %4332 = vmatprep.mubr.bf16.mxu0 0
      %4333 = vmatmul.mubr.bf16.gmra.mxu0 %v4276
      %v4334 = vpop.f32.mrf.mxu0
      %v4335 = vadd.f32 0.0, %v4334
      %v4336 = vpop.f32.mrf.mxu0
      %v4337 = vpop.f32.mrf.mxu0
      %v4338 = vadd.f32 0.0, %v4337
      %v4339 = vpop.f32.mrf.mxu0
      %4340 = vmatprep.mubr.bf16.mxu0 0
      %4341 = vmatmul.mubr.bf16.gmra.mxu0 %v4279
      %v4342 = vpop.f32.mrf.mxu0
      %v4343 = vadd.f32 0.0, %v4342
      %v4344 = vpop.f32.mrf.mxu0
      %v4345 = vpop.f32.mrf.mxu0
      %v4346 = vadd.f32 0.0, %v4345
      %v4347 = vpop.f32.mrf.mxu0
      %4348 = vdwg.mxu0
      %v4349 = vadd.f32 %v3369, %v4319
      %v4350 = vadd.f32 %v3370, %v4322
      %v4351 = vadd.f32 %v3371, %v4327
      %v4352 = vadd.f32 %v3372, %v4330
      %v4353 = vadd.f32 %v3373, %v4335
      %v4354 = vadd.f32 %v3374, %v4338
      %v4355 = vadd.f32 %v3375, %v4343
      %v4356 = vadd.f32 %v3376, %v4346
    $region66: #{tpu_custom_call.1} parent=1 // loop_footer
      %s151 = sadd.s32 1, %s147
    $region67: #{tpu_custom_call.1} parent=1 // loop_footer_branch
      %146 = sbr.rel target = $region63
    $region68: #{tpu_custom_call.1} parent=1 // loop_exit
      _
    %v4357 = vpack.c.bf16 %v152, %v152
    %v4358 = vpack.c.bf16 %v153, %v153
    %v4359 = vpack.c.bf16 %v154, %v154
    %v4360 = vpack.c.bf16 %v155, %v155
    %v4361 = vpack.c.bf16 %v156, %v156
    %v4362 = vpack.c.bf16 %v157, %v157
    %v4363 = vpack.c.bf16 %v158, %v158
    %v4364 = vpack.c.bf16 %v159, %v159
    %v4365 = vld [vmem:[#allocation13] sm:$0xf]
    %v4366 = vld [vmem:[#allocation13 + $0x4] sm:$0xf]
    %v4367 = vld [vmem:[#allocation13 + $0x8] sm:$0xf]
    %v4368 = vld [vmem:[#allocation13 + $0xc] sm:$0xf]
    %v4369 = vld [vmem:[%s7] sm:$0x1]
    %v4371 = vlaneseq
    %v4372 = vshrl.u32 %v4371, 7
    %v4373 = vsub.s32 0, %v4372
    %v4374 = vrot.slane %v4369, %v4373
    %v4384 = vunpack.c.l.b16 %v4357
    %v4385 = vunpack.c.l.b16 %v4358
    %v4386 = vunpack.c.l.b16 %v4359
    %v4387 = vunpack.c.l.b16 %v4360
    %v4388 = vunpack.c.l.b16 %v4361
    %v4389 = vunpack.c.l.b16 %v4362
    %v4390 = vunpack.c.l.b16 %v4363
    %v4391 = vunpack.c.l.b16 %v4364
    %v4392 = vrot.slane %v4384, 7
    %v4393 = vrot.slane %v4385, 6
    %vm4394 = vcmask 1041409
    %v4395 = vsel %vm4394, %v4393, %v4392
    %v4396 = vrot.slane %v4386, 5
    %vm4397 = vcmask 1042434
    %v4398 = vsel %vm4397, %v4396, %v4395
    %v4399 = vrot.slane %v4387, 4
    %vm4400 = vcmask 1043459
    %v4401 = vsel %vm4400, %v4399, %v4398
    %v4402 = vrot.slane %v4388, 3
    %vm4403 = vcmask 1044484
    %v4404 = vsel %vm4403, %v4402, %v4401
    %v4405 = vrot.slane %v4389, 2
    %vm4406 = vcmask 1045509
    %v4407 = vsel %vm4406, %v4405, %v4404
    %v4408 = vrot.slane %v4390, 1
    %vm4409 = vcmask 1046534
    %v4410 = vsel %vm4409, %v4408, %v4407
    %vm4411 = vcmask 1047559
    %v4412 = vsel %vm4411, %v4391, %v4410
    %v4413 = vpack.c.b16 %v4412, %v4412
    %v4418 = vunpack.c.l.b16 %v4365
    %v4419 = vunpack.c.l.b16 %v4366
    %v4420 = vunpack.c.l.b16 %v4367
    %v4421 = vunpack.c.l.b16 %v4368
    %v4422 = vpack.c.b16 %v4419, %v4418
    %v4423 = vpack.c.b16 %v4421, %v4420
    %vm4426 = vcmask 261120
    %v4428 = vsel %vm4426, %v4413, 0
    %4430 = vmatprep.subr.bf16.mxu0 0
    %4431 = vmatpush1.bf16.msra.mxu0 0
    %4432 = vmatprep.subr.bf16.mxu0 0
    %4433 = vmatpush1.bf16.msra.mxu0 0
    %4434 = vmatprep.subr.bf16.mxu0 0
    %4435 = vmatpush1.bf16.msra.mxu0 0
    %4436 = vmatprep.subr.bf16.mxu0 0
    %4437 = vmatpush1.bf16.msra.mxu0 0
    %4438 = vmatprep.subr.bf16.mxu0 0
    %4439 = vmatpush1.bf16.msra.mxu0 0
    %4440 = vmatprep.subr.bf16.mxu0 0
    %4441 = vmatpush1.bf16.msra.mxu0 0
    %4442 = vmatprep.subr.bf16.mxu0 0
    %4443 = vmatpush1.bf16.msra.mxu0 %v4423
    %4444 = vmatprep.subr.bf16.mxu0 0
    %4445 = vmatpush1.bf16.msra.mxu0 %v4422
    %4446 = vmatprep.subr.bf16.mxu0 0
    %4447 = vmatpush2.bf16.msra.mxu0 0
    %4448 = vmatprep.subr.bf16.mxu0 0
    %4449 = vmatpush2.bf16.msra.mxu0 0
    %4450 = vmatprep.subr.bf16.mxu0 0
    %4451 = vmatpush2.bf16.msra.mxu0 0
    %4452 = vmatprep.subr.bf16.mxu0 0
    %4453 = vmatpush2.bf16.msra.mxu0 0
    %4454 = vmatprep.subr.bf16.mxu0 0
    %4455 = vmatpush2.bf16.msra.mxu0 0
    %4456 = vmatprep.subr.bf16.mxu0 0
    %4457 = vmatpush2.bf16.msra.mxu0 0
    %4458 = vmatprep.subr.bf16.mxu0 0
    %4459 = vmatpush2.bf16.msra.mxu0 0
    %4460 = vmatprep.subr.bf16.mxu0 0
    %4461 = vmatpush2.bf16.msra.mxu0 0
    %4462 = vmatprep.mubr.bf16.mxu0 0
    %4463 = vmatmul.mubr.bf16.gmra.mxu0 %v4428
    %v4464 = vpop.f32.mrf.mxu0
    %v4465 = vadd.f32 %v4374, %v4464
    %v4466 = vpop.f32.mrf.mxu0
    %v4467 = vpop.f32.mrf.mxu0
    %v4468 = vpop.f32.mrf.mxu0
    %4469 = vdwg.mxu0
    %4470 = vst [vmem:[#allocation14] sm:$0xff] %v4465
    // Predicated region
    $region69: #{tpu_custom_call.1} parent=1 // pred_check
      _
    $region70: #{tpu_custom_call.1} parent=1 // pred_check_branch
      %4472 = sbr.rel (0) target = $region72
    $region71: #{tpu_custom_call.1} parent=1 // pred_region
      %s4474 = ssub.s32 128, 128
      %4475 = vsyncadd [#allocation4], %s4474
      %s4477 = sshll.u32 [#allocation14], 4
      %s4478 = int_to_ptr.vmem [resolvable:$true] %s4477
      %4480 = dma.vmem_to_hbm [thread:$0]  %s4478, 128, %s8, [#allocation4]
    $region72: #{tpu_custom_call.1} parent=1 // pred_fallthru
      _
    // Predicated region
    $region73: #{tpu_custom_call.1} parent=1 // pred_check
      _
    $region74: #{tpu_custom_call.1} parent=1 // pred_check_branch
      %4482 = sbr.rel (0) target = $region76
    $region75: #{tpu_custom_call.1} parent=1 // pred_region
      %4483 = dma.done [#allocation4], 128
    $region76: #{tpu_custom_call.1} parent=1 // pred_fallthru
      _
    %4484 = vsyncpa [#allocation3], 1
    %4485 = vsyncpa [#allocation6], 1
    %4486 = vsyncpa [#allocation9], 1
    %4487 = vsyncpa [#allocation12], 1
    %4488 = vsyncpa [#allocation4], 1

</llo_original>
